<compile_context>
chip_gen: v7x
topology: tpu7x:2x2x1
jax: 0.10.0
libtpu: 0.0.40
codegen_flags: <defaults>
</compile_context>

<pallas_src>
import jax
import jax.numpy as jnp
from jax.experimental import pallas as pl
from jax.experimental.pallas import tpu as pltpu

EPS = 1e-6
INV_SQRT2 = 0.7071067811865476


def _erf(z):
    # Abramowitz & Stegun 7.1.26 polynomial approximation (max abs err ~1.5e-7),
    # built only from ops guaranteed to lower in Mosaic (abs/exp/mul/add/where).
    # Matches torch's exact (erf-based) nn.GELU() to ~fp32 precision.
    s = jnp.where(z >= 0.0, 1.0, -1.0)
    a = jnp.abs(z)
    t = 1.0 / (1.0 + 0.3275911 * a)
    poly = t * (0.254829592 + t * (-0.284496736 + t * (1.421413741
               + t * (-1.453152027 + t * 1.061405429))))
    return s * (1.0 - poly * jnp.exp(-a * a))


def refine_block_kernel(x_ref, nw_ref, nb_ref,
                        wf_ref, bf_ref,      # fused (input_conv | input_conv@conv1x1)
                        wc_ref, bc_ref,      # combined depthwise 25-tap weights / bias
                        wo_ref, bo_ref,
                        out_ref,
                        pad_ref):
    H, W, C = x_ref.shape
    x = x_ref[...]                                       # (H, W, C) fp32

    # ---- LayerNorm2d over the channel axis (biased variance, matches PyTorch ref) ----
    mu = jnp.mean(x, axis=-1, keepdims=True)
    xc = x - mu
    var = jnp.mean(xc * xc, axis=-1, keepdims=True)
    y = xc * jax.lax.rsqrt(var + EPS)                    # rsqrt -> EUP slot
    y = y * nw_ref[...] + nb_ref[...]                    # (1, C) broadcast

    # ---- fused input_conv + branch-1 1x1 conv: single (H*W, C) @ (C, 2C) MXU pass ----
    y2 = y.reshape(H * W, C)
    fused = jnp.dot(y2, wf_ref[...], preferred_element_type=jnp.float32) + bf_ref[...]
    fea = fused[:, :C]                                   # input_conv output
    fea1 = fused[:, C:2 * C].reshape(H, W, C)            # conv1x1(input_conv(...)) output

    # ---- zero ONLY the 2-wide halo border; interior is fully overwritten every step ----
    zrow = jnp.zeros((2, W + 4, C), jnp.float32)
    pad_ref[0:2, :, :] = zrow
    pad_ref[H + 2:H + 4, :, :] = zrow
    zcol = jnp.zeros((H, 2, C), jnp.float32)
    pad_ref[2:2 + H, 0:2, :] = zcol
    pad_ref[2:2 + H, W + 2:W + 4, :] = zcol
    pad_ref[2:2 + H, 2:2 + W, :] = fea.reshape(H, W, C)

    # ---- combined depthwise (3x3 folded into centered window of 5x5): 25 taps, one acc ----
    wc = wc_ref[...]                                     # (25, C)
    acc = jnp.zeros((H, W, C), jnp.float32)
    for ky in range(5):
        for kx in range(5):
            k = ky * 5 + kx
            acc = acc + pad_ref[ky:ky + H, kx:kx + W, :] * wc[k:k + 1, :]
    acc = acc + bc_ref[...]                              # b3 + b5

    # ---- gate, exact GELU, output 1x1 conv, residual ----
    mixed = fea1 * acc
    g = 0.5 * mixed * (1.0 + _erf(mixed * INV_SQRT2))
    out = (jnp.dot(g.reshape(H * W, C), wo_ref[...], preferred_element_type=jnp.float32)
           + bo_ref[...])
    out_ref[...] = out.reshape(H, W, C) + x


def refine_block_nhwc(x_nhwc, kparams):
    N, H, W, C = x_nhwc.shape

    in_specs = ([pl.BlockSpec((None, H, W, C), lambda n: (n, 0, 0, 0))]
                + [pl.BlockSpec(p.shape, lambda n: (0, 0)) for p in kparams])
    out_spec = pl.BlockSpec((None, H, W, C), lambda n: (n, 0, 0, 0))

    return pl.pallas_call(
        refine_block_kernel,
        out_shape=jax.ShapeDtypeStruct((N, H, W, C), jnp.float32),
        grid_spec=pltpu.PrefetchScalarGridSpec(
            num_scalar_prefetch=0,
            grid=(N,),
            in_specs=in_specs,
            out_specs=out_spec,
            scratch_shapes=[pltpu.VMEM((H + 4, W + 4, C), jnp.float32)],
        ),
        # batch elements are independent -> shard across TensorCores on v7x megacore
        compiler_params=pltpu.CompilerParams(dimension_semantics=("parallel",)),
    )(x_nhwc, *kparams)


# ---------------- parameters (deterministic, torch-layout shapes) ----------------
def init_params(key, C):
    ks = jax.random.split(key, 12)

    def rnd(k, shape, scale=0.1):
        return (scale * jax.random.normal(k, shape)).astype(jnp.float32)

    return {
        "nw": (1.0 + rnd(ks[0], (C,))), "nb": rnd(ks[1], (C,)),
        "w_in": rnd(ks[2], (C, C, 1, 1)), "b_in": rnd(ks[3], (C,)),
        "w1": rnd(ks[4], (C, C, 1, 1)), "b1": rnd(ks[5], (C,)),
        "w3": rnd(ks[6], (C, 1, 3, 3)), "b3": rnd(ks[7], (C,)),
        "w5": rnd(ks[8], (C, 1, 5, 5)), "b5": rnd(ks[9], (C,)),
        "wo": rnd(ks[10], (C, C, 1, 1)), "bo": rnd(ks[11], (C,)),
    }


def to_kernel_params(p, C):
    # 1x1 conv torch weight (O, I, 1, 1) -> matmul matrix (I, O)
    w_in = p["w_in"][:, :, 0, 0].T
    w1 = p["w1"][:, :, 0, 0].T
    wo = p["wo"][:, :, 0, 0].T
    b_in = p["b_in"].reshape(1, C)
    b1 = p["b1"].reshape(1, C)

    # fused input_conv | (input_conv then conv1x1): exact up to fp rounding
    w_fused = jnp.concatenate([w_in, w_in @ w1], axis=1)            # (C, 2C)
    b_fused = jnp.concatenate([b_in, b_in @ w1 + b1], axis=1)       # (1, 2C)

    # depthwise (C,1,k,k) -> (k,k,C); fold 3x3 into centered window of 5x5 (exact: branches sum)
    w5 = jnp.transpose(p["w5"][:, 0], (1, 2, 0))                    # (5, 5, C)
    w3 = jnp.transpose(p["w3"][:, 0], (1, 2, 0))                    # (3, 3, C)
    w_comb = w5.at[1:4, 1:4, :].add(w3).reshape(25, C)              # (25, C)
    b_comb = (p["b3"] + p["b5"]).reshape(1, C)

    return (
        p["nw"].reshape(1, C), p["nb"].reshape(1, C),
        w_fused, b_fused,
        w_comb, b_comb,
        wo, p["bo"].reshape(1, C),
    )


# ---------------- pure-JAX reference (NHWC) for verification ----------------
def ref_forward(x, p):
    C = x.shape[-1]
    mu = x.mean(-1, keepdims=True)
    var = ((x - mu) ** 2).mean(-1, keepdims=True)
    y = (x - mu) / jnp.sqrt(var + EPS)
    y = y * p["nw"] + p["nb"]

    def conv1x1(v, wt, b):
        return jnp.einsum("nhwi,oi->nhwo", v, wt[:, :, 0, 0]) + b

    def dwconv(v, wt, b, pad):
        w_hwio = jnp.transpose(wt, (2, 3, 1, 0))            # (k, k, 1, C)
        out = jax.lax.conv_general_dilated(
            v, w_hwio, window_strides=(1, 1), padding=[(pad, pad), (pad, pad)],
            dimension_numbers=("NHWC", "HWIO", "NHWC"), feature_group_count=C)
        return out + b

    fea = conv1x1(y, p["w_in"], p["b_in"])
    fea1 = conv1x1(fea, p["w1"], p["b1"])
    fea2 = dwconv(fea, p["w3"], p["b3"], 1)
    fea3 = dwconv(fea, p["w5"], p["b5"], 2)
    mix = fea1 * (fea2 + fea3)
    g = jax.nn.gelu(mix, approximate=False)
    return conv1x1(g, p["wo"], p["bo"]) + x


if __name__ == "__main__":
    N, C, H, W = 2, 4, 16, 16          # matches nn.Conv2d(dim, dim, ...) with dim = 4
    key = jax.random.PRNGKey(0)
    kx, kp = jax.random.split(key)

    x_nchw = jax.random.normal(kx, (N, C, H, W), dtype=jnp.float32)   # PyTorch-style NCHW input
    x_nhwc = jnp.transpose(x_nchw, (0, 2, 3, 1))

    params = init_params(kp, C)
    kparams = to_kernel_params(params, C)

    out_nhwc = refine_block_nhwc(x_nhwc, kparams)
    out_nhwc = jax.block_until_ready(out_nhwc)
    out_nchw = jnp.transpose(out_nhwc, (0, 3, 1, 2))

    ref_nhwc = ref_forward(x_nhwc, params)
    max_err = float(jnp.max(jnp.abs(out_nhwc - ref_nhwc)))
    assert jnp.allclose(out_nhwc, ref_nhwc, atol=1e-4, rtol=1e-4), f"max_err={max_err}"
    assert out_nchw.shape == (N, C, H, W)

    print("KERNEL_OK")
</pallas_src>

<mosaic_0001>
module attributes {stable_mosaic.version = 11 : i64} {
  func.func @refine_block_kernel(%arg0: i32, %arg1: memref<1x16x16x4xf32, #tpu.memory_space<vmem>>, %arg2: memref<1x4xf32, #tpu.memory_space<vmem>>, %arg3: memref<1x4xf32, #tpu.memory_space<vmem>>, %arg4: memref<4x8xf32, #tpu.memory_space<vmem>>, %arg5: memref<1x8xf32, #tpu.memory_space<vmem>>, %arg6: memref<25x4xf32, #tpu.memory_space<vmem>>, %arg7: memref<1x4xf32, #tpu.memory_space<vmem>>, %arg8: memref<4x4xf32, #tpu.memory_space<vmem>>, %arg9: memref<1x4xf32, #tpu.memory_space<vmem>>, %arg10: memref<1x16x16x4xf32, #tpu.memory_space<vmem>>, %arg11: memref<20x20x4xf32, #tpu.memory_space<vmem>>) attributes {dimension_semantics = [#tpu.dimension_semantics<parallel>], iteration_bounds = array<i64: 2>, scalar_prefetch = 0 : i64, scratch_operands = 1 : i64, tpu.core_type = #tpu.core_type<tc>, window_params = [{transform_indices = @transform_0, window_bounds = array<i64: 1, 16, 16, 4>}, {pipeline_mode = #tpu.pipeline_mode<synchronous>, transform_indices = @transform_1, window_bounds = array<i64: 1, 4>}, {pipeline_mode = #tpu.pipeline_mode<synchronous>, transform_indices = @transform_2, window_bounds = array<i64: 1, 4>}, {pipeline_mode = #tpu.pipeline_mode<synchronous>, transform_indices = @transform_3, window_bounds = array<i64: 4, 8>}, {pipeline_mode = #tpu.pipeline_mode<synchronous>, transform_indices = @transform_4, window_bounds = array<i64: 1, 8>}, {pipeline_mode = #tpu.pipeline_mode<synchronous>, transform_indices = @transform_5, window_bounds = array<i64: 25, 4>}, {pipeline_mode = #tpu.pipeline_mode<synchronous>, transform_indices = @transform_6, window_bounds = array<i64: 1, 4>}, {pipeline_mode = #tpu.pipeline_mode<synchronous>, transform_indices = @transform_7, window_bounds = array<i64: 4, 4>}, {pipeline_mode = #tpu.pipeline_mode<synchronous>, transform_indices = @transform_8, window_bounds = array<i64: 1, 4>}, {transform_indices = @transform_9, window_bounds = array<i64: 1, 16, 16, 4>}]} {
    %c0 = arith.constant 0 : index
    %c0_0 = arith.constant 0 : index
    %c0_1 = arith.constant 0 : index
    %c0_2 = arith.constant 0 : index
    %0 = vector.load %arg1[%c0, %c0_0, %c0_1, %c0_2] : memref<1x16x16x4xf32, #tpu.memory_space<vmem>>, vector<1x16x16x4xf32>
    %1 = vector.shape_cast %0 : vector<1x16x16x4xf32> to vector<16x16x4xf32>
    %cst = arith.constant dense<0.000000e+00> : vector<16x16xf32>
    %2 = vector.multi_reduction <add>, %1, %cst [2] : vector<16x16x4xf32> to vector<16x16xf32>
    %3 = vector.shape_cast %2 : vector<16x16xf32> to vector<16x16x1xf32>
    %cst_3 = arith.constant 4.000000e+00 : f32
    %4 = vector.broadcast %cst_3 : f32 to vector<16x16x1xf32>
    %5 = arith.divf %3, %4 : vector<16x16x1xf32>
    %6 = vector.broadcast %5 : vector<16x16x1xf32> to vector<16x16x4xf32>
    %7 = arith.subf %1, %6 : vector<16x16x4xf32>
    %8 = arith.mulf %7, %7 : vector<16x16x4xf32>
    %cst_4 = arith.constant dense<0.000000e+00> : vector<16x16xf32>
    %9 = vector.multi_reduction <add>, %8, %cst_4 [2] : vector<16x16x4xf32> to vector<16x16xf32>
    %10 = vector.shape_cast %9 : vector<16x16xf32> to vector<16x16x1xf32>
    %cst_5 = arith.constant 4.000000e+00 : f32
    %11 = vector.broadcast %cst_5 : f32 to vector<16x16x1xf32>
    %12 = arith.divf %10, %11 : vector<16x16x1xf32>
    %cst_6 = arith.constant 9.99999997E-7 : f32
    %13 = vector.broadcast %cst_6 : f32 to vector<16x16x1xf32>
    %14 = arith.addf %12, %13 : vector<16x16x1xf32>
    %15 = math.rsqrt %14 : vector<16x16x1xf32>
    %16 = vector.broadcast %15 : vector<16x16x1xf32> to vector<16x16x4xf32>
    %17 = arith.mulf %7, %16 : vector<16x16x4xf32>
    %c0_7 = arith.constant 0 : index
    %c0_8 = arith.constant 0 : index
    %18 = vector.load %arg2[%c0_7, %c0_8] : memref<1x4xf32, #tpu.memory_space<vmem>>, vector<1x4xf32>
    %19 = vector.shape_cast %18 : vector<1x4xf32> to vector<1x1x4xf32>
    %20 = vector.broadcast %19 : vector<1x1x4xf32> to vector<16x16x4xf32>
    %21 = arith.mulf %17, %20 : vector<16x16x4xf32>
    %c0_9 = arith.constant 0 : index
    %c0_10 = arith.constant 0 : index
    %22 = vector.load %arg3[%c0_9, %c0_10] : memref<1x4xf32, #tpu.memory_space<vmem>>, vector<1x4xf32>
    %23 = vector.shape_cast %22 : vector<1x4xf32> to vector<1x1x4xf32>
    %24 = vector.broadcast %23 : vector<1x1x4xf32> to vector<16x16x4xf32>
    %25 = arith.addf %21, %24 : vector<16x16x4xf32>
    %26 = vector.shape_cast %25 : vector<16x16x4xf32> to vector<256x4xf32>
    %c0_11 = arith.constant 0 : index
    %c0_12 = arith.constant 0 : index
    %27 = vector.load %arg4[%c0_11, %c0_12] : memref<4x8xf32, #tpu.memory_space<vmem>>, vector<4x8xf32>
    %cst_13 = arith.constant dense<0.000000e+00> : vector<256x8xf32>
    %28 = tpu.matmul %26, %27, %cst_13 {dimension_numbers = #tpu.dot_dimension_numbers<[1], [0], [0], [1], [0, 0, 1, 1], [], []>} : vector<256x4xf32>, vector<4x8xf32>, vector<256x8xf32> -> vector<256x8xf32>
    %c0_14 = arith.constant 0 : index
    %c0_15 = arith.constant 0 : index
    %29 = vector.load %arg5[%c0_14, %c0_15] : memref<1x8xf32, #tpu.memory_space<vmem>>, vector<1x8xf32>
    %30 = vector.broadcast %29 : vector<1x8xf32> to vector<256x8xf32>
    %31 = arith.addf %28, %30 : vector<256x8xf32>
    %32 = vector.extract_strided_slice %31 {offsets = [0, 0], sizes = [256, 4], strides = [1, 1]} : vector<256x8xf32> to vector<256x4xf32>
    %33 = vector.extract_strided_slice %31 {offsets = [0, 4], sizes = [256, 4], strides = [1, 1]} : vector<256x8xf32> to vector<256x4xf32>
    %34 = vector.shape_cast %33 : vector<256x4xf32> to vector<16x16x4xf32>
    %cst_16 = arith.constant 0.000000e+00 : f32
    %35 = vector.broadcast %cst_16 : f32 to vector<2x20x4xf32>
    %c0_17 = arith.constant 0 : index
    %c0_18 = arith.constant 0 : index
    %c0_19 = arith.constant 0 : index
    %36 = vector.load %arg11[%c0_17, %c0_18, %c0_19] : memref<20x20x4xf32, #tpu.memory_space<vmem>>, vector<2x20x4xf32>
    tpu.vector_store %arg11[%c0_17, %c0_18, %c0_19], %35 {strides = array<i32>} : memref<20x20x4xf32, #tpu.memory_space<vmem>>, vector<2x20x4xf32>,
    %c18 = arith.constant 18 : index
    %c0_20 = arith.constant 0 : index
    %c0_21 = arith.constant 0 : index
    %37 = vector.load %arg11[%c18, %c0_20, %c0_21] : memref<20x20x4xf32, #tpu.memory_space<vmem>>, vector<2x20x4xf32>
    tpu.vector_store %arg11[%c18, %c0_20, %c0_21], %35 {strides = array<i32>} : memref<20x20x4xf32, #tpu.memory_space<vmem>>, vector<2x20x4xf32>,
    %cst_22 = arith.constant 0.000000e+00 : f32
    %38 = vector.broadcast %cst_22 : f32 to vector<16x2x4xf32>
    %c2 = arith.constant 2 : index
    %c0_23 = arith.constant 0 : index
    %c0_24 = arith.constant 0 : index
    %39 = vector.load %arg11[%c2, %c0_23, %c0_24] : memref<20x20x4xf32, #tpu.memory_space<vmem>>, vector<16x2x4xf32>
    tpu.vector_store %arg11[%c2, %c0_23, %c0_24], %38 {strides = array<i32>} : memref<20x20x4xf32, #tpu.memory_space<vmem>>, vector<16x2x4xf32>,
    %c2_25 = arith.constant 2 : index
    %c18_26 = arith.constant 18 : index
    %c0_27 = arith.constant 0 : index
    %40 = vector.load %arg11[%c2_25, %c18_26, %c0_27] : memref<20x20x4xf32, #tpu.memory_space<vmem>>, vector<16x2x4xf32>
    tpu.vector_store %arg11[%c2_25, %c18_26, %c0_27], %38 {strides = array<i32>} : memref<20x20x4xf32, #tpu.memory_space<vmem>>, vector<16x2x4xf32>,
    %41 = vector.shape_cast %32 : vector<256x4xf32> to vector<16x16x4xf32>
    %c2_28 = arith.constant 2 : index
    %c2_29 = arith.constant 2 : index
    %c0_30 = arith.constant 0 : index
    %42 = vector.load %arg11[%c2_28, %c2_29, %c0_30] : memref<20x20x4xf32, #tpu.memory_space<vmem>>, vector<16x16x4xf32>
    tpu.vector_store %arg11[%c2_28, %c2_29, %c0_30], %41 {strides = array<i32>} : memref<20x20x4xf32, #tpu.memory_space<vmem>>, vector<16x16x4xf32>,
    %c0_31 = arith.constant 0 : index
    %c0_32 = arith.constant 0 : index
    %43 = vector.load %arg6[%c0_31, %c0_32] : memref<25x4xf32, #tpu.memory_space<vmem>>, vector<25x4xf32>
    %cst_33 = arith.constant 0.000000e+00 : f32
    %44 = vector.broadcast %cst_33 : f32 to vector<16x16x4xf32>
    %c0_34 = arith.constant 0 : index
    %c0_35 = arith.constant 0 : index
    %c0_36 = arith.constant 0 : index
    %45 = vector.load %arg11[%c0_34, %c0_35, %c0_36] : memref<20x20x4xf32, #tpu.memory_space<vmem>>, vector<16x16x4xf32>
    %46 = vector.extract_strided_slice %43 {offsets = [0, 0], sizes = [1, 4], strides = [1, 1]} : vector<25x4xf32> to vector<1x4xf32>
    %47 = vector.shape_cast %46 : vector<1x4xf32> to vector<1x1x4xf32>
    %48 = vector.broadcast %47 : vector<1x1x4xf32> to vector<16x16x4xf32>
    %49 = arith.mulf %45, %48 : vector<16x16x4xf32>
    %50 = arith.addf %44, %49 : vector<16x16x4xf32>
    %c0_37 = arith.constant 0 : index
    %c1 = arith.constant 1 : index
    %c0_38 = arith.constant 0 : index
    %51 = vector.load %arg11[%c0_37, %c1, %c0_38] : memref<20x20x4xf32, #tpu.memory_space<vmem>>, vector<16x16x4xf32>
    %52 = vector.extract_strided_slice %43 {offsets = [1, 0], sizes = [1, 4], strides = [1, 1]} : vector<25x4xf32> to vector<1x4xf32>
    %53 = vector.shape_cast %52 : vector<1x4xf32> to vector<1x1x4xf32>
    %54 = vector.broadcast %53 : vector<1x1x4xf32> to vector<16x16x4xf32>
    %55 = arith.mulf %51, %54 : vector<16x16x4xf32>
    %56 = arith.addf %50, %55 : vector<16x16x4xf32>
    %c0_39 = arith.constant 0 : index
    %c2_40 = arith.constant 2 : index
    %c0_41 = arith.constant 0 : index
    %57 = vector.load %arg11[%c0_39, %c2_40, %c0_41] : memref<20x20x4xf32, #tpu.memory_space<vmem>>, vector<16x16x4xf32>
    %58 = vector.extract_strided_slice %43 {offsets = [2, 0], sizes = [1, 4], strides = [1, 1]} : vector<25x4xf32> to vector<1x4xf32>
    %59 = vector.shape_cast %58 : vector<1x4xf32> to vector<1x1x4xf32>
    %60 = vector.broadcast %59 : vector<1x1x4xf32> to vector<16x16x4xf32>
    %61 = arith.mulf %57, %60 : vector<16x16x4xf32>
    %62 = arith.addf %56, %61 : vector<16x16x4xf32>
    %c0_42 = arith.constant 0 : index
    %c3 = arith.constant 3 : index
    %c0_43 = arith.constant 0 : index
    %63 = vector.load %arg11[%c0_42, %c3, %c0_43] : memref<20x20x4xf32, #tpu.memory_space<vmem>>, vector<16x16x4xf32>
    %64 = vector.extract_strided_slice %43 {offsets = [3, 0], sizes = [1, 4], strides = [1, 1]} : vector<25x4xf32> to vector<1x4xf32>
    %65 = vector.shape_cast %64 : vector<1x4xf32> to vector<1x1x4xf32>
    %66 = vector.broadcast %65 : vector<1x1x4xf32> to vector<16x16x4xf32>
    %67 = arith.mulf %63, %66 : vector<16x16x4xf32>
    %68 = arith.addf %62, %67 : vector<16x16x4xf32>
    %c0_44 = arith.constant 0 : index
    %c4 = arith.constant 4 : index
    %c0_45 = arith.constant 0 : index
    %69 = vector.load %arg11[%c0_44, %c4, %c0_45] : memref<20x20x4xf32, #tpu.memory_space<vmem>>, vector<16x16x4xf32>
    %70 = vector.extract_strided_slice %43 {offsets = [4, 0], sizes = [1, 4], strides = [1, 1]} : vector<25x4xf32> to vector<1x4xf32>
    %71 = vector.shape_cast %70 : vector<1x4xf32> to vector<1x1x4xf32>
    %72 = vector.broadcast %71 : vector<1x1x4xf32> to vector<16x16x4xf32>
    %73 = arith.mulf %69, %72 : vector<16x16x4xf32>
    %74 = arith.addf %68, %73 : vector<16x16x4xf32>
    %c1_46 = arith.constant 1 : index
    %c0_47 = arith.constant 0 : index
    %c0_48 = arith.constant 0 : index
    %75 = vector.load %arg11[%c1_46, %c0_47, %c0_48] : memref<20x20x4xf32, #tpu.memory_space<vmem>>, vector<16x16x4xf32>
    %76 = vector.extract_strided_slice %43 {offsets = [5, 0], sizes = [1, 4], strides = [1, 1]} : vector<25x4xf32> to vector<1x4xf32>
    %77 = vector.shape_cast %76 : vector<1x4xf32> to vector<1x1x4xf32>
    %78 = vector.broadcast %77 : vector<1x1x4xf32> to vector<16x16x4xf32>
    %79 = arith.mulf %75, %78 : vector<16x16x4xf32>
    %80 = arith.addf %74, %79 : vector<16x16x4xf32>
    %c1_49 = arith.constant 1 : index
    %c1_50 = arith.constant 1 : index
    %c0_51 = arith.constant 0 : index
    %81 = vector.load %arg11[%c1_49, %c1_50, %c0_51] : memref<20x20x4xf32, #tpu.memory_space<vmem>>, vector<16x16x4xf32>
    %82 = vector.extract_strided_slice %43 {offsets = [6, 0], sizes = [1, 4], strides = [1, 1]} : vector<25x4xf32> to vector<1x4xf32>
    %83 = vector.shape_cast %82 : vector<1x4xf32> to vector<1x1x4xf32>
    %84 = vector.broadcast %83 : vector<1x1x4xf32> to vector<16x16x4xf32>
    %85 = arith.mulf %81, %84 : vector<16x16x4xf32>
    %86 = arith.addf %80, %85 : vector<16x16x4xf32>
    %c1_52 = arith.constant 1 : index
    %c2_53 = arith.constant 2 : index
    %c0_54 = arith.constant 0 : index
    %87 = vector.load %arg11[%c1_52, %c2_53, %c0_54] : memref<20x20x4xf32, #tpu.memory_space<vmem>>, vector<16x16x4xf32>
    %88 = vector.extract_strided_slice %43 {offsets = [7, 0], sizes = [1, 4], strides = [1, 1]} : vector<25x4xf32> to vector<1x4xf32>
    %89 = vector.shape_cast %88 : vector<1x4xf32> to vector<1x1x4xf32>
    %90 = vector.broadcast %89 : vector<1x1x4xf32> to vector<16x16x4xf32>
    %91 = arith.mulf %87, %90 : vector<16x16x4xf32>
    %92 = arith.addf %86, %91 : vector<16x16x4xf32>
    %c1_55 = arith.constant 1 : index
    %c3_56 = arith.constant 3 : index
    %c0_57 = arith.constant 0 : index
    %93 = vector.load %arg11[%c1_55, %c3_56, %c0_57] : memref<20x20x4xf32, #tpu.memory_space<vmem>>, vector<16x16x4xf32>
    %94 = vector.extract_strided_slice %43 {offsets = [8, 0], sizes = [1, 4], strides = [1, 1]} : vector<25x4xf32> to vector<1x4xf32>
    %95 = vector.shape_cast %94 : vector<1x4xf32> to vector<1x1x4xf32>
    %96 = vector.broadcast %95 : vector<1x1x4xf32> to vector<16x16x4xf32>
    %97 = arith.mulf %93, %96 : vector<16x16x4xf32>
    %98 = arith.addf %92, %97 : vector<16x16x4xf32>
    %c1_58 = arith.constant 1 : index
    %c4_59 = arith.constant 4 : index
    %c0_60 = arith.constant 0 : index
    %99 = vector.load %arg11[%c1_58, %c4_59, %c0_60] : memref<20x20x4xf32, #tpu.memory_space<vmem>>, vector<16x16x4xf32>
    %100 = vector.extract_strided_slice %43 {offsets = [9, 0], sizes = [1, 4], strides = [1, 1]} : vector<25x4xf32> to vector<1x4xf32>
    %101 = vector.shape_cast %100 : vector<1x4xf32> to vector<1x1x4xf32>
    %102 = vector.broadcast %101 : vector<1x1x4xf32> to vector<16x16x4xf32>
    %103 = arith.mulf %99, %102 : vector<16x16x4xf32>
    %104 = arith.addf %98, %103 : vector<16x16x4xf32>
    %c2_61 = arith.constant 2 : index
    %c0_62 = arith.constant 0 : index
    %c0_63 = arith.constant 0 : index
    %105 = vector.load %arg11[%c2_61, %c0_62, %c0_63] : memref<20x20x4xf32, #tpu.memory_space<vmem>>, vector<16x16x4xf32>
    %106 = vector.extract_strided_slice %43 {offsets = [10, 0], sizes = [1, 4], strides = [1, 1]} : vector<25x4xf32> to vector<1x4xf32>
    %107 = vector.shape_cast %106 : vector<1x4xf32> to vector<1x1x4xf32>
    %108 = vector.broadcast %107 : vector<1x1x4xf32> to vector<16x16x4xf32>
    %109 = arith.mulf %105, %108 : vector<16x16x4xf32>
    %110 = arith.addf %104, %109 : vector<16x16x4xf32>
    %c2_64 = arith.constant 2 : index
    %c1_65 = arith.constant 1 : index
    %c0_66 = arith.constant 0 : index
    %111 = vector.load %arg11[%c2_64, %c1_65, %c0_66] : memref<20x20x4xf32, #tpu.memory_space<vmem>>, vector<16x16x4xf32>
    %112 = vector.extract_strided_slice %43 {offsets = [11, 0], sizes = [1, 4], strides = [1, 1]} : vector<25x4xf32> to vector<1x4xf32>
    %113 = vector.shape_cast %112 : vector<1x4xf32> to vector<1x1x4xf32>
    %114 = vector.broadcast %113 : vector<1x1x4xf32> to vector<16x16x4xf32>
    %115 = arith.mulf %111, %114 : vector<16x16x4xf32>
    %116 = arith.addf %110, %115 : vector<16x16x4xf32>
    %c2_67 = arith.constant 2 : index
    %c2_68 = arith.constant 2 : index
    %c0_69 = arith.constant 0 : index
    %117 = vector.load %arg11[%c2_67, %c2_68, %c0_69] : memref<20x20x4xf32, #tpu.memory_space<vmem>>, vector<16x16x4xf32>
    %118 = vector.extract_strided_slice %43 {offsets = [12, 0], sizes = [1, 4], strides = [1, 1]} : vector<25x4xf32> to vector<1x4xf32>
    %119 = vector.shape_cast %118 : vector<1x4xf32> to vector<1x1x4xf32>
    %120 = vector.broadcast %119 : vector<1x1x4xf32> to vector<16x16x4xf32>
    %121 = arith.mulf %117, %120 : vector<16x16x4xf32>
    %122 = arith.addf %116, %121 : vector<16x16x4xf32>
    %c2_70 = arith.constant 2 : index
    %c3_71 = arith.constant 3 : index
    %c0_72 = arith.constant 0 : index
    %123 = vector.load %arg11[%c2_70, %c3_71, %c0_72] : memref<20x20x4xf32, #tpu.memory_space<vmem>>, vector<16x16x4xf32>
    %124 = vector.extract_strided_slice %43 {offsets = [13, 0], sizes = [1, 4], strides = [1, 1]} : vector<25x4xf32> to vector<1x4xf32>
    %125 = vector.shape_cast %124 : vector<1x4xf32> to vector<1x1x4xf32>
    %126 = vector.broadcast %125 : vector<1x1x4xf32> to vector<16x16x4xf32>
    %127 = arith.mulf %123, %126 : vector<16x16x4xf32>
    %128 = arith.addf %122, %127 : vector<16x16x4xf32>
    %c2_73 = arith.constant 2 : index
    %c4_74 = arith.constant 4 : index
    %c0_75 = arith.constant 0 : index
    %129 = vector.load %arg11[%c2_73, %c4_74, %c0_75] : memref<20x20x4xf32, #tpu.memory_space<vmem>>, vector<16x16x4xf32>
    %130 = vector.extract_strided_slice %43 {offsets = [14, 0], sizes = [1, 4], strides = [1, 1]} : vector<25x4xf32> to vector<1x4xf32>
    %131 = vector.shape_cast %130 : vector<1x4xf32> to vector<1x1x4xf32>
    %132 = vector.broadcast %131 : vector<1x1x4xf32> to vector<16x16x4xf32>
    %133 = arith.mulf %129, %132 : vector<16x16x4xf32>
    %134 = arith.addf %128, %133 : vector<16x16x4xf32>
    %c3_76 = arith.constant 3 : index
    %c0_77 = arith.constant 0 : index
    %c0_78 = arith.constant 0 : index
    %135 = vector.load %arg11[%c3_76, %c0_77, %c0_78] : memref<20x20x4xf32, #tpu.memory_space<vmem>>, vector<16x16x4xf32>
    %136 = vector.extract_strided_slice %43 {offsets = [15, 0], sizes = [1, 4], strides = [1, 1]} : vector<25x4xf32> to vector<1x4xf32>
    %137 = vector.shape_cast %136 : vector<1x4xf32> to vector<1x1x4xf32>
    %138 = vector.broadcast %137 : vector<1x1x4xf32> to vector<16x16x4xf32>
    %139 = arith.mulf %135, %138 : vector<16x16x4xf32>
    %140 = arith.addf %134, %139 : vector<16x16x4xf32>
    %c3_79 = arith.constant 3 : index
    %c1_80 = arith.constant 1 : index
    %c0_81 = arith.constant 0 : index
    %141 = vector.load %arg11[%c3_79, %c1_80, %c0_81] : memref<20x20x4xf32, #tpu.memory_space<vmem>>, vector<16x16x4xf32>
    %142 = vector.extract_strided_slice %43 {offsets = [16, 0], sizes = [1, 4], strides = [1, 1]} : vector<25x4xf32> to vector<1x4xf32>
    %143 = vector.shape_cast %142 : vector<1x4xf32> to vector<1x1x4xf32>
    %144 = vector.broadcast %143 : vector<1x1x4xf32> to vector<16x16x4xf32>
    %145 = arith.mulf %141, %144 : vector<16x16x4xf32>
    %146 = arith.addf %140, %145 : vector<16x16x4xf32>
    %c3_82 = arith.constant 3 : index
    %c2_83 = arith.constant 2 : index
    %c0_84 = arith.constant 0 : index
    %147 = vector.load %arg11[%c3_82, %c2_83, %c0_84] : memref<20x20x4xf32, #tpu.memory_space<vmem>>, vector<16x16x4xf32>
    %148 = vector.extract_strided_slice %43 {offsets = [17, 0], sizes = [1, 4], strides = [1, 1]} : vector<25x4xf32> to vector<1x4xf32>
    %149 = vector.shape_cast %148 : vector<1x4xf32> to vector<1x1x4xf32>
    %150 = vector.broadcast %149 : vector<1x1x4xf32> to vector<16x16x4xf32>
    %151 = arith.mulf %147, %150 : vector<16x16x4xf32>
    %152 = arith.addf %146, %151 : vector<16x16x4xf32>
    %c3_85 = arith.constant 3 : index
    %c3_86 = arith.constant 3 : index
    %c0_87 = arith.constant 0 : index
    %153 = vector.load %arg11[%c3_85, %c3_86, %c0_87] : memref<20x20x4xf32, #tpu.memory_space<vmem>>, vector<16x16x4xf32>
    %154 = vector.extract_strided_slice %43 {offsets = [18, 0], sizes = [1, 4], strides = [1, 1]} : vector<25x4xf32> to vector<1x4xf32>
    %155 = vector.shape_cast %154 : vector<1x4xf32> to vector<1x1x4xf32>
    %156 = vector.broadcast %155 : vector<1x1x4xf32> to vector<16x16x4xf32>
    %157 = arith.mulf %153, %156 : vector<16x16x4xf32>
    %158 = arith.addf %152, %157 : vector<16x16x4xf32>
    %c3_88 = arith.constant 3 : index
    %c4_89 = arith.constant 4 : index
    %c0_90 = arith.constant 0 : index
    %159 = vector.load %arg11[%c3_88, %c4_89, %c0_90] : memref<20x20x4xf32, #tpu.memory_space<vmem>>, vector<16x16x4xf32>
    %160 = vector.extract_strided_slice %43 {offsets = [19, 0], sizes = [1, 4], strides = [1, 1]} : vector<25x4xf32> to vector<1x4xf32>
    %161 = vector.shape_cast %160 : vector<1x4xf32> to vector<1x1x4xf32>
    %162 = vector.broadcast %161 : vector<1x1x4xf32> to vector<16x16x4xf32>
    %163 = arith.mulf %159, %162 : vector<16x16x4xf32>
    %164 = arith.addf %158, %163 : vector<16x16x4xf32>
    %c4_91 = arith.constant 4 : index
    %c0_92 = arith.constant 0 : index
    %c0_93 = arith.constant 0 : index
    %165 = vector.load %arg11[%c4_91, %c0_92, %c0_93] : memref<20x20x4xf32, #tpu.memory_space<vmem>>, vector<16x16x4xf32>
    %166 = vector.extract_strided_slice %43 {offsets = [20, 0], sizes = [1, 4], strides = [1, 1]} : vector<25x4xf32> to vector<1x4xf32>
    %167 = vector.shape_cast %166 : vector<1x4xf32> to vector<1x1x4xf32>
    %168 = vector.broadcast %167 : vector<1x1x4xf32> to vector<16x16x4xf32>
    %169 = arith.mulf %165, %168 : vector<16x16x4xf32>
    %170 = arith.addf %164, %169 : vector<16x16x4xf32>
    %c4_94 = arith.constant 4 : index
    %c1_95 = arith.constant 1 : index
    %c0_96 = arith.constant 0 : index
    %171 = vector.load %arg11[%c4_94, %c1_95, %c0_96] : memref<20x20x4xf32, #tpu.memory_space<vmem>>, vector<16x16x4xf32>
    %172 = vector.extract_strided_slice %43 {offsets = [21, 0], sizes = [1, 4], strides = [1, 1]} : vector<25x4xf32> to vector<1x4xf32>
    %173 = vector.shape_cast %172 : vector<1x4xf32> to vector<1x1x4xf32>
    %174 = vector.broadcast %173 : vector<1x1x4xf32> to vector<16x16x4xf32>
    %175 = arith.mulf %171, %174 : vector<16x16x4xf32>
    %176 = arith.addf %170, %175 : vector<16x16x4xf32>
    %c4_97 = arith.constant 4 : index
    %c2_98 = arith.constant 2 : index
    %c0_99 = arith.constant 0 : index
    %177 = vector.load %arg11[%c4_97, %c2_98, %c0_99] : memref<20x20x4xf32, #tpu.memory_space<vmem>>, vector<16x16x4xf32>
    %178 = vector.extract_strided_slice %43 {offsets = [22, 0], sizes = [1, 4], strides = [1, 1]} : vector<25x4xf32> to vector<1x4xf32>
    %179 = vector.shape_cast %178 : vector<1x4xf32> to vector<1x1x4xf32>
    %180 = vector.broadcast %179 : vector<1x1x4xf32> to vector<16x16x4xf32>
    %181 = arith.mulf %177, %180 : vector<16x16x4xf32>
    %182 = arith.addf %176, %181 : vector<16x16x4xf32>
    %c4_100 = arith.constant 4 : index
    %c3_101 = arith.constant 3 : index
    %c0_102 = arith.constant 0 : index
    %183 = vector.load %arg11[%c4_100, %c3_101, %c0_102] : memref<20x20x4xf32, #tpu.memory_space<vmem>>, vector<16x16x4xf32>
    %184 = vector.extract_strided_slice %43 {offsets = [23, 0], sizes = [1, 4], strides = [1, 1]} : vector<25x4xf32> to vector<1x4xf32>
    %185 = vector.shape_cast %184 : vector<1x4xf32> to vector<1x1x4xf32>
    %186 = vector.broadcast %185 : vector<1x1x4xf32> to vector<16x16x4xf32>
    %187 = arith.mulf %183, %186 : vector<16x16x4xf32>
    %188 = arith.addf %182, %187 : vector<16x16x4xf32>
    %c4_103 = arith.constant 4 : index
    %c4_104 = arith.constant 4 : index
    %c0_105 = arith.constant 0 : index
    %189 = vector.load %arg11[%c4_103, %c4_104, %c0_105] : memref<20x20x4xf32, #tpu.memory_space<vmem>>, vector<16x16x4xf32>
    %190 = vector.extract_strided_slice %43 {offsets = [24, 0], sizes = [1, 4], strides = [1, 1]} : vector<25x4xf32> to vector<1x4xf32>
    %191 = vector.shape_cast %190 : vector<1x4xf32> to vector<1x1x4xf32>
    %192 = vector.broadcast %191 : vector<1x1x4xf32> to vector<16x16x4xf32>
    %193 = arith.mulf %189, %192 : vector<16x16x4xf32>
    %194 = arith.addf %188, %193 : vector<16x16x4xf32>
    %c0_106 = arith.constant 0 : index
    %c0_107 = arith.constant 0 : index
    %195 = vector.load %arg7[%c0_106, %c0_107] : memref<1x4xf32, #tpu.memory_space<vmem>>, vector<1x4xf32>
    %196 = vector.shape_cast %195 : vector<1x4xf32> to vector<1x1x4xf32>
    %197 = vector.broadcast %196 : vector<1x1x4xf32> to vector<16x16x4xf32>
    %198 = arith.addf %194, %197 : vector<16x16x4xf32>
    %199 = arith.mulf %34, %198 : vector<16x16x4xf32>
    %cst_108 = arith.constant 5.000000e-01 : f32
    %200 = vector.broadcast %cst_108 : f32 to vector<16x16x4xf32>
    %201 = arith.mulf %200, %199 : vector<16x16x4xf32>
    %cst_109 = arith.constant 0.707106769 : f32
    %202 = vector.broadcast %cst_109 : f32 to vector<16x16x4xf32>
    %203 = arith.mulf %199, %202 : vector<16x16x4xf32>
    %cst_110 = arith.constant 0.000000e+00 : f32
    %204 = vector.broadcast %cst_110 : f32 to vector<16x16x4xf32>
    %205 = arith.cmpf oge, %203, %204 : vector<16x16x4xf32>
    %cst_111 = arith.constant 1.000000e+00 : f32
    %cst_112 = arith.constant -1.000000e+00 : f32
    %206 = vector.broadcast %cst_111 : f32 to vector<16x16x4xf32>
    %207 = vector.broadcast %cst_112 : f32 to vector<16x16x4xf32>
    %208 = arith.select %205, %206, %207 : vector<16x16x4xi1>, vector<16x16x4xf32>
    %209 = math.absf %203 : vector<16x16x4xf32>
    %cst_113 = arith.constant 0.327591091 : f32
    %210 = vector.broadcast %cst_113 : f32 to vector<16x16x4xf32>
    %211 = arith.mulf %210, %209 : vector<16x16x4xf32>
    %cst_114 = arith.constant 1.000000e+00 : f32
    %212 = vector.broadcast %cst_114 : f32 to vector<16x16x4xf32>
    %213 = arith.addf %212, %211 : vector<16x16x4xf32>
    %cst_115 = arith.constant 1.000000e+00 : f32
    %214 = vector.broadcast %cst_115 : f32 to vector<16x16x4xf32>
    %215 = arith.divf %214, %213 : vector<16x16x4xf32>
    %cst_116 = arith.constant 1.06140542 : f32
    %216 = vector.broadcast %cst_116 : f32 to vector<16x16x4xf32>
    %217 = arith.mulf %215, %216 : vector<16x16x4xf32>
    %cst_117 = arith.constant -1.45315206 : f32
    %218 = vector.broadcast %cst_117 : f32 to vector<16x16x4xf32>
    %219 = arith.addf %218, %217 : vector<16x16x4xf32>
    %220 = arith.mulf %215, %219 : vector<16x16x4xf32>
    %cst_118 = arith.constant 1.42141378 : f32
    %221 = vector.broadcast %cst_118 : f32 to vector<16x16x4xf32>
    %222 = arith.addf %221, %220 : vector<16x16x4xf32>
    %223 = arith.mulf %215, %222 : vector<16x16x4xf32>
    %cst_119 = arith.constant -0.284496725 : f32
    %224 = vector.broadcast %cst_119 : f32 to vector<16x16x4xf32>
    %225 = arith.addf %224, %223 : vector<16x16x4xf32>
    %226 = arith.mulf %215, %225 : vector<16x16x4xf32>
    %cst_120 = arith.constant 0.254829586 : f32
    %227 = vector.broadcast %cst_120 : f32 to vector<16x16x4xf32>
    %228 = arith.addf %227, %226 : vector<16x16x4xf32>
    %229 = arith.mulf %215, %228 : vector<16x16x4xf32>
    %cst_121 = arith.constant 0.000000e+00 : f32
    %230 = vector.broadcast %cst_121 : f32 to vector<16x16x4xf32>
    %231 = arith.subf %230, %209 : vector<16x16x4xf32>
    %232 = arith.mulf %231, %209 : vector<16x16x4xf32>
    %233 = math.exp %232 : vector<16x16x4xf32>
    %234 = arith.mulf %229, %233 : vector<16x16x4xf32>
    %cst_122 = arith.constant 1.000000e+00 : f32
    %235 = vector.broadcast %cst_122 : f32 to vector<16x16x4xf32>
    %236 = arith.subf %235, %234 : vector<16x16x4xf32>
    %237 = arith.mulf %208, %236 : vector<16x16x4xf32>
    %cst_123 = arith.constant 1.000000e+00 : f32
    %238 = vector.broadcast %cst_123 : f32 to vector<16x16x4xf32>
    %239 = arith.addf %238, %237 : vector<16x16x4xf32>
    %240 = arith.mulf %201, %239 : vector<16x16x4xf32>
    %241 = vector.shape_cast %240 : vector<16x16x4xf32> to vector<256x4xf32>
    %c0_124 = arith.constant 0 : index
    %c0_125 = arith.constant 0 : index
    %242 = vector.load %arg8[%c0_124, %c0_125] : memref<4x4xf32, #tpu.memory_space<vmem>>, vector<4x4xf32>
    %cst_126 = arith.constant dense<0.000000e+00> : vector<256x4xf32>
    %243 = tpu.matmul %241, %242, %cst_126 {dimension_numbers = #tpu.dot_dimension_numbers<[1], [0], [0], [1], [0, 0, 1, 1], [], []>} : vector<256x4xf32>, vector<4x4xf32>, vector<256x4xf32> -> vector<256x4xf32>
    %c0_127 = arith.constant 0 : index
    %c0_128 = arith.constant 0 : index
    %244 = vector.load %arg9[%c0_127, %c0_128] : memref<1x4xf32, #tpu.memory_space<vmem>>, vector<1x4xf32>
    %245 = vector.broadcast %244 : vector<1x4xf32> to vector<256x4xf32>
    %246 = arith.addf %243, %245 : vector<256x4xf32>
    %247 = vector.shape_cast %246 : vector<256x4xf32> to vector<16x16x4xf32>
    %248 = arith.addf %247, %1 : vector<16x16x4xf32>
    %c0_129 = arith.constant 0 : index
    %c0_130 = arith.constant 0 : index
    %c0_131 = arith.constant 0 : index
    %c0_132 = arith.constant 0 : index
    %249 = vector.load %arg10[%c0_129, %c0_130, %c0_131, %c0_132] : memref<1x16x16x4xf32, #tpu.memory_space<vmem>>, vector<1x16x16x4xf32>
    %250 = vector.shape_cast %249 : vector<1x16x16x4xf32> to vector<16x16x4xf32>
    %251 = vector.shape_cast %248 : vector<16x16x4xf32> to vector<1x16x16x4xf32>
    tpu.vector_store %arg10[%c0_129, %c0_130, %c0_131, %c0_132], %251 {strides = array<i32>} : memref<1x16x16x4xf32, #tpu.memory_space<vmem>>, vector<1x16x16x4xf32>,
    return
  }
  func.func @transform_0(%arg0: i32) -> (i32, i32, i32, i32) {
    %c0_i32 = arith.constant 0 : i32
    %c0_i32_0 = arith.constant 0 : i32
    %c0_i32_1 = arith.constant 0 : i32
    %c0_i32_2 = arith.constant 0 : i32
    return %arg0, %c0_i32, %c0_i32_0, %c0_i32_1 : i32, i32, i32, i32
  }
  func.func @transform_1(%arg0: i32) -> (i32, i32) {
    %c0_i32 = arith.constant 0 : i32
    %c0_i32_0 = arith.constant 0 : i32
    %c0_i32_1 = arith.constant 0 : i32
    return %c0_i32, %c0_i32_0 : i32, i32
  }
  func.func @transform_2(%arg0: i32) -> (i32, i32) {
    %c0_i32 = arith.constant 0 : i32
    %c0_i32_0 = arith.constant 0 : i32
    %c0_i32_1 = arith.constant 0 : i32
    return %c0_i32, %c0_i32_0 : i32, i32
  }
  func.func @transform_3(%arg0: i32) -> (i32, i32) {
    %c0_i32 = arith.constant 0 : i32
    %c0_i32_0 = arith.constant 0 : i32
    %c0_i32_1 = arith.constant 0 : i32
    return %c0_i32, %c0_i32_0 : i32, i32
  }
  func.func @transform_4(%arg0: i32) -> (i32, i32) {
    %c0_i32 = arith.constant 0 : i32
    %c0_i32_0 = arith.constant 0 : i32
    %c0_i32_1 = arith.constant 0 : i32
    return %c0_i32, %c0_i32_0 : i32, i32
  }
  func.func @transform_5(%arg0: i32) -> (i32, i32) {
    %c0_i32 = arith.constant 0 : i32
    %c0_i32_0 = arith.constant 0 : i32
    %c0_i32_1 = arith.constant 0 : i32
    return %c0_i32, %c0_i32_0 : i32, i32
  }
  func.func @transform_6(%arg0: i32) -> (i32, i32) {
    %c0_i32 = arith.constant 0 : i32
    %c0_i32_0 = arith.constant 0 : i32
    %c0_i32_1 = arith.constant 0 : i32
    return %c0_i32, %c0_i32_0 : i32, i32
  }
  func.func @transform_7(%arg0: i32) -> (i32, i32) {
    %c0_i32 = arith.constant 0 : i32
    %c0_i32_0 = arith.constant 0 : i32
    %c0_i32_1 = arith.constant 0 : i32
    return %c0_i32, %c0_i32_0 : i32, i32
  }
  func.func @transform_8(%arg0: i32) -> (i32, i32) {
    %c0_i32 = arith.constant 0 : i32
    %c0_i32_0 = arith.constant 0 : i32
    %c0_i32_1 = arith.constant 0 : i32
    return %c0_i32, %c0_i32_0 : i32, i32
  }
  func.func @transform_9(%arg0: i32) -> (i32, i32, i32, i32) {
    %c0_i32 = arith.constant 0 : i32
    %c0_i32_0 = arith.constant 0 : i32
    %c0_i32_1 = arith.constant 0 : i32
    %c0_i32_2 = arith.constant 0 : i32
    return %arg0, %c0_i32, %c0_i32_0, %c0_i32_1 : i32, i32, i32, i32
  }
}

</mosaic_0001>

<llo_original>
// kernel: tpu_custom_call.1
$region0: #{tpu_custom_call.1}
  #allocation0 [shape = 'u32[]', space=smem, size = 0x4, offset = 0x4, fixed_abs, tag = 'smem constant byte address 0x4 - core index']
  #allocation1 [shape = 'u32[144,128]{1,0:T(1,128)}', space=vmem, size = 0x12000, scoped, tag = 'internal scratch']
  #allocation2 [shape = 'f32[20,20,4]{2,1,0:T(8,128)}', space=vmem, size = 0x3c000, scoped, tag = 'scratch operand']
  %s0 = inlined_call_operand.vmem [shape: f32[2,16,16,4], index: 0, kind: input, shape index: {}]
  %s1 = inlined_call_operand.vmem [shape: f32[1,4], index: 1, kind: input, shape index: {}]
  %s2 = inlined_call_operand.vmem [shape: f32[1,4], index: 2, kind: input, shape index: {}]
  %s3 = inlined_call_operand.vmem [shape: f32[4,8], index: 3, kind: input, shape index: {}]
  %s4 = inlined_call_operand.vmem [shape: f32[1,8], index: 4, kind: input, shape index: {}]
  %s5 = inlined_call_operand.vmem [shape: f32[25,4], index: 5, kind: input, shape index: {}]
  %s6 = inlined_call_operand.vmem [shape: f32[1,4], index: 6, kind: input, shape index: {}]
  %s7 = inlined_call_operand.vmem [shape: f32[4,4], index: 7, kind: input, shape index: {}]
  %s8 = inlined_call_operand.vmem [shape: f32[1,4], index: 8, kind: input, shape index: {}]
  %s9 = inlined_call_operand.vmem [shape: f32[2,16,16,4], index: 9, kind: output, shape index: {}]
  %s10 = sld [smem:[#allocation0]]
  $region69: #{tpu_custom_call.1} parent=0
    _
  %s12 = ssub.s32 1, %s10
  %s13 = scalar_select 0, %s12, %s10
  loop: start=0, step=1, limit=4
  $region2: #{tpu_custom_call.1} parent=0 // loop_pre_header
    _
  $region3: #{tpu_custom_call.1} parent=0 // loop_header
    %s15 = sphi 0, %s19
    %p16 = scmp.ge.s32.totalorder %s15, 4
    %s25 = sphi 0, %s27
    %s28 = sphi 0, %s25
    %s29 = sphi 0, %s28
    %s45 = sphi 0, %s29
    %s49 = sphi 0, %s49
    %s51 = sphi 0, %s49
    %s52 = sphi 0, %s51
    %s66 = sphi 0, %s52
    %s70 = sphi 0, %s70
    %s72 = sphi 0, %s70
    %s73 = sphi 0, %s72
    %s87 = sphi 0, %s73
    %s91 = sphi 0, %s91
    %s93 = sphi 0, %s91
    %s94 = sphi 0, %s93
    %s108 = sphi 0, %s94
    %s112 = sphi 0, %s112
    %s114 = sphi 0, %s112
    %s115 = sphi 0, %s114
    %s129 = sphi 0, %s115
    %s133 = sphi 0, %s133
    %s135 = sphi 0, %s133
    %s136 = sphi 0, %s135
    %s150 = sphi 0, %s136
    %s154 = sphi 0, %s154
    %s156 = sphi 0, %s154
    %s157 = sphi 0, %s156
    %s171 = sphi 0, %s157
    %s175 = sphi 0, %s175
    %s177 = sphi 0, %s175
    %s178 = sphi 0, %s177
    %s192 = sphi 0, %s178
    %s196 = sphi 0, %s196
    %s198 = sphi 0, %s196
    %s199 = sphi 0, %s198
    %s213 = sphi 0, %s199
    %s219 = sphi 0, %s221
    %s222 = sphi 0, %s219
    %s223 = sphi 0, %s222
    %s239 = sphi 0, %s223
  $region4: #{tpu_custom_call.1} parent=0 // loop_header_branch
    %18 = sbr.rel (%p16) target = $region8
  $region5: #{tpu_custom_call.1} parent=0 // loop_body
    %s20 = ssub.s32 %s15, 1
    %s21 = ssub.s32 %s15, 2
    %s22 = sadd.s32 %s15, 1
    %s23 = ssub.s32 %s15, %s22
    %p24 = scmp.eq.s32.totalorder %s23, 0
    %s26 = sadd.s32 %s25, 1
    %s27 = scalar_select %p24, %s25, %s26
    %p30 = pneg %p24
    %p31 = scmp.eq.s32.totalorder %s15, 1
    %p32 = por %p30, %p31
    %p33 = scmp.ne.s32.totalorder %s25, %s28
    %p34 = scmp.eq.s32.totalorder %s15, 0
    %p35 = por %p33, %p34
    %p36 = scmp.ne.s32.totalorder %s25, %s28
    %p37 = scmp.eq.s32.totalorder %s20, 1
    %p38 = por %p36, %p37
    %p39 = scmp.ne.s32.totalorder %s28, %s29
    %p40 = scmp.eq.s32.totalorder %s20, 0
    %p41 = por %p39, %p40
    %p42 = scmp.ne.s32.totalorder %s28, %s29
    %p43 = scmp.eq.s32.totalorder %s21, 1
    %p44 = por %p42, %p43
    %p46 = scmp.ne.s32.totalorder %s29, %s45
    %p47 = scmp.eq.s32.totalorder %s21, 0
    %p48 = por %p46, %p47
    %s50 = sadd.s32 %s49, 1
    %p53 = scmp.eq.s32.totalorder %s15, 1
    %p54 = scmp.ne.s32.totalorder %s49, %s51
    %p55 = scmp.eq.s32.totalorder %s15, 0
    %p56 = por %p54, %p55
    %p57 = scmp.ne.s32.totalorder %s49, %s51
    %p58 = scmp.eq.s32.totalorder %s20, 1
    %p59 = por %p57, %p58
    %p60 = scmp.ne.s32.totalorder %s51, %s52
    %p61 = scmp.eq.s32.totalorder %s20, 0
    %p62 = por %p60, %p61
    %p63 = scmp.ne.s32.totalorder %s51, %s52
    %p64 = scmp.eq.s32.totalorder %s21, 1
    %p65 = por %p63, %p64
    %p67 = scmp.ne.s32.totalorder %s52, %s66
    %p68 = scmp.eq.s32.totalorder %s21, 0
    %p69 = por %p67, %p68
    %s71 = sadd.s32 %s70, 1
    %p74 = scmp.eq.s32.totalorder %s15, 1
    %p75 = scmp.ne.s32.totalorder %s70, %s72
    %p76 = scmp.eq.s32.totalorder %s15, 0
    %p77 = por %p75, %p76
    %p78 = scmp.ne.s32.totalorder %s70, %s72
    %p79 = scmp.eq.s32.totalorder %s20, 1
    %p80 = por %p78, %p79
    %p81 = scmp.ne.s32.totalorder %s72, %s73
    %p82 = scmp.eq.s32.totalorder %s20, 0
    %p83 = por %p81, %p82
    %p84 = scmp.ne.s32.totalorder %s72, %s73
    %p85 = scmp.eq.s32.totalorder %s21, 1
    %p86 = por %p84, %p85
    %p88 = scmp.ne.s32.totalorder %s73, %s87
    %p89 = scmp.eq.s32.totalorder %s21, 0
    %p90 = por %p88, %p89
    %s92 = sadd.s32 %s91, 1
    %p95 = scmp.eq.s32.totalorder %s15, 1
    %p96 = scmp.ne.s32.totalorder %s91, %s93
    %p97 = scmp.eq.s32.totalorder %s15, 0
    %p98 = por %p96, %p97
    %p99 = scmp.ne.s32.totalorder %s91, %s93
    %p100 = scmp.eq.s32.totalorder %s20, 1
    %p101 = por %p99, %p100
    %p102 = scmp.ne.s32.totalorder %s93, %s94
    %p103 = scmp.eq.s32.totalorder %s20, 0
    %p104 = por %p102, %p103
    %p105 = scmp.ne.s32.totalorder %s93, %s94
    %p106 = scmp.eq.s32.totalorder %s21, 1
    %p107 = por %p105, %p106
    %p109 = scmp.ne.s32.totalorder %s94, %s108
    %p110 = scmp.eq.s32.totalorder %s21, 0
    %p111 = por %p109, %p110
    %s113 = sadd.s32 %s112, 1
    %p116 = scmp.eq.s32.totalorder %s15, 1
    %p117 = scmp.ne.s32.totalorder %s112, %s114
    %p118 = scmp.eq.s32.totalorder %s15, 0
    %p119 = por %p117, %p118
    %p120 = scmp.ne.s32.totalorder %s112, %s114
    %p121 = scmp.eq.s32.totalorder %s20, 1
    %p122 = por %p120, %p121
    %p123 = scmp.ne.s32.totalorder %s114, %s115
    %p124 = scmp.eq.s32.totalorder %s20, 0
    %p125 = por %p123, %p124
    %p126 = scmp.ne.s32.totalorder %s114, %s115
    %p127 = scmp.eq.s32.totalorder %s21, 1
    %p128 = por %p126, %p127
    %p130 = scmp.ne.s32.totalorder %s115, %s129
    %p131 = scmp.eq.s32.totalorder %s21, 0
    %p132 = por %p130, %p131
    %s134 = sadd.s32 %s133, 1
    %p137 = scmp.eq.s32.totalorder %s15, 1
    %p138 = scmp.ne.s32.totalorder %s133, %s135
    %p139 = scmp.eq.s32.totalorder %s15, 0
    %p140 = por %p138, %p139
    %p141 = scmp.ne.s32.totalorder %s133, %s135
    %p142 = scmp.eq.s32.totalorder %s20, 1
    %p143 = por %p141, %p142
    %p144 = scmp.ne.s32.totalorder %s135, %s136
    %p145 = scmp.eq.s32.totalorder %s20, 0
    %p146 = por %p144, %p145
    %p147 = scmp.ne.s32.totalorder %s135, %s136
    %p148 = scmp.eq.s32.totalorder %s21, 1
    %p149 = por %p147, %p148
    %p151 = scmp.ne.s32.totalorder %s136, %s150
    %p152 = scmp.eq.s32.totalorder %s21, 0
    %p153 = por %p151, %p152
    %s155 = sadd.s32 %s154, 1
    %p158 = scmp.eq.s32.totalorder %s15, 1
    %p159 = scmp.ne.s32.totalorder %s154, %s156
    %p160 = scmp.eq.s32.totalorder %s15, 0
    %p161 = por %p159, %p160
    %p162 = scmp.ne.s32.totalorder %s154, %s156
    %p163 = scmp.eq.s32.totalorder %s20, 1
    %p164 = por %p162, %p163
    %p165 = scmp.ne.s32.totalorder %s156, %s157
    %p166 = scmp.eq.s32.totalorder %s20, 0
    %p167 = por %p165, %p166
    %p168 = scmp.ne.s32.totalorder %s156, %s157
    %p169 = scmp.eq.s32.totalorder %s21, 1
    %p170 = por %p168, %p169
    %p172 = scmp.ne.s32.totalorder %s157, %s171
    %p173 = scmp.eq.s32.totalorder %s21, 0
    %p174 = por %p172, %p173
    %s176 = sadd.s32 %s175, 1
    %p179 = scmp.eq.s32.totalorder %s15, 1
    %p180 = scmp.ne.s32.totalorder %s175, %s177
    %p181 = scmp.eq.s32.totalorder %s15, 0
    %p182 = por %p180, %p181
    %p183 = scmp.ne.s32.totalorder %s175, %s177
    %p184 = scmp.eq.s32.totalorder %s20, 1
    %p185 = por %p183, %p184
    %p186 = scmp.ne.s32.totalorder %s177, %s178
    %p187 = scmp.eq.s32.totalorder %s20, 0
    %p188 = por %p186, %p187
    %p189 = scmp.ne.s32.totalorder %s177, %s178
    %p190 = scmp.eq.s32.totalorder %s21, 1
    %p191 = por %p189, %p190
    %p193 = scmp.ne.s32.totalorder %s178, %s192
    %p194 = scmp.eq.s32.totalorder %s21, 0
    %p195 = por %p193, %p194
    %s197 = sadd.s32 %s196, 1
    %p200 = scmp.eq.s32.totalorder %s15, 1
    %p201 = scmp.ne.s32.totalorder %s196, %s198
    %p202 = scmp.eq.s32.totalorder %s15, 0
    %p203 = por %p201, %p202
    %p204 = scmp.ne.s32.totalorder %s196, %s198
    %p205 = scmp.eq.s32.totalorder %s20, 1
    %p206 = por %p204, %p205
    %p207 = scmp.ne.s32.totalorder %s198, %s199
    %p208 = scmp.eq.s32.totalorder %s20, 0
    %p209 = por %p207, %p208
    %p210 = scmp.ne.s32.totalorder %s198, %s199
    %p211 = scmp.eq.s32.totalorder %s21, 1
    %p212 = por %p210, %p211
    %p214 = scmp.ne.s32.totalorder %s199, %s213
    %p215 = scmp.eq.s32.totalorder %s21, 0
    %p216 = por %p214, %p215
    %s217 = ssub.s32 %s15, %s22
    %p218 = scmp.eq.s32.totalorder %s217, 0
    %s220 = sadd.s32 %s219, 1
    %s221 = scalar_select %p218, %s219, %s220
    %p224 = pneg %p218
    %p225 = scmp.eq.s32.totalorder %s15, 1
    %p226 = por %p224, %p225
    %p227 = scmp.ne.s32.totalorder %s219, %s222
    %p228 = scmp.eq.s32.totalorder %s15, 0
    %p229 = por %p227, %p228
    %p230 = scmp.ne.s32.totalorder %s219, %s222
    %p231 = scmp.eq.s32.totalorder %s20, 1
    %p232 = por %p230, %p231
    %p233 = scmp.ne.s32.totalorder %s222, %s223
    %p234 = scmp.eq.s32.totalorder %s20, 0
    %p235 = por %p233, %p234
    %p236 = scmp.ne.s32.totalorder %s222, %s223
    %p237 = scmp.eq.s32.totalorder %s21, 1
    %p238 = por %p236, %p237
    %p240 = scmp.ne.s32.totalorder %s223, %s239
    %p241 = scmp.eq.s32.totalorder %s21, 0
    %p242 = por %p240, %p241
    %p243 = scmp.le.s32.totalorder 1, %s15
    %p244 = scmp.lt.s32.totalorder %s15, 3
    %p245 = pnand %p243, %p244
    %p246 = pneg %p245
    // Predicated region
    $region9: #{tpu_custom_call.1} parent=5 // pred_check
      _
    $region10: #{tpu_custom_call.1} parent=5 // pred_check_branch
      %248 = sbr.rel (%p245) target = $region12
    $region11: #{tpu_custom_call.1} parent=5 // pred_region
      %s249 = ssub.s32 %s15, 1
      // Predicated region
      $region13: #{tpu_custom_call.1} parent=11 // pred_check
        %p250 = pneg %p62
      $region14: #{tpu_custom_call.1} parent=11 // pred_check_branch
        %252 = sbr.rel (%p250) target = $region16
      $region15: #{tpu_custom_call.1} parent=11 // pred_region
        _
      $region16: #{tpu_custom_call.1} parent=11 // pred_fallthru
        _
      // Predicated region
      $region17: #{tpu_custom_call.1} parent=11 // pred_check
        %p253 = pneg %p83
      $region18: #{tpu_custom_call.1} parent=11 // pred_check_branch
        %255 = sbr.rel (%p253) target = $region20
      $region19: #{tpu_custom_call.1} parent=11 // pred_region
        _
      $region20: #{tpu_custom_call.1} parent=11 // pred_fallthru
        _
      // Predicated region
      $region21: #{tpu_custom_call.1} parent=11 // pred_check
        %p256 = pneg %p104
      $region22: #{tpu_custom_call.1} parent=11 // pred_check_branch
        %258 = sbr.rel (%p256) target = $region24
      $region23: #{tpu_custom_call.1} parent=11 // pred_region
        _
      $region24: #{tpu_custom_call.1} parent=11 // pred_fallthru
        _
      // Predicated region
      $region25: #{tpu_custom_call.1} parent=11 // pred_check
        %p259 = pneg %p125
      $region26: #{tpu_custom_call.1} parent=11 // pred_check_branch
        %261 = sbr.rel (%p259) target = $region28
      $region27: #{tpu_custom_call.1} parent=11 // pred_region
        _
      $region28: #{tpu_custom_call.1} parent=11 // pred_fallthru
        _
      // Predicated region
      $region29: #{tpu_custom_call.1} parent=11 // pred_check
        %p262 = pneg %p146
      $region30: #{tpu_custom_call.1} parent=11 // pred_check_branch
        %264 = sbr.rel (%p262) target = $region32
      $region31: #{tpu_custom_call.1} parent=11 // pred_region
        _
      $region32: #{tpu_custom_call.1} parent=11 // pred_fallthru
        _
      // Predicated region
      $region33: #{tpu_custom_call.1} parent=11 // pred_check
        %p265 = pneg %p167
      $region34: #{tpu_custom_call.1} parent=11 // pred_check_branch
        %267 = sbr.rel (%p265) target = $region36
      $region35: #{tpu_custom_call.1} parent=11 // pred_region
        _
      $region36: #{tpu_custom_call.1} parent=11 // pred_fallthru
        _
      // Predicated region
      $region37: #{tpu_custom_call.1} parent=11 // pred_check
        %p268 = pneg %p188
      $region38: #{tpu_custom_call.1} parent=11 // pred_check_branch
        %270 = sbr.rel (%p268) target = $region40
      $region39: #{tpu_custom_call.1} parent=11 // pred_region
        _
      $region40: #{tpu_custom_call.1} parent=11 // pred_fallthru
        _
      // Predicated region
      $region41: #{tpu_custom_call.1} parent=11 // pred_check
        %p271 = pneg %p209
      $region42: #{tpu_custom_call.1} parent=11 // pred_check_branch
        %273 = sbr.rel (%p271) target = $region44
      $region43: #{tpu_custom_call.1} parent=11 // pred_region
        _
      $region44: #{tpu_custom_call.1} parent=11 // pred_fallthru
        _
    $region12: #{tpu_custom_call.1} parent=5 // pred_fallthru
      _
    %p274 = scmp.lt.s32.totalorder %s15, 2
    // Predicated region
    $region45: #{tpu_custom_call.1} parent=5 // pred_check
      %p275 = pneg %p274
    $region46: #{tpu_custom_call.1} parent=5 // pred_check_branch
      %277 = sbr.rel (%p275) target = $region48
    $region47: #{tpu_custom_call.1} parent=5 // pred_region
      // Predicated region
      $region49: #{tpu_custom_call.1} parent=47 // pred_check
        %p278 = pneg %p35
      $region50: #{tpu_custom_call.1} parent=47 // pred_check_branch
        %280 = sbr.rel (%p278) target = $region52
      $region51: #{tpu_custom_call.1} parent=47 // pred_region
        %p281 = scmp.lt.s32.totalorder %s15, 1
        %s282 = scalar_select %p281, %s15, 1
        %s283 = smul.addr %s282, 32
        %s284 = smul.addr %s283, 8
        %s285 = scalar_lea.vmem %s0, %s284
      $region52: #{tpu_custom_call.1} parent=47 // pred_fallthru
        _
    $region48: #{tpu_custom_call.1} parent=5 // pred_fallthru
      _
    %p286 = scmp.le.s32.totalorder 1, %s15
    %p287 = scmp.lt.s32.totalorder %s15, 3
    %p288 = pnand %p286, %p287
    %p289 = pneg %p288
    // Predicated region
    $region53: #{tpu_custom_call.1} parent=5 // pred_check
      _
    $region54: #{tpu_custom_call.1} parent=5 // pred_check_branch
      %291 = sbr.rel (%p288) target = $region56
    $region55: #{tpu_custom_call.1} parent=5 // pred_region
      %s292 = ssub.s32 %s15, 1
      %p293 = scmp.lt.s32.totalorder %s20, 1
      %s294 = scalar_select %p293, %s20, 1
      %s295 = smul.addr %s294, 32
      %s296 = smul.addr %s295, 8
      %s297 = scalar_lea.vmem %s0, %s296
      %p298 = pneg %p41
      %p299 = pneg %p38
      %p300 = pneg %p62
      %p301 = pneg %p59
      %p302 = pneg %p83
      %p303 = pneg %p80
      %p304 = pneg %p104
      %p305 = pneg %p101
      %p306 = pneg %p125
      %p307 = pneg %p122
      %p308 = pneg %p146
      %p309 = pneg %p143
      %p310 = pneg %p167
      %p311 = pneg %p164
      %p312 = pneg %p188
      %p313 = pneg %p185
      %p314 = pneg %p209
      %p315 = pneg %p206
      %p316 = pneg %p235
      %p317 = pneg %p232
      %p318 = scmp.lt.s32.totalorder %s20, 1
      %s319 = scalar_select %p318, %s20, 1
      %s320 = smul.addr %s319, 32
      %s321 = smul.addr %s320, 8
      %s322 = scalar_lea.vmem %s9, %s321
      %p323 = scmp.lt.s32.totalorder %s20, 1
      %s324 = scalar_select %p323, %s20, 1
      %s325 = smul.addr %s324, 32
      %s326 = smul.addr %s325, 8
      %s327 = scalar_lea.vmem %s0, %s326
      %p328 = scmp.lt.s32.totalorder %s20, 1
      %s329 = scalar_select %p328, %s20, 1
      %s330 = smul.addr %s329, 32
      %s331 = smul.addr %s330, 8
      %s332 = scalar_lea.vmem %s9, %s331
      %v333 = vld [vmem:[%s327] sm:$0xff]
      %v334 = vld [vmem:[%s327 + $0x8] sm:$0xff]
      %v335 = vld [vmem:[%s327 + $0x10] sm:$0xff]
      %v336 = vld [vmem:[%s327 + $0x18] sm:$0xff]
      %v337 = vld [vmem:[%s327 + $0x20] sm:$0xff]
      %v338 = vld [vmem:[%s327 + $0x28] sm:$0xff]
      %v339 = vld [vmem:[%s327 + $0x30] sm:$0xff]
      %v340 = vld [vmem:[%s327 + $0x38] sm:$0xff]
      %v341 = vld [vmem:[%s327 + $0x40] sm:$0xff]
      %v342 = vld [vmem:[%s327 + $0x48] sm:$0xff]
      %v343 = vld [vmem:[%s327 + $0x50] sm:$0xff]
      %v344 = vld [vmem:[%s327 + $0x58] sm:$0xff]
      %v345 = vld [vmem:[%s327 + $0x60] sm:$0xff]
      %v346 = vld [vmem:[%s327 + $0x68] sm:$0xff]
      %v347 = vld [vmem:[%s327 + $0x70] sm:$0xff]
      %v348 = vld [vmem:[%s327 + $0x78] sm:$0xff]
      %v349 = vld [vmem:[%s327 + $0x80] sm:$0xff]
      %v350 = vld [vmem:[%s327 + $0x88] sm:$0xff]
      %v351 = vld [vmem:[%s327 + $0x90] sm:$0xff]
      %v352 = vld [vmem:[%s327 + $0x98] sm:$0xff]
      %v353 = vld [vmem:[%s327 + $0xa0] sm:$0xff]
      %v354 = vld [vmem:[%s327 + $0xa8] sm:$0xff]
      %v355 = vld [vmem:[%s327 + $0xb0] sm:$0xff]
      %v356 = vld [vmem:[%s327 + $0xb8] sm:$0xff]
      %v357 = vld [vmem:[%s327 + $0xc0] sm:$0xff]
      %v358 = vld [vmem:[%s327 + $0xc8] sm:$0xff]
      %v359 = vld [vmem:[%s327 + $0xd0] sm:$0xff]
      %v360 = vld [vmem:[%s327 + $0xd8] sm:$0xff]
      %v361 = vld [vmem:[%s327 + $0xe0] sm:$0xff]
      %v362 = vld [vmem:[%s327 + $0xe8] sm:$0xff]
      %v363 = vld [vmem:[%s327 + $0xf0] sm:$0xff]
      %v364 = vld [vmem:[%s327 + $0xf8] sm:$0xff]
      %vm365 = vcmask 31744
      %v366 = vsel %vm365, %v333, 0.0
      %367 = vadd.xlane.f32.xlu0 %v366
      %v368 = vpop.xlane.xlu0 %367
      %v369 = vsel %vm365, %v334, 0.0
      %370 = vadd.xlane.f32.xlu0 %v369
      %v371 = vpop.xlane.xlu0 %370
      %v372 = vsel %vm365, %v335, 0.0
      %373 = vadd.xlane.f32.xlu0 %v372
      %v374 = vpop.xlane.xlu0 %373
      %v375 = vsel %vm365, %v336, 0.0
      %376 = vadd.xlane.f32.xlu0 %v375
      %v377 = vpop.xlane.xlu0 %376
      %v378 = vsel %vm365, %v337, 0.0
      %379 = vadd.xlane.f32.xlu0 %v378
      %v380 = vpop.xlane.xlu0 %379
      %v381 = vsel %vm365, %v338, 0.0
      %382 = vadd.xlane.f32.xlu0 %v381
      %v383 = vpop.xlane.xlu0 %382
      %v384 = vsel %vm365, %v339, 0.0
      %385 = vadd.xlane.f32.xlu0 %v384
      %v386 = vpop.xlane.xlu0 %385
      %v387 = vsel %vm365, %v340, 0.0
      %388 = vadd.xlane.f32.xlu0 %v387
      %v389 = vpop.xlane.xlu0 %388
      %v390 = vsel %vm365, %v341, 0.0
      %391 = vadd.xlane.f32.xlu0 %v390
      %v392 = vpop.xlane.xlu0 %391
      %v393 = vsel %vm365, %v342, 0.0
      %394 = vadd.xlane.f32.xlu0 %v393
      %v395 = vpop.xlane.xlu0 %394
      %v396 = vsel %vm365, %v343, 0.0
      %397 = vadd.xlane.f32.xlu0 %v396
      %v398 = vpop.xlane.xlu0 %397
      %v399 = vsel %vm365, %v344, 0.0
      %400 = vadd.xlane.f32.xlu0 %v399
      %v401 = vpop.xlane.xlu0 %400
      %v402 = vsel %vm365, %v345, 0.0
      %403 = vadd.xlane.f32.xlu0 %v402
      %v404 = vpop.xlane.xlu0 %403
      %v405 = vsel %vm365, %v346, 0.0
      %406 = vadd.xlane.f32.xlu0 %v405
      %v407 = vpop.xlane.xlu0 %406
      %v408 = vsel %vm365, %v347, 0.0
      %409 = vadd.xlane.f32.xlu0 %v408
      %v410 = vpop.xlane.xlu0 %409
      %v411 = vsel %vm365, %v348, 0.0
      %412 = vadd.xlane.f32.xlu0 %v411
      %v413 = vpop.xlane.xlu0 %412
      %v414 = vsel %vm365, %v349, 0.0
      %415 = vadd.xlane.f32.xlu0 %v414
      %v416 = vpop.xlane.xlu0 %415
      %v417 = vsel %vm365, %v350, 0.0
      %418 = vadd.xlane.f32.xlu0 %v417
      %v419 = vpop.xlane.xlu0 %418
      %v420 = vsel %vm365, %v351, 0.0
      %421 = vadd.xlane.f32.xlu0 %v420
      %v422 = vpop.xlane.xlu0 %421
      %v423 = vsel %vm365, %v352, 0.0
      %424 = vadd.xlane.f32.xlu0 %v423
      %v425 = vpop.xlane.xlu0 %424
      %v426 = vsel %vm365, %v353, 0.0
      %427 = vadd.xlane.f32.xlu0 %v426
      %v428 = vpop.xlane.xlu0 %427
      %v429 = vsel %vm365, %v354, 0.0
      %430 = vadd.xlane.f32.xlu0 %v429
      %v431 = vpop.xlane.xlu0 %430
      %v432 = vsel %vm365, %v355, 0.0
      %433 = vadd.xlane.f32.xlu0 %v432
      %v434 = vpop.xlane.xlu0 %433
      %v435 = vsel %vm365, %v356, 0.0
      %436 = vadd.xlane.f32.xlu0 %v435
      %v437 = vpop.xlane.xlu0 %436
      %v438 = vsel %vm365, %v357, 0.0
      %439 = vadd.xlane.f32.xlu0 %v438
      %v440 = vpop.xlane.xlu0 %439
      %v441 = vsel %vm365, %v358, 0.0
      %442 = vadd.xlane.f32.xlu0 %v441
      %v443 = vpop.xlane.xlu0 %442
      %v444 = vsel %vm365, %v359, 0.0
      %445 = vadd.xlane.f32.xlu0 %v444
      %v446 = vpop.xlane.xlu0 %445
      %v447 = vsel %vm365, %v360, 0.0
      %448 = vadd.xlane.f32.xlu0 %v447
      %v449 = vpop.xlane.xlu0 %448
      %v450 = vsel %vm365, %v361, 0.0
      %451 = vadd.xlane.f32.xlu0 %v450
      %v452 = vpop.xlane.xlu0 %451
      %v453 = vsel %vm365, %v362, 0.0
      %454 = vadd.xlane.f32.xlu0 %v453
      %v455 = vpop.xlane.xlu0 %454
      %v456 = vsel %vm365, %v363, 0.0
      %457 = vadd.xlane.f32.xlu0 %v456
      %v458 = vpop.xlane.xlu0 %457
      %v459 = vsel %vm365, %v364, 0.0
      %460 = vadd.xlane.f32.xlu0 %v459
      %v461 = vpop.xlane.xlu0 %460
      %v462 = vrcp.pop 4.0
      %v463 = vmul.f32 %v368, %v462
      %v464 = vmul.f32 %v371, %v462
      %v465 = vmul.f32 %v374, %v462
      %v466 = vmul.f32 %v377, %v462
      %v467 = vmul.f32 %v380, %v462
      %v468 = vmul.f32 %v383, %v462
      %v469 = vmul.f32 %v386, %v462
      %v470 = vmul.f32 %v389, %v462
      %v471 = vmul.f32 %v392, %v462
      %v472 = vmul.f32 %v395, %v462
      %v473 = vmul.f32 %v398, %v462
      %v474 = vmul.f32 %v401, %v462
      %v475 = vmul.f32 %v404, %v462
      %v476 = vmul.f32 %v407, %v462
      %v477 = vmul.f32 %v410, %v462
      %v478 = vmul.f32 %v413, %v462
      %v479 = vmul.f32 %v416, %v462
      %v480 = vmul.f32 %v419, %v462
      %v481 = vmul.f32 %v422, %v462
      %v482 = vmul.f32 %v425, %v462
      %v483 = vmul.f32 %v428, %v462
      %v484 = vmul.f32 %v431, %v462
      %v485 = vmul.f32 %v434, %v462
      %v486 = vmul.f32 %v437, %v462
      %v487 = vmul.f32 %v440, %v462
      %v488 = vmul.f32 %v443, %v462
      %v489 = vmul.f32 %v446, %v462
      %v490 = vmul.f32 %v449, %v462
      %v491 = vmul.f32 %v452, %v462
      %v492 = vmul.f32 %v455, %v462
      %v493 = vmul.f32 %v458, %v462
      %v494 = vmul.f32 %v461, %v462
      %v495 = vsub.f32 %v333, %v463
      %v496 = vsub.f32 %v334, %v464
      %v497 = vsub.f32 %v335, %v465
      %v498 = vsub.f32 %v336, %v466
      %v499 = vsub.f32 %v337, %v467
      %v500 = vsub.f32 %v338, %v468
      %v501 = vsub.f32 %v339, %v469
      %v502 = vsub.f32 %v340, %v470
      %v503 = vsub.f32 %v341, %v471
      %v504 = vsub.f32 %v342, %v472
      %v505 = vsub.f32 %v343, %v473
      %v506 = vsub.f32 %v344, %v474
      %v507 = vsub.f32 %v345, %v475
      %v508 = vsub.f32 %v346, %v476
      %v509 = vsub.f32 %v347, %v477
      %v510 = vsub.f32 %v348, %v478
      %v511 = vsub.f32 %v349, %v479
      %v512 = vsub.f32 %v350, %v480
      %v513 = vsub.f32 %v351, %v481
      %v514 = vsub.f32 %v352, %v482
      %v515 = vsub.f32 %v353, %v483
      %v516 = vsub.f32 %v354, %v484
      %v517 = vsub.f32 %v355, %v485
      %v518 = vsub.f32 %v356, %v486
      %v519 = vsub.f32 %v357, %v487
      %v520 = vsub.f32 %v358, %v488
      %v521 = vsub.f32 %v359, %v489
      %v522 = vsub.f32 %v360, %v490
      %v523 = vsub.f32 %v361, %v491
      %v524 = vsub.f32 %v362, %v492
      %v525 = vsub.f32 %v363, %v493
      %v526 = vsub.f32 %v364, %v494
      %v527 = vmul.f32 %v495, %v495
      %v528 = vmul.f32 %v496, %v496
      %v529 = vmul.f32 %v497, %v497
      %v530 = vmul.f32 %v498, %v498
      %v531 = vmul.f32 %v499, %v499
      %v532 = vmul.f32 %v500, %v500
      %v533 = vmul.f32 %v501, %v501
      %v534 = vmul.f32 %v502, %v502
      %v535 = vmul.f32 %v503, %v503
      %v536 = vmul.f32 %v504, %v504
      %v537 = vmul.f32 %v505, %v505
      %v538 = vmul.f32 %v506, %v506
      %v539 = vmul.f32 %v507, %v507
      %v540 = vmul.f32 %v508, %v508
      %v541 = vmul.f32 %v509, %v509
      %v542 = vmul.f32 %v510, %v510
      %v543 = vmul.f32 %v511, %v511
      %v544 = vmul.f32 %v512, %v512
      %v545 = vmul.f32 %v513, %v513
      %v546 = vmul.f32 %v514, %v514
      %v547 = vmul.f32 %v515, %v515
      %v548 = vmul.f32 %v516, %v516
      %v549 = vmul.f32 %v517, %v517
      %v550 = vmul.f32 %v518, %v518
      %v551 = vmul.f32 %v519, %v519
      %v552 = vmul.f32 %v520, %v520
      %v553 = vmul.f32 %v521, %v521
      %v554 = vmul.f32 %v522, %v522
      %v555 = vmul.f32 %v523, %v523
      %v556 = vmul.f32 %v524, %v524
      %v557 = vmul.f32 %v525, %v525
      %v558 = vmul.f32 %v526, %v526
      %v559 = vsel %vm365, %v527, 0.0
      %560 = vadd.xlane.f32.xlu0 %v559
      %v561 = vpop.xlane.xlu0 %560
      %v562 = vsel %vm365, %v528, 0.0
      %563 = vadd.xlane.f32.xlu0 %v562
      %v564 = vpop.xlane.xlu0 %563
      %v565 = vsel %vm365, %v529, 0.0
      %566 = vadd.xlane.f32.xlu0 %v565
      %v567 = vpop.xlane.xlu0 %566
      %v568 = vsel %vm365, %v530, 0.0
      %569 = vadd.xlane.f32.xlu0 %v568
      %v570 = vpop.xlane.xlu0 %569
      %v571 = vsel %vm365, %v531, 0.0
      %572 = vadd.xlane.f32.xlu0 %v571
      %v573 = vpop.xlane.xlu0 %572
      %v574 = vsel %vm365, %v532, 0.0
      %575 = vadd.xlane.f32.xlu0 %v574
      %v576 = vpop.xlane.xlu0 %575
      %v577 = vsel %vm365, %v533, 0.0
      %578 = vadd.xlane.f32.xlu0 %v577
      %v579 = vpop.xlane.xlu0 %578
      %v580 = vsel %vm365, %v534, 0.0
      %581 = vadd.xlane.f32.xlu0 %v580
      %v582 = vpop.xlane.xlu0 %581
      %v583 = vsel %vm365, %v535, 0.0
      %584 = vadd.xlane.f32.xlu0 %v583
      %v585 = vpop.xlane.xlu0 %584
      %v586 = vsel %vm365, %v536, 0.0
      %587 = vadd.xlane.f32.xlu0 %v586
      %v588 = vpop.xlane.xlu0 %587
      %v589 = vsel %vm365, %v537, 0.0
      %590 = vadd.xlane.f32.xlu0 %v589
      %v591 = vpop.xlane.xlu0 %590
      %v592 = vsel %vm365, %v538, 0.0
      %593 = vadd.xlane.f32.xlu0 %v592
      %v594 = vpop.xlane.xlu0 %593
      %v595 = vsel %vm365, %v539, 0.0
      %596 = vadd.xlane.f32.xlu0 %v595
      %v597 = vpop.xlane.xlu0 %596
      %v598 = vsel %vm365, %v540, 0.0
      %599 = vadd.xlane.f32.xlu0 %v598
      %v600 = vpop.xlane.xlu0 %599
      %v601 = vsel %vm365, %v541, 0.0
      %602 = vadd.xlane.f32.xlu0 %v601
      %v603 = vpop.xlane.xlu0 %602
      %v604 = vsel %vm365, %v542, 0.0
      %605 = vadd.xlane.f32.xlu0 %v604
      %v606 = vpop.xlane.xlu0 %605
      %v607 = vsel %vm365, %v543, 0.0
      %608 = vadd.xlane.f32.xlu0 %v607
      %v609 = vpop.xlane.xlu0 %608
      %v610 = vsel %vm365, %v544, 0.0
      %611 = vadd.xlane.f32.xlu0 %v610
      %v612 = vpop.xlane.xlu0 %611
      %v613 = vsel %vm365, %v545, 0.0
      %614 = vadd.xlane.f32.xlu0 %v613
      %v615 = vpop.xlane.xlu0 %614
      %v616 = vsel %vm365, %v546, 0.0
      %617 = vadd.xlane.f32.xlu0 %v616
      %v618 = vpop.xlane.xlu0 %617
      %v619 = vsel %vm365, %v547, 0.0
      %620 = vadd.xlane.f32.xlu0 %v619
      %v621 = vpop.xlane.xlu0 %620
      %v622 = vsel %vm365, %v548, 0.0
      %623 = vadd.xlane.f32.xlu0 %v622
      %v624 = vpop.xlane.xlu0 %623
      %v625 = vsel %vm365, %v549, 0.0
      %626 = vadd.xlane.f32.xlu0 %v625
      %v627 = vpop.xlane.xlu0 %626
      %v628 = vsel %vm365, %v550, 0.0
      %629 = vadd.xlane.f32.xlu0 %v628
      %v630 = vpop.xlane.xlu0 %629
      %v631 = vsel %vm365, %v551, 0.0
      %632 = vadd.xlane.f32.xlu0 %v631
      %v633 = vpop.xlane.xlu0 %632
      %v634 = vsel %vm365, %v552, 0.0
      %635 = vadd.xlane.f32.xlu0 %v634
      %v636 = vpop.xlane.xlu0 %635
      %v637 = vsel %vm365, %v553, 0.0
      %638 = vadd.xlane.f32.xlu0 %v637
      %v639 = vpop.xlane.xlu0 %638
      %v640 = vsel %vm365, %v554, 0.0
      %641 = vadd.xlane.f32.xlu0 %v640
      %v642 = vpop.xlane.xlu0 %641
      %v643 = vsel %vm365, %v555, 0.0
      %644 = vadd.xlane.f32.xlu0 %v643
      %v645 = vpop.xlane.xlu0 %644
      %v646 = vsel %vm365, %v556, 0.0
      %647 = vadd.xlane.f32.xlu0 %v646
      %v648 = vpop.xlane.xlu0 %647
      %v649 = vsel %vm365, %v557, 0.0
      %650 = vadd.xlane.f32.xlu0 %v649
      %v651 = vpop.xlane.xlu0 %650
      %v652 = vsel %vm365, %v558, 0.0
      %653 = vadd.xlane.f32.xlu0 %v652
      %v654 = vpop.xlane.xlu0 %653
      %v655 = vmul.f32 %v561, %v462
      %v656 = vmul.f32 %v564, %v462
      %v657 = vmul.f32 %v567, %v462
      %v658 = vmul.f32 %v570, %v462
      %v659 = vmul.f32 %v573, %v462
      %v660 = vmul.f32 %v576, %v462
      %v661 = vmul.f32 %v579, %v462
      %v662 = vmul.f32 %v582, %v462
      %v663 = vmul.f32 %v585, %v462
      %v664 = vmul.f32 %v588, %v462
      %v665 = vmul.f32 %v591, %v462
      %v666 = vmul.f32 %v594, %v462
      %v667 = vmul.f32 %v597, %v462
      %v668 = vmul.f32 %v600, %v462
      %v669 = vmul.f32 %v603, %v462
      %v670 = vmul.f32 %v606, %v462
      %v671 = vmul.f32 %v609, %v462
      %v672 = vmul.f32 %v612, %v462
      %v673 = vmul.f32 %v615, %v462
      %v674 = vmul.f32 %v618, %v462
      %v675 = vmul.f32 %v621, %v462
      %v676 = vmul.f32 %v624, %v462
      %v677 = vmul.f32 %v627, %v462
      %v678 = vmul.f32 %v630, %v462
      %v679 = vmul.f32 %v633, %v462
      %v680 = vmul.f32 %v636, %v462
      %v681 = vmul.f32 %v639, %v462
      %v682 = vmul.f32 %v642, %v462
      %v683 = vmul.f32 %v645, %v462
      %v684 = vmul.f32 %v648, %v462
      %v685 = vmul.f32 %v651, %v462
      %v686 = vmul.f32 %v654, %v462
      %v687 = vadd.f32 %v655, 1e-06
      %v688 = vadd.f32 %v656, 1e-06
      %v689 = vadd.f32 %v657, 1e-06
      %v690 = vadd.f32 %v658, 1e-06
      %v691 = vadd.f32 %v659, 1e-06
      %v692 = vadd.f32 %v660, 1e-06
      %v693 = vadd.f32 %v661, 1e-06
      %v694 = vadd.f32 %v662, 1e-06
      %v695 = vadd.f32 %v663, 1e-06
      %v696 = vadd.f32 %v664, 1e-06
      %v697 = vadd.f32 %v665, 1e-06
      %v698 = vadd.f32 %v666, 1e-06
      %v699 = vadd.f32 %v667, 1e-06
      %v700 = vadd.f32 %v668, 1e-06
      %v701 = vadd.f32 %v669, 1e-06
      %v702 = vadd.f32 %v670, 1e-06
      %v703 = vadd.f32 %v671, 1e-06
      %v704 = vadd.f32 %v672, 1e-06
      %v705 = vadd.f32 %v673, 1e-06
      %v706 = vadd.f32 %v674, 1e-06
      %v707 = vadd.f32 %v675, 1e-06
      %v708 = vadd.f32 %v676, 1e-06
      %v709 = vadd.f32 %v677, 1e-06
      %v710 = vadd.f32 %v678, 1e-06
      %v711 = vadd.f32 %v679, 1e-06
      %v712 = vadd.f32 %v680, 1e-06
      %v713 = vadd.f32 %v681, 1e-06
      %v714 = vadd.f32 %v682, 1e-06
      %v715 = vadd.f32 %v683, 1e-06
      %v716 = vadd.f32 %v684, 1e-06
      %v717 = vadd.f32 %v685, 1e-06
      %v718 = vadd.f32 %v686, 1e-06
      %v719 = vrsqrt.pop %v687
      %v720 = vrsqrt.pop %v688
      %v721 = vrsqrt.pop %v689
      %v722 = vrsqrt.pop %v690
      %v723 = vrsqrt.pop %v691
      %v724 = vrsqrt.pop %v692
      %v725 = vrsqrt.pop %v693
      %v726 = vrsqrt.pop %v694
      %v727 = vrsqrt.pop %v695
      %v728 = vrsqrt.pop %v696
      %v729 = vrsqrt.pop %v697
      %v730 = vrsqrt.pop %v698
      %v731 = vrsqrt.pop %v699
      %v732 = vrsqrt.pop %v700
      %v733 = vrsqrt.pop %v701
      %v734 = vrsqrt.pop %v702
      %v735 = vrsqrt.pop %v703
      %v736 = vrsqrt.pop %v704
      %v737 = vrsqrt.pop %v705
      %v738 = vrsqrt.pop %v706
      %v739 = vrsqrt.pop %v707
      %v740 = vrsqrt.pop %v708
      %v741 = vrsqrt.pop %v709
      %v742 = vrsqrt.pop %v710
      %v743 = vrsqrt.pop %v711
      %v744 = vrsqrt.pop %v712
      %v745 = vrsqrt.pop %v713
      %v746 = vrsqrt.pop %v714
      %v747 = vrsqrt.pop %v715
      %v748 = vrsqrt.pop %v716
      %v749 = vrsqrt.pop %v717
      %v750 = vrsqrt.pop %v718
      %v751 = vmul.f32 %v495, %v719
      %v752 = vmul.f32 %v496, %v720
      %v753 = vmul.f32 %v497, %v721
      %v754 = vmul.f32 %v498, %v722
      %v755 = vmul.f32 %v499, %v723
      %v756 = vmul.f32 %v500, %v724
      %v757 = vmul.f32 %v501, %v725
      %v758 = vmul.f32 %v502, %v726
      %v759 = vmul.f32 %v503, %v727
      %v760 = vmul.f32 %v504, %v728
      %v761 = vmul.f32 %v505, %v729
      %v762 = vmul.f32 %v506, %v730
      %v763 = vmul.f32 %v507, %v731
      %v764 = vmul.f32 %v508, %v732
      %v765 = vmul.f32 %v509, %v733
      %v766 = vmul.f32 %v510, %v734
      %v767 = vmul.f32 %v511, %v735
      %v768 = vmul.f32 %v512, %v736
      %v769 = vmul.f32 %v513, %v737
      %v770 = vmul.f32 %v514, %v738
      %v771 = vmul.f32 %v515, %v739
      %v772 = vmul.f32 %v516, %v740
      %v773 = vmul.f32 %v517, %v741
      %v774 = vmul.f32 %v518, %v742
      %v775 = vmul.f32 %v519, %v743
      %v776 = vmul.f32 %v520, %v744
      %v777 = vmul.f32 %v521, %v745
      %v778 = vmul.f32 %v522, %v746
      %v779 = vmul.f32 %v523, %v747
      %v780 = vmul.f32 %v524, %v748
      %v781 = vmul.f32 %v525, %v749
      %v782 = vmul.f32 %v526, %v750
      %v783 = vld [vmem:[%s1] sm:$0x1]
      %v785 = vlaneseq
      %v786 = vshrl.u32 %v785, 7
      %v787 = vsub.s32 0, %v786
      %v788 = vrot.slane %v783, %v787
      %v790 = vmul.f32 %v751, %v788
      %v791 = vmul.f32 %v752, %v788
      %v792 = vmul.f32 %v753, %v788
      %v793 = vmul.f32 %v754, %v788
      %v794 = vmul.f32 %v755, %v788
      %v795 = vmul.f32 %v756, %v788
      %v796 = vmul.f32 %v757, %v788
      %v797 = vmul.f32 %v758, %v788
      %v798 = vmul.f32 %v759, %v788
      %v799 = vmul.f32 %v760, %v788
      %v800 = vmul.f32 %v761, %v788
      %v801 = vmul.f32 %v762, %v788
      %v802 = vmul.f32 %v763, %v788
      %v803 = vmul.f32 %v764, %v788
      %v804 = vmul.f32 %v765, %v788
      %v805 = vmul.f32 %v766, %v788
      %v806 = vmul.f32 %v767, %v788
      %v807 = vmul.f32 %v768, %v788
      %v808 = vmul.f32 %v769, %v788
      %v809 = vmul.f32 %v770, %v788
      %v810 = vmul.f32 %v771, %v788
      %v811 = vmul.f32 %v772, %v788
      %v812 = vmul.f32 %v773, %v788
      %v813 = vmul.f32 %v774, %v788
      %v814 = vmul.f32 %v775, %v788
      %v815 = vmul.f32 %v776, %v788
      %v816 = vmul.f32 %v777, %v788
      %v817 = vmul.f32 %v778, %v788
      %v818 = vmul.f32 %v779, %v788
      %v819 = vmul.f32 %v780, %v788
      %v820 = vmul.f32 %v781, %v788
      %v821 = vmul.f32 %v782, %v788
      %v822 = vld [vmem:[%s2] sm:$0x1]
      %v824 = vlaneseq
      %v825 = vshrl.u32 %v824, 7
      %v826 = vsub.s32 0, %v825
      %v827 = vrot.slane %v822, %v826
      %v829 = vadd.f32 %v790, %v827
      %v830 = vadd.f32 %v791, %v827
      %v831 = vadd.f32 %v792, %v827
      %v832 = vadd.f32 %v793, %v827
      %v833 = vadd.f32 %v794, %v827
      %v834 = vadd.f32 %v795, %v827
      %v835 = vadd.f32 %v796, %v827
      %v836 = vadd.f32 %v797, %v827
      %v837 = vadd.f32 %v798, %v827
      %v838 = vadd.f32 %v799, %v827
      %v839 = vadd.f32 %v800, %v827
      %v840 = vadd.f32 %v801, %v827
      %v841 = vadd.f32 %v802, %v827
      %v842 = vadd.f32 %v803, %v827
      %v843 = vadd.f32 %v804, %v827
      %v844 = vadd.f32 %v805, %v827
      %v845 = vadd.f32 %v806, %v827
      %v846 = vadd.f32 %v807, %v827
      %v847 = vadd.f32 %v808, %v827
      %v848 = vadd.f32 %v809, %v827
      %v849 = vadd.f32 %v810, %v827
      %v850 = vadd.f32 %v811, %v827
      %v851 = vadd.f32 %v812, %v827
      %v852 = vadd.f32 %v813, %v827
      %v853 = vadd.f32 %v814, %v827
      %v854 = vadd.f32 %v815, %v827
      %v855 = vadd.f32 %v816, %v827
      %v856 = vadd.f32 %v817, %v827
      %v857 = vadd.f32 %v818, %v827
      %v858 = vadd.f32 %v819, %v827
      %v859 = vadd.f32 %v820, %v827
      %v860 = vadd.f32 %v821, %v827
      %v861 = vld [vmem:[%s3] sm:$0xf]
      %v862 = vld [vmem:[%s4] sm:$0x1]
      %v864 = vlaneseq
      %v865 = vshrl.u32 %v864, 7
      %v866 = vsub.s32 0, %v865
      %v867 = vrot.slane %v862, %v866
      %v870 = vsel %vm365, %v829, 0
      %v873 = vsel %vm365, %v830, 0
      %v876 = vsel %vm365, %v831, 0
      %v879 = vsel %vm365, %v832, 0
      %v882 = vsel %vm365, %v833, 0
      %v885 = vsel %vm365, %v834, 0
      %v888 = vsel %vm365, %v835, 0
      %v891 = vsel %vm365, %v836, 0
      %v894 = vsel %vm365, %v837, 0
      %v897 = vsel %vm365, %v838, 0
      %v900 = vsel %vm365, %v839, 0
      %v903 = vsel %vm365, %v840, 0
      %v906 = vsel %vm365, %v841, 0
      %v909 = vsel %vm365, %v842, 0
      %v912 = vsel %vm365, %v843, 0
      %v915 = vsel %vm365, %v844, 0
      %v918 = vsel %vm365, %v845, 0
      %v921 = vsel %vm365, %v846, 0
      %v924 = vsel %vm365, %v847, 0
      %v927 = vsel %vm365, %v848, 0
      %v930 = vsel %vm365, %v849, 0
      %v933 = vsel %vm365, %v850, 0
      %v936 = vsel %vm365, %v851, 0
      %v939 = vsel %vm365, %v852, 0
      %v942 = vsel %vm365, %v853, 0
      %v945 = vsel %vm365, %v854, 0
      %v948 = vsel %vm365, %v855, 0
      %v951 = vsel %vm365, %v856, 0
      %v954 = vsel %vm365, %v857, 0
      %v957 = vsel %vm365, %v858, 0
      %v960 = vsel %vm365, %v859, 0
      %v963 = vsel %vm365, %v860, 0
      %vm965 = vcmask 1043456
      %v967 = vsel %vm965, %v861, 0
      %969 = vmatprep.subr.mxu0 0.0
      %970 = vmatpush1.msra.mxu0 %v967
      %971 = vmatprep.subr.mxu0 0.0
      %972 = vmatpush1.msra.mxu0 0.0
      %973 = vmatprep.subr.mxu0 0.0
      %974 = vmatpush1.msra.mxu0 0.0
      %975 = vmatprep.subr.mxu0 0.0
      %976 = vmatpush1.msra.mxu0 0.0
      %977 = vmatprep.subr.mxu0 0.0
      %978 = vmatpush1.msra.mxu0 0.0
      %979 = vmatprep.subr.mxu0 0.0
      %980 = vmatpush1.msra.mxu0 0.0
      %981 = vmatprep.subr.mxu0 0.0
      %982 = vmatpush1.msra.mxu0 0.0
      %983 = vmatprep.subr.mxu0 0.0
      %984 = vmatpush1.msra.mxu0 0.0
      %985 = vmatprep.subr.mxu0 0.0
      %986 = vmatpush1.msra.mxu0 0.0
      %987 = vmatprep.subr.mxu0 0.0
      %988 = vmatpush1.msra.mxu0 0.0
      %989 = vmatprep.subr.mxu0 0.0
      %990 = vmatpush1.msra.mxu0 0.0
      %991 = vmatprep.subr.mxu0 0.0
      %992 = vmatpush1.msra.mxu0 0.0
      %993 = vmatprep.subr.mxu0 0.0
      %994 = vmatpush1.msra.mxu0 0.0
      %995 = vmatprep.subr.mxu0 0.0
      %996 = vmatpush1.msra.mxu0 0.0
      %997 = vmatprep.subr.mxu0 0.0
      %998 = vmatpush1.msra.mxu0 0.0
      %999 = vmatprep.subr.mxu0 0.0
      %1000 = vmatpush1.msra.mxu0 0.0
      %1001 = vmatprep.subr.mxu0 0.0
      %1002 = vmatpush1.msra.mxu0 0.0
      %1003 = vmatprep.subr.mxu0 0.0
      %1004 = vmatpush1.msra.mxu0 0.0
      %1005 = vmatprep.subr.mxu0 0.0
      %1006 = vmatpush1.msra.mxu0 0.0
      %1007 = vmatprep.subr.mxu0 0.0
      %1008 = vmatpush1.msra.mxu0 0.0
      %1009 = vmatprep.subr.mxu0 0.0
      %1010 = vmatpush1.msra.mxu0 0.0
      %1011 = vmatprep.subr.mxu0 0.0
      %1012 = vmatpush1.msra.mxu0 0.0
      %1013 = vmatprep.subr.mxu0 0.0
      %1014 = vmatpush1.msra.mxu0 0.0
      %1015 = vmatprep.subr.mxu0 0.0
      %1016 = vmatpush1.msra.mxu0 0.0
      %1017 = vmatprep.subr.mxu0 0.0
      %1018 = vmatpush1.msra.mxu0 0.0
      %1019 = vmatprep.subr.mxu0 0.0
      %1020 = vmatpush1.msra.mxu0 0.0
      %1021 = vmatprep.subr.mxu0 0.0
      %1022 = vmatpush1.msra.mxu0 0.0
      %1023 = vmatprep.subr.mxu0 0.0
      %1024 = vmatpush1.msra.mxu0 0.0
      %1025 = vmatprep.subr.mxu0 0.0
      %1026 = vmatpush1.msra.mxu0 0.0
      %1027 = vmatprep.subr.mxu0 0.0
      %1028 = vmatpush1.msra.mxu0 0.0
      %1029 = vmatprep.subr.mxu0 0.0
      %1030 = vmatpush1.msra.mxu0 0.0
      %1031 = vmatprep.subr.mxu0 0.0
      %1032 = vmatpush1.msra.mxu0 0.0
      %1033 = vmatprep.mubr.f32.mxu0 0.0
      %1034 = vmatmul.mubr.f32.gmra.mrb[0].mxu0 %v870
      %v1035 = vpop.f32.mrb[0].mxu0
      %v1036 = vadd.f32 %v867, %v1035
      %v1037 = vpop.f32.mrb[0].mxu0
      %1038 = vmatprep.mubr.f32.mxu0 0.0
      %1039 = vmatmul.mubr.f32.gmra.mrb[0].mxu0 %v873
      %v1040 = vpop.f32.mrb[0].mxu0
      %v1041 = vadd.f32 %v867, %v1040
      %v1042 = vpop.f32.mrb[0].mxu0
      %1043 = vmatprep.mubr.f32.mxu0 0.0
      %1044 = vmatmul.mubr.f32.gmra.mrb[0].mxu0 %v876
      %v1045 = vpop.f32.mrb[0].mxu0
      %v1046 = vadd.f32 %v867, %v1045
      %v1047 = vpop.f32.mrb[0].mxu0
      %1048 = vmatprep.mubr.f32.mxu0 0.0
      %1049 = vmatmul.mubr.f32.gmra.mrb[0].mxu0 %v879
      %v1050 = vpop.f32.mrb[0].mxu0
      %v1051 = vadd.f32 %v867, %v1050
      %v1052 = vpop.f32.mrb[0].mxu0
      %1053 = vmatprep.mubr.f32.mxu0 0.0
      %1054 = vmatmul.mubr.f32.gmra.mrb[0].mxu0 %v882
      %v1055 = vpop.f32.mrb[0].mxu0
      %v1056 = vadd.f32 %v867, %v1055
      %v1057 = vpop.f32.mrb[0].mxu0
      %1058 = vmatprep.mubr.f32.mxu0 0.0
      %1059 = vmatmul.mubr.f32.gmra.mrb[0].mxu0 %v885
      %v1060 = vpop.f32.mrb[0].mxu0
      %v1061 = vadd.f32 %v867, %v1060
      %v1062 = vpop.f32.mrb[0].mxu0
      %1063 = vmatprep.mubr.f32.mxu0 0.0
      %1064 = vmatmul.mubr.f32.gmra.mrb[0].mxu0 %v888
      %v1065 = vpop.f32.mrb[0].mxu0
      %v1066 = vadd.f32 %v867, %v1065
      %v1067 = vpop.f32.mrb[0].mxu0
      %1068 = vmatprep.mubr.f32.mxu0 0.0
      %1069 = vmatmul.mubr.f32.gmra.mrb[0].mxu0 %v891
      %v1070 = vpop.f32.mrb[0].mxu0
      %v1071 = vadd.f32 %v867, %v1070
      %v1072 = vpop.f32.mrb[0].mxu0
      %1073 = vmatprep.mubr.f32.mxu0 0.0
      %1074 = vmatmul.mubr.f32.gmra.mrb[0].mxu0 %v894
      %v1075 = vpop.f32.mrb[0].mxu0
      %v1076 = vadd.f32 %v867, %v1075
      %v1077 = vpop.f32.mrb[0].mxu0
      %1078 = vmatprep.mubr.f32.mxu0 0.0
      %1079 = vmatmul.mubr.f32.gmra.mrb[0].mxu0 %v897
      %v1080 = vpop.f32.mrb[0].mxu0
      %v1081 = vadd.f32 %v867, %v1080
      %v1082 = vpop.f32.mrb[0].mxu0
      %1083 = vmatprep.mubr.f32.mxu0 0.0
      %1084 = vmatmul.mubr.f32.gmra.mrb[0].mxu0 %v900
      %v1085 = vpop.f32.mrb[0].mxu0
      %v1086 = vadd.f32 %v867, %v1085
      %v1087 = vpop.f32.mrb[0].mxu0
      %1088 = vmatprep.mubr.f32.mxu0 0.0
      %1089 = vmatmul.mubr.f32.gmra.mrb[0].mxu0 %v903
      %v1090 = vpop.f32.mrb[0].mxu0
      %v1091 = vadd.f32 %v867, %v1090
      %v1092 = vpop.f32.mrb[0].mxu0
      %1093 = vmatprep.mubr.f32.mxu0 0.0
      %1094 = vmatmul.mubr.f32.gmra.mrb[0].mxu0 %v906
      %v1095 = vpop.f32.mrb[0].mxu0
      %v1096 = vadd.f32 %v867, %v1095
      %v1097 = vpop.f32.mrb[0].mxu0
      %1098 = vmatprep.mubr.f32.mxu0 0.0
      %1099 = vmatmul.mubr.f32.gmra.mrb[0].mxu0 %v909
      %v1100 = vpop.f32.mrb[0].mxu0
      %v1101 = vadd.f32 %v867, %v1100
      %v1102 = vpop.f32.mrb[0].mxu0
      %1103 = vmatprep.mubr.f32.mxu0 0.0
      %1104 = vmatmul.mubr.f32.gmra.mrb[0].mxu0 %v912
      %v1105 = vpop.f32.mrb[0].mxu0
      %v1106 = vadd.f32 %v867, %v1105
      %v1107 = vpop.f32.mrb[0].mxu0
      %1108 = vmatprep.mubr.f32.mxu0 0.0
      %1109 = vmatmul.mubr.f32.gmra.mrb[0].mxu0 %v915
      %v1110 = vpop.f32.mrb[0].mxu0
      %v1111 = vadd.f32 %v867, %v1110
      %v1112 = vpop.f32.mrb[0].mxu0
      %1113 = vmatprep.mubr.f32.mxu0 0.0
      %1114 = vmatmul.mubr.f32.gmra.mrb[0].mxu0 %v918
      %v1115 = vpop.f32.mrb[0].mxu0
      %v1116 = vadd.f32 %v867, %v1115
      %v1117 = vpop.f32.mrb[0].mxu0
      %1118 = vmatprep.mubr.f32.mxu0 0.0
      %1119 = vmatmul.mubr.f32.gmra.mrb[0].mxu0 %v921
      %v1120 = vpop.f32.mrb[0].mxu0
      %v1121 = vadd.f32 %v867, %v1120
      %v1122 = vpop.f32.mrb[0].mxu0
      %1123 = vmatprep.mubr.f32.mxu0 0.0
      %1124 = vmatmul.mubr.f32.gmra.mrb[0].mxu0 %v924
      %v1125 = vpop.f32.mrb[0].mxu0
      %v1126 = vadd.f32 %v867, %v1125
      %v1127 = vpop.f32.mrb[0].mxu0
      %1128 = vmatprep.mubr.f32.mxu0 0.0
      %1129 = vmatmul.mubr.f32.gmra.mrb[0].mxu0 %v927
      %v1130 = vpop.f32.mrb[0].mxu0
      %v1131 = vadd.f32 %v867, %v1130
      %v1132 = vpop.f32.mrb[0].mxu0
      %1133 = vmatprep.mubr.f32.mxu0 0.0
      %1134 = vmatmul.mubr.f32.gmra.mrb[0].mxu0 %v930
      %v1135 = vpop.f32.mrb[0].mxu0
      %v1136 = vadd.f32 %v867, %v1135
      %v1137 = vpop.f32.mrb[0].mxu0
      %1138 = vmatprep.mubr.f32.mxu0 0.0
      %1139 = vmatmul.mubr.f32.gmra.mrb[0].mxu0 %v933
      %v1140 = vpop.f32.mrb[0].mxu0
      %v1141 = vadd.f32 %v867, %v1140
      %v1142 = vpop.f32.mrb[0].mxu0
      %1143 = vmatprep.mubr.f32.mxu0 0.0
      %1144 = vmatmul.mubr.f32.gmra.mrb[0].mxu0 %v936
      %v1145 = vpop.f32.mrb[0].mxu0
      %v1146 = vadd.f32 %v867, %v1145
      %v1147 = vpop.f32.mrb[0].mxu0
      %1148 = vmatprep.mubr.f32.mxu0 0.0
      %1149 = vmatmul.mubr.f32.gmra.mrb[0].mxu0 %v939
      %v1150 = vpop.f32.mrb[0].mxu0
      %v1151 = vadd.f32 %v867, %v1150
      %v1152 = vpop.f32.mrb[0].mxu0
      %1153 = vmatprep.mubr.f32.mxu0 0.0
      %1154 = vmatmul.mubr.f32.gmra.mrb[0].mxu0 %v942
      %v1155 = vpop.f32.mrb[0].mxu0
      %v1156 = vadd.f32 %v867, %v1155
      %v1157 = vpop.f32.mrb[0].mxu0
      %1158 = vmatprep.mubr.f32.mxu0 0.0
      %1159 = vmatmul.mubr.f32.gmra.mrb[0].mxu0 %v945
      %v1160 = vpop.f32.mrb[0].mxu0
      %v1161 = vadd.f32 %v867, %v1160
      %v1162 = vpop.f32.mrb[0].mxu0
      %1163 = vmatprep.mubr.f32.mxu0 0.0
      %1164 = vmatmul.mubr.f32.gmra.mrb[0].mxu0 %v948
      %v1165 = vpop.f32.mrb[0].mxu0
      %v1166 = vadd.f32 %v867, %v1165
      %v1167 = vpop.f32.mrb[0].mxu0
      %1168 = vmatprep.mubr.f32.mxu0 0.0
      %1169 = vmatmul.mubr.f32.gmra.mrb[0].mxu0 %v951
      %v1170 = vpop.f32.mrb[0].mxu0
      %v1171 = vadd.f32 %v867, %v1170
      %v1172 = vpop.f32.mrb[0].mxu0
      %1173 = vmatprep.mubr.f32.mxu0 0.0
      %1174 = vmatmul.mubr.f32.gmra.mrb[0].mxu0 %v954
      %v1175 = vpop.f32.mrb[0].mxu0
      %v1176 = vadd.f32 %v867, %v1175
      %v1177 = vpop.f32.mrb[0].mxu0
      %1178 = vmatprep.mubr.f32.mxu0 0.0
      %1179 = vmatmul.mubr.f32.gmra.mrb[0].mxu0 %v957
      %v1180 = vpop.f32.mrb[0].mxu0
      %v1181 = vadd.f32 %v867, %v1180
      %v1182 = vpop.f32.mrb[0].mxu0
      %1183 = vmatprep.mubr.f32.mxu0 0.0
      %1184 = vmatmul.mubr.f32.gmra.mrb[0].mxu0 %v960
      %v1185 = vpop.f32.mrb[0].mxu0
      %v1186 = vadd.f32 %v867, %v1185
      %v1187 = vpop.f32.mrb[0].mxu0
      %1188 = vmatprep.mubr.f32.mxu0 0.0
      %1189 = vmatmul.mubr.f32.gmra.mrb[0].mxu0 %v963
      %v1190 = vpop.f32.mrb[0].mxu0
      %v1191 = vadd.f32 %v867, %v1190
      %v1192 = vpop.f32.mrb[0].mxu0
      %1193 = vdwg.mxu0
      %1194 = vst.msk [vmem:[#allocation2] sm:$0xff] %vm365, 0.0
      %1195 = vst.msk [vmem:[#allocation2 + $0x8] sm:$0xff] %vm365, 0.0
      %vm1196 = vcmask 27648
      %1197 = vst.msk [vmem:[#allocation2 + $0x10] sm:$0xf] %vm1196, 0.0
      %1198 = vst.msk [vmem:[#allocation2 + $0x18] sm:$0xff] %vm365, 0.0
      %1199 = vst.msk [vmem:[#allocation2 + $0x20] sm:$0xff] %vm365, 0.0
      %1200 = vst.msk [vmem:[#allocation2 + $0x28] sm:$0xf] %vm1196, 0.0
      %s1201 = scalar_lea.vmem [#allocation2], 432
      %1202 = vst.msk [vmem:[%s1201] sm:$0xff] %vm365, 0.0
      %1203 = vst.msk [vmem:[%s1201 + $0x8] sm:$0xff] %vm365, 0.0
      %1204 = vst.msk [vmem:[%s1201 + $0x10] sm:$0xf] %vm1196, 0.0
      %1205 = vst.msk [vmem:[%s1201 + $0x18] sm:$0xff] %vm365, 0.0
      %1206 = vst.msk [vmem:[%s1201 + $0x20] sm:$0xff] %vm365, 0.0
      %1207 = vst.msk [vmem:[%s1201 + $0x28] sm:$0xf] %vm1196, 0.0
      %s1208 = scalar_lea.vmem [#allocation2], 48
      %vm1209 = vcmask 25600
      %1210 = vst.msk [vmem:[%s1208] sm:$0x3] %vm1209, 0.0
      %1211 = vst.msk [vmem:[%s1208 + $0x18] sm:$0x3] %vm1209, 0.0
      %1212 = vst.msk [vmem:[%s1208 + $0x30] sm:$0x3] %vm1209, 0.0
      %1213 = vst.msk [vmem:[%s1208 + $0x48] sm:$0x3] %vm1209, 0.0
      %1214 = vst.msk [vmem:[%s1208 + $0x60] sm:$0x3] %vm1209, 0.0
      %1215 = vst.msk [vmem:[%s1208 + $0x78] sm:$0x3] %vm1209, 0.0
      %1216 = vst.msk [vmem:[%s1208 + $0x90] sm:$0x3] %vm1209, 0.0
      %1217 = vst.msk [vmem:[%s1208 + $0xa8] sm:$0x3] %vm1209, 0.0
      %1218 = vst.msk [vmem:[%s1208 + $0xc0] sm:$0x3] %vm1209, 0.0
      %1219 = vst.msk [vmem:[%s1208 + $0xd8] sm:$0x3] %vm1209, 0.0
      %1220 = vst.msk [vmem:[%s1208 + $0xf0] sm:$0x3] %vm1209, 0.0
      %1221 = vst.msk [vmem:[%s1208 + $0x108] sm:$0x3] %vm1209, 0.0
      %1222 = vst.msk [vmem:[%s1208 + $0x120] sm:$0x3] %vm1209, 0.0
      %1223 = vst.msk [vmem:[%s1208 + $0x138] sm:$0x3] %vm1209, 0.0
      %1224 = vst.msk [vmem:[%s1208 + $0x150] sm:$0x3] %vm1209, 0.0
      %1225 = vst.msk [vmem:[%s1208 + $0x168] sm:$0x3] %vm1209, 0.0
      %1226 = vst.msk [vmem:[%s1208 + $0x12] sm:$0x3] %vm1209, 0.0
      %1227 = vst.msk [vmem:[%s1208 + $0x2a] sm:$0x3] %vm1209, 0.0
      %1228 = vst.msk [vmem:[%s1208 + $0x42] sm:$0x3] %vm1209, 0.0
      %1229 = vst.msk [vmem:[%s1208 + $0x5a] sm:$0x3] %vm1209, 0.0
      %1230 = vst.msk [vmem:[%s1208 + $0x72] sm:$0x3] %vm1209, 0.0
      %1231 = vst.msk [vmem:[%s1208 + $0x8a] sm:$0x3] %vm1209, 0.0
      %1232 = vst.msk [vmem:[%s1208 + $0xa2] sm:$0x3] %vm1209, 0.0
      %1233 = vst.msk [vmem:[%s1208 + $0xba] sm:$0x3] %vm1209, 0.0
      %1234 = vst.msk [vmem:[%s1208 + $0xd2] sm:$0x3] %vm1209, 0.0
      %1235 = vst.msk [vmem:[%s1208 + $0xea] sm:$0x3] %vm1209, 0.0
      %1236 = vst.msk [vmem:[%s1208 + $0x102] sm:$0x3] %vm1209, 0.0
      %1237 = vst.msk [vmem:[%s1208 + $0x11a] sm:$0x3] %vm1209, 0.0
      %1238 = vst.msk [vmem:[%s1208 + $0x132] sm:$0x3] %vm1209, 0.0
      %1239 = vst.msk [vmem:[%s1208 + $0x14a] sm:$0x3] %vm1209, 0.0
      %1240 = vst.msk [vmem:[%s1208 + $0x162] sm:$0x3] %vm1209, 0.0
      %1241 = vst.msk [vmem:[%s1208 + $0x17a] sm:$0x3] %vm1209, 0.0
      %1242 = vst.msk [vmem:[%s1208 + $0x2] sm:$0xff] %vm365, %v1036
      %1243 = vst.msk [vmem:[%s1208 + $0xa] sm:$0xff] %vm365, %v1041
      %1244 = vst.msk [vmem:[%s1208 + $0x1a] sm:$0xff] %vm365, %v1046
      %1245 = vst.msk [vmem:[%s1208 + $0x22] sm:$0xff] %vm365, %v1051
      %1246 = vst.msk [vmem:[%s1208 + $0x32] sm:$0xff] %vm365, %v1056
      %1247 = vst.msk [vmem:[%s1208 + $0x3a] sm:$0xff] %vm365, %v1061
      %1248 = vst.msk [vmem:[%s1208 + $0x4a] sm:$0xff] %vm365, %v1066
      %1249 = vst.msk [vmem:[%s1208 + $0x52] sm:$0xff] %vm365, %v1071
      %1250 = vst.msk [vmem:[%s1208 + $0x62] sm:$0xff] %vm365, %v1076
      %1251 = vst.msk [vmem:[%s1208 + $0x6a] sm:$0xff] %vm365, %v1081
      %1252 = vst.msk [vmem:[%s1208 + $0x7a] sm:$0xff] %vm365, %v1086
      %1253 = vst.msk [vmem:[%s1208 + $0x82] sm:$0xff] %vm365, %v1091
      %1254 = vst.msk [vmem:[%s1208 + $0x92] sm:$0xff] %vm365, %v1096
      %1255 = vst.msk [vmem:[%s1208 + $0x9a] sm:$0xff] %vm365, %v1101
      %1256 = vst.msk [vmem:[%s1208 + $0xaa] sm:$0xff] %vm365, %v1106
      %1257 = vst.msk [vmem:[%s1208 + $0xb2] sm:$0xff] %vm365, %v1111
      %1258 = vst.msk [vmem:[%s1208 + $0xc2] sm:$0xff] %vm365, %v1116
      %1259 = vst.msk [vmem:[%s1208 + $0xca] sm:$0xff] %vm365, %v1121
      %1260 = vst.msk [vmem:[%s1208 + $0xda] sm:$0xff] %vm365, %v1126
      %1261 = vst.msk [vmem:[%s1208 + $0xe2] sm:$0xff] %vm365, %v1131
      %1262 = vst.msk [vmem:[%s1208 + $0xf2] sm:$0xff] %vm365, %v1136
      %1263 = vst.msk [vmem:[%s1208 + $0xfa] sm:$0xff] %vm365, %v1141
      %1264 = vst.msk [vmem:[%s1208 + $0x10a] sm:$0xff] %vm365, %v1146
      %1265 = vst.msk [vmem:[%s1208 + $0x112] sm:$0xff] %vm365, %v1151
      %1266 = vst.msk [vmem:[%s1208 + $0x122] sm:$0xff] %vm365, %v1156
      %1267 = vst.msk [vmem:[%s1208 + $0x12a] sm:$0xff] %vm365, %v1161
      %1268 = vst.msk [vmem:[%s1208 + $0x13a] sm:$0xff] %vm365, %v1166
      %1269 = vst.msk [vmem:[%s1208 + $0x142] sm:$0xff] %vm365, %v1171
      %1270 = vst.msk [vmem:[%s1208 + $0x152] sm:$0xff] %vm365, %v1176
      %1271 = vst.msk [vmem:[%s1208 + $0x15a] sm:$0xff] %vm365, %v1181
      %1272 = vst.msk [vmem:[%s1208 + $0x16a] sm:$0xff] %vm365, %v1186
      %1273 = vst.msk [vmem:[%s1208 + $0x172] sm:$0xff] %vm365, %v1191
      %v1274 = vld [vmem:[%s5] sm:$0xff]
      %v1275 = vld [vmem:[%s5 + $0x8] sm:$0xff]
      %v1276 = vld [vmem:[%s5 + $0x10] sm:$0xff]
      %v1277 = vld [vmem:[%s5 + $0x18] sm:$0x1]
      %v1278 = vld [vmem:[#allocation2] sm:$0xff]
      %v1279 = vld [vmem:[#allocation2 + $0x8] sm:$0xff]
      %v1280 = vld [vmem:[#allocation2 + $0x18] sm:$0xff]
      %v1281 = vld [vmem:[#allocation2 + $0x20] sm:$0xff]
      %v1282 = vld [vmem:[#allocation2 + $0x30] sm:$0xff]
      %v1283 = vld [vmem:[#allocation2 + $0x38] sm:$0xff]
      %v1284 = vld [vmem:[#allocation2 + $0x48] sm:$0xff]
      %v1285 = vld [vmem:[#allocation2 + $0x50] sm:$0xff]
      %v1286 = vld [vmem:[#allocation2 + $0x60] sm:$0xff]
      %v1287 = vld [vmem:[#allocation2 + $0x68] sm:$0xff]
      %v1288 = vld [vmem:[#allocation2 + $0x78] sm:$0xff]
      %v1289 = vld [vmem:[#allocation2 + $0x80] sm:$0xff]
      %v1290 = vld [vmem:[#allocation2 + $0x90] sm:$0xff]
      %v1291 = vld [vmem:[#allocation2 + $0x98] sm:$0xff]
      %v1292 = vld [vmem:[#allocation2 + $0xa8] sm:$0xff]
      %v1293 = vld [vmem:[#allocation2 + $0xb0] sm:$0xff]
      %v1294 = vld [vmem:[#allocation2 + $0xc0] sm:$0xff]
      %v1295 = vld [vmem:[#allocation2 + $0xc8] sm:$0xff]
      %v1296 = vld [vmem:[#allocation2 + $0xd8] sm:$0xff]
      %v1297 = vld [vmem:[#allocation2 + $0xe0] sm:$0xff]
      %v1298 = vld [vmem:[#allocation2 + $0xf0] sm:$0xff]
      %v1299 = vld [vmem:[#allocation2 + $0xf8] sm:$0xff]
      %v1300 = vld [vmem:[#allocation2 + $0x108] sm:$0xff]
      %v1301 = vld [vmem:[#allocation2 + $0x110] sm:$0xff]
      %v1302 = vld [vmem:[#allocation2 + $0x120] sm:$0xff]
      %v1303 = vld [vmem:[#allocation2 + $0x128] sm:$0xff]
      %v1304 = vld [vmem:[#allocation2 + $0x138] sm:$0xff]
      %v1305 = vld [vmem:[#allocation2 + $0x140] sm:$0xff]
      %v1306 = vld [vmem:[#allocation2 + $0x150] sm:$0xff]
      %v1307 = vld [vmem:[#allocation2 + $0x158] sm:$0xff]
      %v1308 = vld [vmem:[#allocation2 + $0x168] sm:$0xff]
      %v1309 = vld [vmem:[#allocation2 + $0x170] sm:$0xff]
      %v1310 = vlaneseq
      %v1311 = vshrl.u32 %v1310, 7
      %v1312 = vsub.s32 0, %v1311
      %v1313 = vrot.slane %v1274, %v1312
      %v1314 = vmul.f32 %v1278, %v1313
      %v1315 = vmul.f32 %v1279, %v1313
      %v1316 = vmul.f32 %v1280, %v1313
      %v1317 = vmul.f32 %v1281, %v1313
      %v1318 = vmul.f32 %v1282, %v1313
      %v1319 = vmul.f32 %v1283, %v1313
      %v1320 = vmul.f32 %v1284, %v1313
      %v1321 = vmul.f32 %v1285, %v1313
      %v1322 = vmul.f32 %v1286, %v1313
      %v1323 = vmul.f32 %v1287, %v1313
      %v1324 = vmul.f32 %v1288, %v1313
      %v1325 = vmul.f32 %v1289, %v1313
      %v1326 = vmul.f32 %v1290, %v1313
      %v1327 = vmul.f32 %v1291, %v1313
      %v1328 = vmul.f32 %v1292, %v1313
      %v1329 = vmul.f32 %v1293, %v1313
      %v1330 = vmul.f32 %v1294, %v1313
      %v1331 = vmul.f32 %v1295, %v1313
      %v1332 = vmul.f32 %v1296, %v1313
      %v1333 = vmul.f32 %v1297, %v1313
      %v1334 = vmul.f32 %v1298, %v1313
      %v1335 = vmul.f32 %v1299, %v1313
      %v1336 = vmul.f32 %v1300, %v1313
      %v1337 = vmul.f32 %v1301, %v1313
      %v1338 = vmul.f32 %v1302, %v1313
      %v1339 = vmul.f32 %v1303, %v1313
      %v1340 = vmul.f32 %v1304, %v1313
      %v1341 = vmul.f32 %v1305, %v1313
      %v1342 = vmul.f32 %v1306, %v1313
      %v1343 = vmul.f32 %v1307, %v1313
      %v1344 = vmul.f32 %v1308, %v1313
      %v1345 = vmul.f32 %v1309, %v1313
      %v1346 = vadd.f32 %v1314, 0.0
      %v1347 = vadd.f32 %v1315, 0.0
      %v1348 = vadd.f32 %v1316, 0.0
      %v1349 = vadd.f32 %v1317, 0.0
      %v1350 = vadd.f32 %v1318, 0.0
      %v1351 = vadd.f32 %v1319, 0.0
      %v1352 = vadd.f32 %v1320, 0.0
      %v1353 = vadd.f32 %v1321, 0.0
      %v1354 = vadd.f32 %v1322, 0.0
      %v1355 = vadd.f32 %v1323, 0.0
      %v1356 = vadd.f32 %v1324, 0.0
      %v1357 = vadd.f32 %v1325, 0.0
      %v1358 = vadd.f32 %v1326, 0.0
      %v1359 = vadd.f32 %v1327, 0.0
      %v1360 = vadd.f32 %v1328, 0.0
      %v1361 = vadd.f32 %v1329, 0.0
      %v1362 = vadd.f32 %v1330, 0.0
      %v1363 = vadd.f32 %v1331, 0.0
      %v1364 = vadd.f32 %v1332, 0.0
      %v1365 = vadd.f32 %v1333, 0.0
      %v1366 = vadd.f32 %v1334, 0.0
      %v1367 = vadd.f32 %v1335, 0.0
      %v1368 = vadd.f32 %v1336, 0.0
      %v1369 = vadd.f32 %v1337, 0.0
      %v1370 = vadd.f32 %v1338, 0.0
      %v1371 = vadd.f32 %v1339, 0.0
      %v1372 = vadd.f32 %v1340, 0.0
      %v1373 = vadd.f32 %v1341, 0.0
      %v1374 = vadd.f32 %v1342, 0.0
      %v1375 = vadd.f32 %v1343, 0.0
      %v1376 = vadd.f32 %v1344, 0.0
      %v1377 = vadd.f32 %v1345, 0.0
      %v1378 = vld [vmem:[#allocation2 + $0x1] sm:$0xff]
      %v1379 = vld [vmem:[#allocation2 + $0x9] sm:$0xff]
      %v1380 = vld [vmem:[#allocation2 + $0x19] sm:$0xff]
      %v1381 = vld [vmem:[#allocation2 + $0x21] sm:$0xff]
      %v1382 = vld [vmem:[#allocation2 + $0x31] sm:$0xff]
      %v1383 = vld [vmem:[#allocation2 + $0x39] sm:$0xff]
      %v1384 = vld [vmem:[#allocation2 + $0x49] sm:$0xff]
      %v1385 = vld [vmem:[#allocation2 + $0x51] sm:$0xff]
      %v1386 = vld [vmem:[#allocation2 + $0x61] sm:$0xff]
      %v1387 = vld [vmem:[#allocation2 + $0x69] sm:$0xff]
      %v1388 = vld [vmem:[#allocation2 + $0x79] sm:$0xff]
      %v1389 = vld [vmem:[#allocation2 + $0x81] sm:$0xff]
      %v1390 = vld [vmem:[#allocation2 + $0x91] sm:$0xff]
      %v1391 = vld [vmem:[#allocation2 + $0x99] sm:$0xff]
      %v1392 = vld [vmem:[#allocation2 + $0xa9] sm:$0xff]
      %v1393 = vld [vmem:[#allocation2 + $0xb1] sm:$0xff]
      %v1394 = vld [vmem:[#allocation2 + $0xc1] sm:$0xff]
      %v1395 = vld [vmem:[#allocation2 + $0xc9] sm:$0xff]
      %v1396 = vld [vmem:[#allocation2 + $0xd9] sm:$0xff]
      %v1397 = vld [vmem:[#allocation2 + $0xe1] sm:$0xff]
      %v1398 = vld [vmem:[#allocation2 + $0xf1] sm:$0xff]
      %v1399 = vld [vmem:[#allocation2 + $0xf9] sm:$0xff]
      %v1400 = vld [vmem:[#allocation2 + $0x109] sm:$0xff]
      %v1401 = vld [vmem:[#allocation2 + $0x111] sm:$0xff]
      %v1402 = vld [vmem:[#allocation2 + $0x121] sm:$0xff]
      %v1403 = vld [vmem:[#allocation2 + $0x129] sm:$0xff]
      %v1404 = vld [vmem:[#allocation2 + $0x139] sm:$0xff]
      %v1405 = vld [vmem:[#allocation2 + $0x141] sm:$0xff]
      %v1406 = vld [vmem:[#allocation2 + $0x151] sm:$0xff]
      %v1407 = vld [vmem:[#allocation2 + $0x159] sm:$0xff]
      %v1408 = vld [vmem:[#allocation2 + $0x169] sm:$0xff]
      %v1409 = vld [vmem:[#allocation2 + $0x171] sm:$0xff]
      %v1410 = vlaneseq
      %v1411 = vshrl.u32 %v1410, 7
      %v1412 = vsub.s32 1, %v1411
      %v1413 = vrot.slane %v1274, %v1412
      %v1414 = vmul.f32 %v1378, %v1413
      %v1415 = vmul.f32 %v1379, %v1413
      %v1416 = vmul.f32 %v1380, %v1413
      %v1417 = vmul.f32 %v1381, %v1413
      %v1418 = vmul.f32 %v1382, %v1413
      %v1419 = vmul.f32 %v1383, %v1413
      %v1420 = vmul.f32 %v1384, %v1413
      %v1421 = vmul.f32 %v1385, %v1413
      %v1422 = vmul.f32 %v1386, %v1413
      %v1423 = vmul.f32 %v1387, %v1413
      %v1424 = vmul.f32 %v1388, %v1413
      %v1425 = vmul.f32 %v1389, %v1413
      %v1426 = vmul.f32 %v1390, %v1413
      %v1427 = vmul.f32 %v1391, %v1413
      %v1428 = vmul.f32 %v1392, %v1413
      %v1429 = vmul.f32 %v1393, %v1413
      %v1430 = vmul.f32 %v1394, %v1413
      %v1431 = vmul.f32 %v1395, %v1413
      %v1432 = vmul.f32 %v1396, %v1413
      %v1433 = vmul.f32 %v1397, %v1413
      %v1434 = vmul.f32 %v1398, %v1413
      %v1435 = vmul.f32 %v1399, %v1413
      %v1436 = vmul.f32 %v1400, %v1413
      %v1437 = vmul.f32 %v1401, %v1413
      %v1438 = vmul.f32 %v1402, %v1413
      %v1439 = vmul.f32 %v1403, %v1413
      %v1440 = vmul.f32 %v1404, %v1413
      %v1441 = vmul.f32 %v1405, %v1413
      %v1442 = vmul.f32 %v1406, %v1413
      %v1443 = vmul.f32 %v1407, %v1413
      %v1444 = vmul.f32 %v1408, %v1413
      %v1445 = vmul.f32 %v1409, %v1413
      %v1446 = vadd.f32 %v1346, %v1414
      %v1447 = vadd.f32 %v1347, %v1415
      %v1448 = vadd.f32 %v1348, %v1416
      %v1449 = vadd.f32 %v1349, %v1417
      %v1450 = vadd.f32 %v1350, %v1418
      %v1451 = vadd.f32 %v1351, %v1419
      %v1452 = vadd.f32 %v1352, %v1420
      %v1453 = vadd.f32 %v1353, %v1421
      %v1454 = vadd.f32 %v1354, %v1422
      %v1455 = vadd.f32 %v1355, %v1423
      %v1456 = vadd.f32 %v1356, %v1424
      %v1457 = vadd.f32 %v1357, %v1425
      %v1458 = vadd.f32 %v1358, %v1426
      %v1459 = vadd.f32 %v1359, %v1427
      %v1460 = vadd.f32 %v1360, %v1428
      %v1461 = vadd.f32 %v1361, %v1429
      %v1462 = vadd.f32 %v1362, %v1430
      %v1463 = vadd.f32 %v1363, %v1431
      %v1464 = vadd.f32 %v1364, %v1432
      %v1465 = vadd.f32 %v1365, %v1433
      %v1466 = vadd.f32 %v1366, %v1434
      %v1467 = vadd.f32 %v1367, %v1435
      %v1468 = vadd.f32 %v1368, %v1436
      %v1469 = vadd.f32 %v1369, %v1437
      %v1470 = vadd.f32 %v1370, %v1438
      %v1471 = vadd.f32 %v1371, %v1439
      %v1472 = vadd.f32 %v1372, %v1440
      %v1473 = vadd.f32 %v1373, %v1441
      %v1474 = vadd.f32 %v1374, %v1442
      %v1475 = vadd.f32 %v1375, %v1443
      %v1476 = vadd.f32 %v1376, %v1444
      %v1477 = vadd.f32 %v1377, %v1445
      %v1478 = vld [vmem:[#allocation2 + $0x2] sm:$0xff]
      %v1479 = vld [vmem:[#allocation2 + $0xa] sm:$0xff]
      %v1480 = vld [vmem:[#allocation2 + $0x1a] sm:$0xff]
      %v1481 = vld [vmem:[#allocation2 + $0x22] sm:$0xff]
      %v1482 = vld [vmem:[#allocation2 + $0x32] sm:$0xff]
      %v1483 = vld [vmem:[#allocation2 + $0x3a] sm:$0xff]
      %v1484 = vld [vmem:[#allocation2 + $0x4a] sm:$0xff]
      %v1485 = vld [vmem:[#allocation2 + $0x52] sm:$0xff]
      %v1486 = vld [vmem:[#allocation2 + $0x62] sm:$0xff]
      %v1487 = vld [vmem:[#allocation2 + $0x6a] sm:$0xff]
      %v1488 = vld [vmem:[#allocation2 + $0x7a] sm:$0xff]
      %v1489 = vld [vmem:[#allocation2 + $0x82] sm:$0xff]
      %v1490 = vld [vmem:[#allocation2 + $0x92] sm:$0xff]
      %v1491 = vld [vmem:[#allocation2 + $0x9a] sm:$0xff]
      %v1492 = vld [vmem:[#allocation2 + $0xaa] sm:$0xff]
      %v1493 = vld [vmem:[#allocation2 + $0xb2] sm:$0xff]
      %v1494 = vld [vmem:[#allocation2 + $0xc2] sm:$0xff]
      %v1495 = vld [vmem:[#allocation2 + $0xca] sm:$0xff]
      %v1496 = vld [vmem:[#allocation2 + $0xda] sm:$0xff]
      %v1497 = vld [vmem:[#allocation2 + $0xe2] sm:$0xff]
      %v1498 = vld [vmem:[#allocation2 + $0xf2] sm:$0xff]
      %v1499 = vld [vmem:[#allocation2 + $0xfa] sm:$0xff]
      %v1500 = vld [vmem:[#allocation2 + $0x10a] sm:$0xff]
      %v1501 = vld [vmem:[#allocation2 + $0x112] sm:$0xff]
      %v1502 = vld [vmem:[#allocation2 + $0x122] sm:$0xff]
      %v1503 = vld [vmem:[#allocation2 + $0x12a] sm:$0xff]
      %v1504 = vld [vmem:[#allocation2 + $0x13a] sm:$0xff]
      %v1505 = vld [vmem:[#allocation2 + $0x142] sm:$0xff]
      %v1506 = vld [vmem:[#allocation2 + $0x152] sm:$0xff]
      %v1507 = vld [vmem:[#allocation2 + $0x15a] sm:$0xff]
      %v1508 = vld [vmem:[#allocation2 + $0x16a] sm:$0xff]
      %v1509 = vld [vmem:[#allocation2 + $0x172] sm:$0xff]
      %v1510 = vlaneseq
      %v1511 = vshrl.u32 %v1510, 7
      %v1512 = vsub.s32 2, %v1511
      %v1513 = vrot.slane %v1274, %v1512
      %v1514 = vmul.f32 %v1478, %v1513
      %v1515 = vmul.f32 %v1479, %v1513
      %v1516 = vmul.f32 %v1480, %v1513
      %v1517 = vmul.f32 %v1481, %v1513
      %v1518 = vmul.f32 %v1482, %v1513
      %v1519 = vmul.f32 %v1483, %v1513
      %v1520 = vmul.f32 %v1484, %v1513
      %v1521 = vmul.f32 %v1485, %v1513
      %v1522 = vmul.f32 %v1486, %v1513
      %v1523 = vmul.f32 %v1487, %v1513
      %v1524 = vmul.f32 %v1488, %v1513
      %v1525 = vmul.f32 %v1489, %v1513
      %v1526 = vmul.f32 %v1490, %v1513
      %v1527 = vmul.f32 %v1491, %v1513
      %v1528 = vmul.f32 %v1492, %v1513
      %v1529 = vmul.f32 %v1493, %v1513
      %v1530 = vmul.f32 %v1494, %v1513
      %v1531 = vmul.f32 %v1495, %v1513
      %v1532 = vmul.f32 %v1496, %v1513
      %v1533 = vmul.f32 %v1497, %v1513
      %v1534 = vmul.f32 %v1498, %v1513
      %v1535 = vmul.f32 %v1499, %v1513
      %v1536 = vmul.f32 %v1500, %v1513
      %v1537 = vmul.f32 %v1501, %v1513
      %v1538 = vmul.f32 %v1502, %v1513
      %v1539 = vmul.f32 %v1503, %v1513
      %v1540 = vmul.f32 %v1504, %v1513
      %v1541 = vmul.f32 %v1505, %v1513
      %v1542 = vmul.f32 %v1506, %v1513
      %v1543 = vmul.f32 %v1507, %v1513
      %v1544 = vmul.f32 %v1508, %v1513
      %v1545 = vmul.f32 %v1509, %v1513
      %v1546 = vadd.f32 %v1446, %v1514
      %v1547 = vadd.f32 %v1447, %v1515
      %v1548 = vadd.f32 %v1448, %v1516
      %v1549 = vadd.f32 %v1449, %v1517
      %v1550 = vadd.f32 %v1450, %v1518
      %v1551 = vadd.f32 %v1451, %v1519
      %v1552 = vadd.f32 %v1452, %v1520
      %v1553 = vadd.f32 %v1453, %v1521
      %v1554 = vadd.f32 %v1454, %v1522
      %v1555 = vadd.f32 %v1455, %v1523
      %v1556 = vadd.f32 %v1456, %v1524
      %v1557 = vadd.f32 %v1457, %v1525
      %v1558 = vadd.f32 %v1458, %v1526
      %v1559 = vadd.f32 %v1459, %v1527
      %v1560 = vadd.f32 %v1460, %v1528
      %v1561 = vadd.f32 %v1461, %v1529
      %v1562 = vadd.f32 %v1462, %v1530
      %v1563 = vadd.f32 %v1463, %v1531
      %v1564 = vadd.f32 %v1464, %v1532
      %v1565 = vadd.f32 %v1465, %v1533
      %v1566 = vadd.f32 %v1466, %v1534
      %v1567 = vadd.f32 %v1467, %v1535
      %v1568 = vadd.f32 %v1468, %v1536
      %v1569 = vadd.f32 %v1469, %v1537
      %v1570 = vadd.f32 %v1470, %v1538
      %v1571 = vadd.f32 %v1471, %v1539
      %v1572 = vadd.f32 %v1472, %v1540
      %v1573 = vadd.f32 %v1473, %v1541
      %v1574 = vadd.f32 %v1474, %v1542
      %v1575 = vadd.f32 %v1475, %v1543
      %v1576 = vadd.f32 %v1476, %v1544
      %v1577 = vadd.f32 %v1477, %v1545
      %v1578 = vld [vmem:[#allocation2 + $0x3] sm:$0xff]
      %v1579 = vld [vmem:[#allocation2 + $0xb] sm:$0xff]
      %v1580 = vld [vmem:[#allocation2 + $0x1b] sm:$0xff]
      %v1581 = vld [vmem:[#allocation2 + $0x23] sm:$0xff]
      %v1582 = vld [vmem:[#allocation2 + $0x33] sm:$0xff]
      %v1583 = vld [vmem:[#allocation2 + $0x3b] sm:$0xff]
      %v1584 = vld [vmem:[#allocation2 + $0x4b] sm:$0xff]
      %v1585 = vld [vmem:[#allocation2 + $0x53] sm:$0xff]
      %v1586 = vld [vmem:[#allocation2 + $0x63] sm:$0xff]
      %v1587 = vld [vmem:[#allocation2 + $0x6b] sm:$0xff]
      %v1588 = vld [vmem:[#allocation2 + $0x7b] sm:$0xff]
      %v1589 = vld [vmem:[#allocation2 + $0x83] sm:$0xff]
      %v1590 = vld [vmem:[#allocation2 + $0x93] sm:$0xff]
      %v1591 = vld [vmem:[#allocation2 + $0x9b] sm:$0xff]
      %v1592 = vld [vmem:[#allocation2 + $0xab] sm:$0xff]
      %v1593 = vld [vmem:[#allocation2 + $0xb3] sm:$0xff]
      %v1594 = vld [vmem:[#allocation2 + $0xc3] sm:$0xff]
      %v1595 = vld [vmem:[#allocation2 + $0xcb] sm:$0xff]
      %v1596 = vld [vmem:[#allocation2 + $0xdb] sm:$0xff]
      %v1597 = vld [vmem:[#allocation2 + $0xe3] sm:$0xff]
      %v1598 = vld [vmem:[#allocation2 + $0xf3] sm:$0xff]
      %v1599 = vld [vmem:[#allocation2 + $0xfb] sm:$0xff]
      %v1600 = vld [vmem:[#allocation2 + $0x10b] sm:$0xff]
      %v1601 = vld [vmem:[#allocation2 + $0x113] sm:$0xff]
      %v1602 = vld [vmem:[#allocation2 + $0x123] sm:$0xff]
      %v1603 = vld [vmem:[#allocation2 + $0x12b] sm:$0xff]
      %v1604 = vld [vmem:[#allocation2 + $0x13b] sm:$0xff]
      %v1605 = vld [vmem:[#allocation2 + $0x143] sm:$0xff]
      %v1606 = vld [vmem:[#allocation2 + $0x153] sm:$0xff]
      %v1607 = vld [vmem:[#allocation2 + $0x15b] sm:$0xff]
      %v1608 = vld [vmem:[#allocation2 + $0x16b] sm:$0xff]
      %v1609 = vld [vmem:[#allocation2 + $0x173] sm:$0xff]
      %v1610 = vlaneseq
      %v1611 = vshrl.u32 %v1610, 7
      %v1612 = vsub.s32 3, %v1611
      %v1613 = vrot.slane %v1274, %v1612
      %v1614 = vmul.f32 %v1578, %v1613
      %v1615 = vmul.f32 %v1579, %v1613
      %v1616 = vmul.f32 %v1580, %v1613
      %v1617 = vmul.f32 %v1581, %v1613
      %v1618 = vmul.f32 %v1582, %v1613
      %v1619 = vmul.f32 %v1583, %v1613
      %v1620 = vmul.f32 %v1584, %v1613
      %v1621 = vmul.f32 %v1585, %v1613
      %v1622 = vmul.f32 %v1586, %v1613
      %v1623 = vmul.f32 %v1587, %v1613
      %v1624 = vmul.f32 %v1588, %v1613
      %v1625 = vmul.f32 %v1589, %v1613
      %v1626 = vmul.f32 %v1590, %v1613
      %v1627 = vmul.f32 %v1591, %v1613
      %v1628 = vmul.f32 %v1592, %v1613
      %v1629 = vmul.f32 %v1593, %v1613
      %v1630 = vmul.f32 %v1594, %v1613
      %v1631 = vmul.f32 %v1595, %v1613
      %v1632 = vmul.f32 %v1596, %v1613
      %v1633 = vmul.f32 %v1597, %v1613
      %v1634 = vmul.f32 %v1598, %v1613
      %v1635 = vmul.f32 %v1599, %v1613
      %v1636 = vmul.f32 %v1600, %v1613
      %v1637 = vmul.f32 %v1601, %v1613
      %v1638 = vmul.f32 %v1602, %v1613
      %v1639 = vmul.f32 %v1603, %v1613
      %v1640 = vmul.f32 %v1604, %v1613
      %v1641 = vmul.f32 %v1605, %v1613
      %v1642 = vmul.f32 %v1606, %v1613
      %v1643 = vmul.f32 %v1607, %v1613
      %v1644 = vmul.f32 %v1608, %v1613
      %v1645 = vmul.f32 %v1609, %v1613
      %v1646 = vadd.f32 %v1546, %v1614
      %v1647 = vadd.f32 %v1547, %v1615
      %v1648 = vadd.f32 %v1548, %v1616
      %v1649 = vadd.f32 %v1549, %v1617
      %v1650 = vadd.f32 %v1550, %v1618
      %v1651 = vadd.f32 %v1551, %v1619
      %v1652 = vadd.f32 %v1552, %v1620
      %v1653 = vadd.f32 %v1553, %v1621
      %v1654 = vadd.f32 %v1554, %v1622
      %v1655 = vadd.f32 %v1555, %v1623
      %v1656 = vadd.f32 %v1556, %v1624
      %v1657 = vadd.f32 %v1557, %v1625
      %v1658 = vadd.f32 %v1558, %v1626
      %v1659 = vadd.f32 %v1559, %v1627
      %v1660 = vadd.f32 %v1560, %v1628
      %v1661 = vadd.f32 %v1561, %v1629
      %v1662 = vadd.f32 %v1562, %v1630
      %v1663 = vadd.f32 %v1563, %v1631
      %v1664 = vadd.f32 %v1564, %v1632
      %v1665 = vadd.f32 %v1565, %v1633
      %v1666 = vadd.f32 %v1566, %v1634
      %v1667 = vadd.f32 %v1567, %v1635
      %v1668 = vadd.f32 %v1568, %v1636
      %v1669 = vadd.f32 %v1569, %v1637
      %v1670 = vadd.f32 %v1570, %v1638
      %v1671 = vadd.f32 %v1571, %v1639
      %v1672 = vadd.f32 %v1572, %v1640
      %v1673 = vadd.f32 %v1573, %v1641
      %v1674 = vadd.f32 %v1574, %v1642
      %v1675 = vadd.f32 %v1575, %v1643
      %v1676 = vadd.f32 %v1576, %v1644
      %v1677 = vadd.f32 %v1577, %v1645
      %v1678 = vld [vmem:[#allocation2 + $0x4] sm:$0xff]
      %v1679 = vld [vmem:[#allocation2 + $0xc] sm:$0xff]
      %v1680 = vld [vmem:[#allocation2 + $0x1c] sm:$0xff]
      %v1681 = vld [vmem:[#allocation2 + $0x24] sm:$0xff]
      %v1682 = vld [vmem:[#allocation2 + $0x34] sm:$0xff]
      %v1683 = vld [vmem:[#allocation2 + $0x3c] sm:$0xff]
      %v1684 = vld [vmem:[#allocation2 + $0x4c] sm:$0xff]
      %v1685 = vld [vmem:[#allocation2 + $0x54] sm:$0xff]
      %v1686 = vld [vmem:[#allocation2 + $0x64] sm:$0xff]
      %v1687 = vld [vmem:[#allocation2 + $0x6c] sm:$0xff]
      %v1688 = vld [vmem:[#allocation2 + $0x7c] sm:$0xff]
      %v1689 = vld [vmem:[#allocation2 + $0x84] sm:$0xff]
      %v1690 = vld [vmem:[#allocation2 + $0x94] sm:$0xff]
      %v1691 = vld [vmem:[#allocation2 + $0x9c] sm:$0xff]
      %v1692 = vld [vmem:[#allocation2 + $0xac] sm:$0xff]
      %v1693 = vld [vmem:[#allocation2 + $0xb4] sm:$0xff]
      %v1694 = vld [vmem:[#allocation2 + $0xc4] sm:$0xff]
      %v1695 = vld [vmem:[#allocation2 + $0xcc] sm:$0xff]
      %v1696 = vld [vmem:[#allocation2 + $0xdc] sm:$0xff]
      %v1697 = vld [vmem:[#allocation2 + $0xe4] sm:$0xff]
      %v1698 = vld [vmem:[#allocation2 + $0xf4] sm:$0xff]
      %v1699 = vld [vmem:[#allocation2 + $0xfc] sm:$0xff]
      %v1700 = vld [vmem:[#allocation2 + $0x10c] sm:$0xff]
      %v1701 = vld [vmem:[#allocation2 + $0x114] sm:$0xff]
      %v1702 = vld [vmem:[#allocation2 + $0x124] sm:$0xff]
      %v1703 = vld [vmem:[#allocation2 + $0x12c] sm:$0xff]
      %v1704 = vld [vmem:[#allocation2 + $0x13c] sm:$0xff]
      %v1705 = vld [vmem:[#allocation2 + $0x144] sm:$0xff]
      %v1706 = vld [vmem:[#allocation2 + $0x154] sm:$0xff]
      %v1707 = vld [vmem:[#allocation2 + $0x15c] sm:$0xff]
      %v1708 = vld [vmem:[#allocation2 + $0x16c] sm:$0xff]
      %v1709 = vld [vmem:[#allocation2 + $0x174] sm:$0xff]
      %v1710 = vlaneseq
      %v1711 = vshrl.u32 %v1710, 7
      %v1712 = vsub.s32 4, %v1711
      %v1713 = vrot.slane %v1274, %v1712
      %v1714 = vmul.f32 %v1678, %v1713
      %v1715 = vmul.f32 %v1679, %v1713
      %v1716 = vmul.f32 %v1680, %v1713
      %v1717 = vmul.f32 %v1681, %v1713
      %v1718 = vmul.f32 %v1682, %v1713
      %v1719 = vmul.f32 %v1683, %v1713
      %v1720 = vmul.f32 %v1684, %v1713
      %v1721 = vmul.f32 %v1685, %v1713
      %v1722 = vmul.f32 %v1686, %v1713
      %v1723 = vmul.f32 %v1687, %v1713
      %v1724 = vmul.f32 %v1688, %v1713
      %v1725 = vmul.f32 %v1689, %v1713
      %v1726 = vmul.f32 %v1690, %v1713
      %v1727 = vmul.f32 %v1691, %v1713
      %v1728 = vmul.f32 %v1692, %v1713
      %v1729 = vmul.f32 %v1693, %v1713
      %v1730 = vmul.f32 %v1694, %v1713
      %v1731 = vmul.f32 %v1695, %v1713
      %v1732 = vmul.f32 %v1696, %v1713
      %v1733 = vmul.f32 %v1697, %v1713
      %v1734 = vmul.f32 %v1698, %v1713
      %v1735 = vmul.f32 %v1699, %v1713
      %v1736 = vmul.f32 %v1700, %v1713
      %v1737 = vmul.f32 %v1701, %v1713
      %v1738 = vmul.f32 %v1702, %v1713
      %v1739 = vmul.f32 %v1703, %v1713
      %v1740 = vmul.f32 %v1704, %v1713
      %v1741 = vmul.f32 %v1705, %v1713
      %v1742 = vmul.f32 %v1706, %v1713
      %v1743 = vmul.f32 %v1707, %v1713
      %v1744 = vmul.f32 %v1708, %v1713
      %v1745 = vmul.f32 %v1709, %v1713
      %v1746 = vadd.f32 %v1646, %v1714
      %v1747 = vadd.f32 %v1647, %v1715
      %v1748 = vadd.f32 %v1648, %v1716
      %v1749 = vadd.f32 %v1649, %v1717
      %v1750 = vadd.f32 %v1650, %v1718
      %v1751 = vadd.f32 %v1651, %v1719
      %v1752 = vadd.f32 %v1652, %v1720
      %v1753 = vadd.f32 %v1653, %v1721
      %v1754 = vadd.f32 %v1654, %v1722
      %v1755 = vadd.f32 %v1655, %v1723
      %v1756 = vadd.f32 %v1656, %v1724
      %v1757 = vadd.f32 %v1657, %v1725
      %v1758 = vadd.f32 %v1658, %v1726
      %v1759 = vadd.f32 %v1659, %v1727
      %v1760 = vadd.f32 %v1660, %v1728
      %v1761 = vadd.f32 %v1661, %v1729
      %v1762 = vadd.f32 %v1662, %v1730
      %v1763 = vadd.f32 %v1663, %v1731
      %v1764 = vadd.f32 %v1664, %v1732
      %v1765 = vadd.f32 %v1665, %v1733
      %v1766 = vadd.f32 %v1666, %v1734
      %v1767 = vadd.f32 %v1667, %v1735
      %v1768 = vadd.f32 %v1668, %v1736
      %v1769 = vadd.f32 %v1669, %v1737
      %v1770 = vadd.f32 %v1670, %v1738
      %v1771 = vadd.f32 %v1671, %v1739
      %v1772 = vadd.f32 %v1672, %v1740
      %v1773 = vadd.f32 %v1673, %v1741
      %v1774 = vadd.f32 %v1674, %v1742
      %v1775 = vadd.f32 %v1675, %v1743
      %v1776 = vadd.f32 %v1676, %v1744
      %v1777 = vadd.f32 %v1677, %v1745
      %s1778 = scalar_lea.vmem [#allocation2], 24
      %v1779 = vld [vmem:[%s1778] sm:$0xff]
      %v1780 = vld [vmem:[%s1778 + $0x8] sm:$0xff]
      %v1781 = vld [vmem:[%s1778 + $0x18] sm:$0xff]
      %v1782 = vld [vmem:[%s1778 + $0x20] sm:$0xff]
      %v1783 = vld [vmem:[%s1778 + $0x30] sm:$0xff]
      %v1784 = vld [vmem:[%s1778 + $0x38] sm:$0xff]
      %v1785 = vld [vmem:[%s1778 + $0x48] sm:$0xff]
      %v1786 = vld [vmem:[%s1778 + $0x50] sm:$0xff]
      %v1787 = vld [vmem:[%s1778 + $0x60] sm:$0xff]
      %v1788 = vld [vmem:[%s1778 + $0x68] sm:$0xff]
      %v1789 = vld [vmem:[%s1778 + $0x78] sm:$0xff]
      %v1790 = vld [vmem:[%s1778 + $0x80] sm:$0xff]
      %v1791 = vld [vmem:[%s1778 + $0x90] sm:$0xff]
      %v1792 = vld [vmem:[%s1778 + $0x98] sm:$0xff]
      %v1793 = vld [vmem:[%s1778 + $0xa8] sm:$0xff]
      %v1794 = vld [vmem:[%s1778 + $0xb0] sm:$0xff]
      %v1795 = vld [vmem:[%s1778 + $0xc0] sm:$0xff]
      %v1796 = vld [vmem:[%s1778 + $0xc8] sm:$0xff]
      %v1797 = vld [vmem:[%s1778 + $0xd8] sm:$0xff]
      %v1798 = vld [vmem:[%s1778 + $0xe0] sm:$0xff]
      %v1799 = vld [vmem:[%s1778 + $0xf0] sm:$0xff]
      %v1800 = vld [vmem:[%s1778 + $0xf8] sm:$0xff]
      %v1801 = vld [vmem:[%s1778 + $0x108] sm:$0xff]
      %v1802 = vld [vmem:[%s1778 + $0x110] sm:$0xff]
      %v1803 = vld [vmem:[%s1778 + $0x120] sm:$0xff]
      %v1804 = vld [vmem:[%s1778 + $0x128] sm:$0xff]
      %v1805 = vld [vmem:[%s1778 + $0x138] sm:$0xff]
      %v1806 = vld [vmem:[%s1778 + $0x140] sm:$0xff]
      %v1807 = vld [vmem:[%s1778 + $0x150] sm:$0xff]
      %v1808 = vld [vmem:[%s1778 + $0x158] sm:$0xff]
      %v1809 = vld [vmem:[%s1778 + $0x168] sm:$0xff]
      %v1810 = vld [vmem:[%s1778 + $0x170] sm:$0xff]
      %v1811 = vlaneseq
      %v1812 = vshrl.u32 %v1811, 7
      %v1813 = vsub.s32 5, %v1812
      %v1814 = vrot.slane %v1274, %v1813
      %v1815 = vmul.f32 %v1779, %v1814
      %v1816 = vmul.f32 %v1780, %v1814
      %v1817 = vmul.f32 %v1781, %v1814
      %v1818 = vmul.f32 %v1782, %v1814
      %v1819 = vmul.f32 %v1783, %v1814
      %v1820 = vmul.f32 %v1784, %v1814
      %v1821 = vmul.f32 %v1785, %v1814
      %v1822 = vmul.f32 %v1786, %v1814
      %v1823 = vmul.f32 %v1787, %v1814
      %v1824 = vmul.f32 %v1788, %v1814
      %v1825 = vmul.f32 %v1789, %v1814
      %v1826 = vmul.f32 %v1790, %v1814
      %v1827 = vmul.f32 %v1791, %v1814
      %v1828 = vmul.f32 %v1792, %v1814
      %v1829 = vmul.f32 %v1793, %v1814
      %v1830 = vmul.f32 %v1794, %v1814
      %v1831 = vmul.f32 %v1795, %v1814
      %v1832 = vmul.f32 %v1796, %v1814
      %v1833 = vmul.f32 %v1797, %v1814
      %v1834 = vmul.f32 %v1798, %v1814
      %v1835 = vmul.f32 %v1799, %v1814
      %v1836 = vmul.f32 %v1800, %v1814
      %v1837 = vmul.f32 %v1801, %v1814
      %v1838 = vmul.f32 %v1802, %v1814
      %v1839 = vmul.f32 %v1803, %v1814
      %v1840 = vmul.f32 %v1804, %v1814
      %v1841 = vmul.f32 %v1805, %v1814
      %v1842 = vmul.f32 %v1806, %v1814
      %v1843 = vmul.f32 %v1807, %v1814
      %v1844 = vmul.f32 %v1808, %v1814
      %v1845 = vmul.f32 %v1809, %v1814
      %v1846 = vmul.f32 %v1810, %v1814
      %v1847 = vadd.f32 %v1746, %v1815
      %v1848 = vadd.f32 %v1747, %v1816
      %v1849 = vadd.f32 %v1748, %v1817
      %v1850 = vadd.f32 %v1749, %v1818
      %v1851 = vadd.f32 %v1750, %v1819
      %v1852 = vadd.f32 %v1751, %v1820
      %v1853 = vadd.f32 %v1752, %v1821
      %v1854 = vadd.f32 %v1753, %v1822
      %v1855 = vadd.f32 %v1754, %v1823
      %v1856 = vadd.f32 %v1755, %v1824
      %v1857 = vadd.f32 %v1756, %v1825
      %v1858 = vadd.f32 %v1757, %v1826
      %v1859 = vadd.f32 %v1758, %v1827
      %v1860 = vadd.f32 %v1759, %v1828
      %v1861 = vadd.f32 %v1760, %v1829
      %v1862 = vadd.f32 %v1761, %v1830
      %v1863 = vadd.f32 %v1762, %v1831
      %v1864 = vadd.f32 %v1763, %v1832
      %v1865 = vadd.f32 %v1764, %v1833
      %v1866 = vadd.f32 %v1765, %v1834
      %v1867 = vadd.f32 %v1766, %v1835
      %v1868 = vadd.f32 %v1767, %v1836
      %v1869 = vadd.f32 %v1768, %v1837
      %v1870 = vadd.f32 %v1769, %v1838
      %v1871 = vadd.f32 %v1770, %v1839
      %v1872 = vadd.f32 %v1771, %v1840
      %v1873 = vadd.f32 %v1772, %v1841
      %v1874 = vadd.f32 %v1773, %v1842
      %v1875 = vadd.f32 %v1774, %v1843
      %v1876 = vadd.f32 %v1775, %v1844
      %v1877 = vadd.f32 %v1776, %v1845
      %v1878 = vadd.f32 %v1777, %v1846
      %v1879 = vld [vmem:[%s1778 + $0x1] sm:$0xff]
      %v1880 = vld [vmem:[%s1778 + $0x9] sm:$0xff]
      %v1881 = vld [vmem:[%s1778 + $0x19] sm:$0xff]
      %v1882 = vld [vmem:[%s1778 + $0x21] sm:$0xff]
      %v1883 = vld [vmem:[%s1778 + $0x31] sm:$0xff]
      %v1884 = vld [vmem:[%s1778 + $0x39] sm:$0xff]
      %v1885 = vld [vmem:[%s1778 + $0x49] sm:$0xff]
      %v1886 = vld [vmem:[%s1778 + $0x51] sm:$0xff]
      %v1887 = vld [vmem:[%s1778 + $0x61] sm:$0xff]
      %v1888 = vld [vmem:[%s1778 + $0x69] sm:$0xff]
      %v1889 = vld [vmem:[%s1778 + $0x79] sm:$0xff]
      %v1890 = vld [vmem:[%s1778 + $0x81] sm:$0xff]
      %v1891 = vld [vmem:[%s1778 + $0x91] sm:$0xff]
      %v1892 = vld [vmem:[%s1778 + $0x99] sm:$0xff]
      %v1893 = vld [vmem:[%s1778 + $0xa9] sm:$0xff]
      %v1894 = vld [vmem:[%s1778 + $0xb1] sm:$0xff]
      %v1895 = vld [vmem:[%s1778 + $0xc1] sm:$0xff]
      %v1896 = vld [vmem:[%s1778 + $0xc9] sm:$0xff]
      %v1897 = vld [vmem:[%s1778 + $0xd9] sm:$0xff]
      %v1898 = vld [vmem:[%s1778 + $0xe1] sm:$0xff]
      %v1899 = vld [vmem:[%s1778 + $0xf1] sm:$0xff]
      %v1900 = vld [vmem:[%s1778 + $0xf9] sm:$0xff]
      %v1901 = vld [vmem:[%s1778 + $0x109] sm:$0xff]
      %v1902 = vld [vmem:[%s1778 + $0x111] sm:$0xff]
      %v1903 = vld [vmem:[%s1778 + $0x121] sm:$0xff]
      %v1904 = vld [vmem:[%s1778 + $0x129] sm:$0xff]
      %v1905 = vld [vmem:[%s1778 + $0x139] sm:$0xff]
      %v1906 = vld [vmem:[%s1778 + $0x141] sm:$0xff]
      %v1907 = vld [vmem:[%s1778 + $0x151] sm:$0xff]
      %v1908 = vld [vmem:[%s1778 + $0x159] sm:$0xff]
      %v1909 = vld [vmem:[%s1778 + $0x169] sm:$0xff]
      %v1910 = vld [vmem:[%s1778 + $0x171] sm:$0xff]
      %v1911 = vlaneseq
      %v1912 = vshrl.u32 %v1911, 7
      %v1913 = vsub.s32 6, %v1912
      %v1914 = vrot.slane %v1274, %v1913
      %v1915 = vmul.f32 %v1879, %v1914
      %v1916 = vmul.f32 %v1880, %v1914
      %v1917 = vmul.f32 %v1881, %v1914
      %v1918 = vmul.f32 %v1882, %v1914
      %v1919 = vmul.f32 %v1883, %v1914
      %v1920 = vmul.f32 %v1884, %v1914
      %v1921 = vmul.f32 %v1885, %v1914
      %v1922 = vmul.f32 %v1886, %v1914
      %v1923 = vmul.f32 %v1887, %v1914
      %v1924 = vmul.f32 %v1888, %v1914
      %v1925 = vmul.f32 %v1889, %v1914
      %v1926 = vmul.f32 %v1890, %v1914
      %v1927 = vmul.f32 %v1891, %v1914
      %v1928 = vmul.f32 %v1892, %v1914
      %v1929 = vmul.f32 %v1893, %v1914
      %v1930 = vmul.f32 %v1894, %v1914
      %v1931 = vmul.f32 %v1895, %v1914
      %v1932 = vmul.f32 %v1896, %v1914
      %v1933 = vmul.f32 %v1897, %v1914
      %v1934 = vmul.f32 %v1898, %v1914
      %v1935 = vmul.f32 %v1899, %v1914
      %v1936 = vmul.f32 %v1900, %v1914
      %v1937 = vmul.f32 %v1901, %v1914
      %v1938 = vmul.f32 %v1902, %v1914
      %v1939 = vmul.f32 %v1903, %v1914
      %v1940 = vmul.f32 %v1904, %v1914
      %v1941 = vmul.f32 %v1905, %v1914
      %v1942 = vmul.f32 %v1906, %v1914
      %v1943 = vmul.f32 %v1907, %v1914
      %v1944 = vmul.f32 %v1908, %v1914
      %v1945 = vmul.f32 %v1909, %v1914
      %v1946 = vmul.f32 %v1910, %v1914
      %v1947 = vadd.f32 %v1847, %v1915
      %v1948 = vadd.f32 %v1848, %v1916
      %v1949 = vadd.f32 %v1849, %v1917
      %v1950 = vadd.f32 %v1850, %v1918
      %v1951 = vadd.f32 %v1851, %v1919
      %v1952 = vadd.f32 %v1852, %v1920
      %v1953 = vadd.f32 %v1853, %v1921
      %v1954 = vadd.f32 %v1854, %v1922
      %v1955 = vadd.f32 %v1855, %v1923
      %v1956 = vadd.f32 %v1856, %v1924
      %v1957 = vadd.f32 %v1857, %v1925
      %v1958 = vadd.f32 %v1858, %v1926
      %v1959 = vadd.f32 %v1859, %v1927
      %v1960 = vadd.f32 %v1860, %v1928
      %v1961 = vadd.f32 %v1861, %v1929
      %v1962 = vadd.f32 %v1862, %v1930
      %v1963 = vadd.f32 %v1863, %v1931
      %v1964 = vadd.f32 %v1864, %v1932
      %v1965 = vadd.f32 %v1865, %v1933
      %v1966 = vadd.f32 %v1866, %v1934
      %v1967 = vadd.f32 %v1867, %v1935
      %v1968 = vadd.f32 %v1868, %v1936
      %v1969 = vadd.f32 %v1869, %v1937
      %v1970 = vadd.f32 %v1870, %v1938
      %v1971 = vadd.f32 %v1871, %v1939
      %v1972 = vadd.f32 %v1872, %v1940
      %v1973 = vadd.f32 %v1873, %v1941
      %v1974 = vadd.f32 %v1874, %v1942
      %v1975 = vadd.f32 %v1875, %v1943
      %v1976 = vadd.f32 %v1876, %v1944
      %v1977 = vadd.f32 %v1877, %v1945
      %v1978 = vadd.f32 %v1878, %v1946
      %v1979 = vld [vmem:[%s1778 + $0x2] sm:$0xff]
      %v1980 = vld [vmem:[%s1778 + $0xa] sm:$0xff]
      %v1981 = vld [vmem:[%s1778 + $0x1a] sm:$0xff]
      %v1982 = vld [vmem:[%s1778 + $0x22] sm:$0xff]
      %v1983 = vld [vmem:[%s1778 + $0x32] sm:$0xff]
      %v1984 = vld [vmem:[%s1778 + $0x3a] sm:$0xff]
      %v1985 = vld [vmem:[%s1778 + $0x4a] sm:$0xff]
      %v1986 = vld [vmem:[%s1778 + $0x52] sm:$0xff]
      %v1987 = vld [vmem:[%s1778 + $0x62] sm:$0xff]
      %v1988 = vld [vmem:[%s1778 + $0x6a] sm:$0xff]
      %v1989 = vld [vmem:[%s1778 + $0x7a] sm:$0xff]
      %v1990 = vld [vmem:[%s1778 + $0x82] sm:$0xff]
      %v1991 = vld [vmem:[%s1778 + $0x92] sm:$0xff]
      %v1992 = vld [vmem:[%s1778 + $0x9a] sm:$0xff]
      %v1993 = vld [vmem:[%s1778 + $0xaa] sm:$0xff]
      %v1994 = vld [vmem:[%s1778 + $0xb2] sm:$0xff]
      %v1995 = vld [vmem:[%s1778 + $0xc2] sm:$0xff]
      %v1996 = vld [vmem:[%s1778 + $0xca] sm:$0xff]
      %v1997 = vld [vmem:[%s1778 + $0xda] sm:$0xff]
      %v1998 = vld [vmem:[%s1778 + $0xe2] sm:$0xff]
      %v1999 = vld [vmem:[%s1778 + $0xf2] sm:$0xff]
      %v2000 = vld [vmem:[%s1778 + $0xfa] sm:$0xff]
      %v2001 = vld [vmem:[%s1778 + $0x10a] sm:$0xff]
      %v2002 = vld [vmem:[%s1778 + $0x112] sm:$0xff]
      %v2003 = vld [vmem:[%s1778 + $0x122] sm:$0xff]
      %v2004 = vld [vmem:[%s1778 + $0x12a] sm:$0xff]
      %v2005 = vld [vmem:[%s1778 + $0x13a] sm:$0xff]
      %v2006 = vld [vmem:[%s1778 + $0x142] sm:$0xff]
      %v2007 = vld [vmem:[%s1778 + $0x152] sm:$0xff]
      %v2008 = vld [vmem:[%s1778 + $0x15a] sm:$0xff]
      %v2009 = vld [vmem:[%s1778 + $0x16a] sm:$0xff]
      %v2010 = vld [vmem:[%s1778 + $0x172] sm:$0xff]
      %v2011 = vlaneseq
      %v2012 = vshrl.u32 %v2011, 7
      %v2013 = vsub.s32 7, %v2012
      %v2014 = vrot.slane %v1274, %v2013
      %v2015 = vmul.f32 %v1979, %v2014
      %v2016 = vmul.f32 %v1980, %v2014
      %v2017 = vmul.f32 %v1981, %v2014
      %v2018 = vmul.f32 %v1982, %v2014
      %v2019 = vmul.f32 %v1983, %v2014
      %v2020 = vmul.f32 %v1984, %v2014
      %v2021 = vmul.f32 %v1985, %v2014
      %v2022 = vmul.f32 %v1986, %v2014
      %v2023 = vmul.f32 %v1987, %v2014
      %v2024 = vmul.f32 %v1988, %v2014
      %v2025 = vmul.f32 %v1989, %v2014
      %v2026 = vmul.f32 %v1990, %v2014
      %v2027 = vmul.f32 %v1991, %v2014
      %v2028 = vmul.f32 %v1992, %v2014
      %v2029 = vmul.f32 %v1993, %v2014
      %v2030 = vmul.f32 %v1994, %v2014
      %v2031 = vmul.f32 %v1995, %v2014
      %v2032 = vmul.f32 %v1996, %v2014
      %v2033 = vmul.f32 %v1997, %v2014
      %v2034 = vmul.f32 %v1998, %v2014
      %v2035 = vmul.f32 %v1999, %v2014
      %v2036 = vmul.f32 %v2000, %v2014
      %v2037 = vmul.f32 %v2001, %v2014
      %v2038 = vmul.f32 %v2002, %v2014
      %v2039 = vmul.f32 %v2003, %v2014
      %v2040 = vmul.f32 %v2004, %v2014
      %v2041 = vmul.f32 %v2005, %v2014
      %v2042 = vmul.f32 %v2006, %v2014
      %v2043 = vmul.f32 %v2007, %v2014
      %v2044 = vmul.f32 %v2008, %v2014
      %v2045 = vmul.f32 %v2009, %v2014
      %v2046 = vmul.f32 %v2010, %v2014
      %v2047 = vadd.f32 %v1947, %v2015
      %v2048 = vadd.f32 %v1948, %v2016
      %v2049 = vadd.f32 %v1949, %v2017
      %v2050 = vadd.f32 %v1950, %v2018
      %v2051 = vadd.f32 %v1951, %v2019
      %v2052 = vadd.f32 %v1952, %v2020
      %v2053 = vadd.f32 %v1953, %v2021
      %v2054 = vadd.f32 %v1954, %v2022
      %v2055 = vadd.f32 %v1955, %v2023
      %v2056 = vadd.f32 %v1956, %v2024
      %v2057 = vadd.f32 %v1957, %v2025
      %v2058 = vadd.f32 %v1958, %v2026
      %v2059 = vadd.f32 %v1959, %v2027
      %v2060 = vadd.f32 %v1960, %v2028
      %v2061 = vadd.f32 %v1961, %v2029
      %v2062 = vadd.f32 %v1962, %v2030
      %v2063 = vadd.f32 %v1963, %v2031
      %v2064 = vadd.f32 %v1964, %v2032
      %v2065 = vadd.f32 %v1965, %v2033
      %v2066 = vadd.f32 %v1966, %v2034
      %v2067 = vadd.f32 %v1967, %v2035
      %v2068 = vadd.f32 %v1968, %v2036
      %v2069 = vadd.f32 %v1969, %v2037
      %v2070 = vadd.f32 %v1970, %v2038
      %v2071 = vadd.f32 %v1971, %v2039
      %v2072 = vadd.f32 %v1972, %v2040
      %v2073 = vadd.f32 %v1973, %v2041
      %v2074 = vadd.f32 %v1974, %v2042
      %v2075 = vadd.f32 %v1975, %v2043
      %v2076 = vadd.f32 %v1976, %v2044
      %v2077 = vadd.f32 %v1977, %v2045
      %v2078 = vadd.f32 %v1978, %v2046
      %v2079 = vld [vmem:[%s1778 + $0x3] sm:$0xff]
      %v2080 = vld [vmem:[%s1778 + $0xb] sm:$0xff]
      %v2081 = vld [vmem:[%s1778 + $0x1b] sm:$0xff]
      %v2082 = vld [vmem:[%s1778 + $0x23] sm:$0xff]
      %v2083 = vld [vmem:[%s1778 + $0x33] sm:$0xff]
      %v2084 = vld [vmem:[%s1778 + $0x3b] sm:$0xff]
      %v2085 = vld [vmem:[%s1778 + $0x4b] sm:$0xff]
      %v2086 = vld [vmem:[%s1778 + $0x53] sm:$0xff]
      %v2087 = vld [vmem:[%s1778 + $0x63] sm:$0xff]
      %v2088 = vld [vmem:[%s1778 + $0x6b] sm:$0xff]
      %v2089 = vld [vmem:[%s1778 + $0x7b] sm:$0xff]
      %v2090 = vld [vmem:[%s1778 + $0x83] sm:$0xff]
      %v2091 = vld [vmem:[%s1778 + $0x93] sm:$0xff]
      %v2092 = vld [vmem:[%s1778 + $0x9b] sm:$0xff]
      %v2093 = vld [vmem:[%s1778 + $0xab] sm:$0xff]
      %v2094 = vld [vmem:[%s1778 + $0xb3] sm:$0xff]
      %v2095 = vld [vmem:[%s1778 + $0xc3] sm:$0xff]
      %v2096 = vld [vmem:[%s1778 + $0xcb] sm:$0xff]
      %v2097 = vld [vmem:[%s1778 + $0xdb] sm:$0xff]
      %v2098 = vld [vmem:[%s1778 + $0xe3] sm:$0xff]
      %v2099 = vld [vmem:[%s1778 + $0xf3] sm:$0xff]
      %v2100 = vld [vmem:[%s1778 + $0xfb] sm:$0xff]
      %v2101 = vld [vmem:[%s1778 + $0x10b] sm:$0xff]
      %v2102 = vld [vmem:[%s1778 + $0x113] sm:$0xff]
      %v2103 = vld [vmem:[%s1778 + $0x123] sm:$0xff]
      %v2104 = vld [vmem:[%s1778 + $0x12b] sm:$0xff]
      %v2105 = vld [vmem:[%s1778 + $0x13b] sm:$0xff]
      %v2106 = vld [vmem:[%s1778 + $0x143] sm:$0xff]
      %v2107 = vld [vmem:[%s1778 + $0x153] sm:$0xff]
      %v2108 = vld [vmem:[%s1778 + $0x15b] sm:$0xff]
      %v2109 = vld [vmem:[%s1778 + $0x16b] sm:$0xff]
      %v2110 = vld [vmem:[%s1778 + $0x173] sm:$0xff]
      %v2111 = vlaneseq
      %v2112 = vshrl.u32 %v2111, 7
      %v2113 = vsub.s32 0, %v2112
      %v2114 = vrot.slane %v1275, %v2113
      %v2115 = vmul.f32 %v2079, %v2114
      %v2116 = vmul.f32 %v2080, %v2114
      %v2117 = vmul.f32 %v2081, %v2114
      %v2118 = vmul.f32 %v2082, %v2114
      %v2119 = vmul.f32 %v2083, %v2114
      %v2120 = vmul.f32 %v2084, %v2114
      %v2121 = vmul.f32 %v2085, %v2114
      %v2122 = vmul.f32 %v2086, %v2114
      %v2123 = vmul.f32 %v2087, %v2114
      %v2124 = vmul.f32 %v2088, %v2114
      %v2125 = vmul.f32 %v2089, %v2114
      %v2126 = vmul.f32 %v2090, %v2114
      %v2127 = vmul.f32 %v2091, %v2114
      %v2128 = vmul.f32 %v2092, %v2114
      %v2129 = vmul.f32 %v2093, %v2114
      %v2130 = vmul.f32 %v2094, %v2114
      %v2131 = vmul.f32 %v2095, %v2114
      %v2132 = vmul.f32 %v2096, %v2114
      %v2133 = vmul.f32 %v2097, %v2114
      %v2134 = vmul.f32 %v2098, %v2114
      %v2135 = vmul.f32 %v2099, %v2114
      %v2136 = vmul.f32 %v2100, %v2114
      %v2137 = vmul.f32 %v2101, %v2114
      %v2138 = vmul.f32 %v2102, %v2114
      %v2139 = vmul.f32 %v2103, %v2114
      %v2140 = vmul.f32 %v2104, %v2114
      %v2141 = vmul.f32 %v2105, %v2114
      %v2142 = vmul.f32 %v2106, %v2114
      %v2143 = vmul.f32 %v2107, %v2114
      %v2144 = vmul.f32 %v2108, %v2114
      %v2145 = vmul.f32 %v2109, %v2114
      %v2146 = vmul.f32 %v2110, %v2114
      %v2147 = vadd.f32 %v2047, %v2115
      %v2148 = vadd.f32 %v2048, %v2116
      %v2149 = vadd.f32 %v2049, %v2117
      %v2150 = vadd.f32 %v2050, %v2118
      %v2151 = vadd.f32 %v2051, %v2119
      %v2152 = vadd.f32 %v2052, %v2120
      %v2153 = vadd.f32 %v2053, %v2121
      %v2154 = vadd.f32 %v2054, %v2122
      %v2155 = vadd.f32 %v2055, %v2123
      %v2156 = vadd.f32 %v2056, %v2124
      %v2157 = vadd.f32 %v2057, %v2125
      %v2158 = vadd.f32 %v2058, %v2126
      %v2159 = vadd.f32 %v2059, %v2127
      %v2160 = vadd.f32 %v2060, %v2128
      %v2161 = vadd.f32 %v2061, %v2129
      %v2162 = vadd.f32 %v2062, %v2130
      %v2163 = vadd.f32 %v2063, %v2131
      %v2164 = vadd.f32 %v2064, %v2132
      %v2165 = vadd.f32 %v2065, %v2133
      %v2166 = vadd.f32 %v2066, %v2134
      %v2167 = vadd.f32 %v2067, %v2135
      %v2168 = vadd.f32 %v2068, %v2136
      %v2169 = vadd.f32 %v2069, %v2137
      %v2170 = vadd.f32 %v2070, %v2138
      %v2171 = vadd.f32 %v2071, %v2139
      %v2172 = vadd.f32 %v2072, %v2140
      %v2173 = vadd.f32 %v2073, %v2141
      %v2174 = vadd.f32 %v2074, %v2142
      %v2175 = vadd.f32 %v2075, %v2143
      %v2176 = vadd.f32 %v2076, %v2144
      %v2177 = vadd.f32 %v2077, %v2145
      %v2178 = vadd.f32 %v2078, %v2146
      %v2179 = vld [vmem:[%s1778 + $0x4] sm:$0xff]
      %v2180 = vld [vmem:[%s1778 + $0xc] sm:$0xff]
      %v2181 = vld [vmem:[%s1778 + $0x1c] sm:$0xff]
      %v2182 = vld [vmem:[%s1778 + $0x24] sm:$0xff]
      %v2183 = vld [vmem:[%s1778 + $0x34] sm:$0xff]
      %v2184 = vld [vmem:[%s1778 + $0x3c] sm:$0xff]
      %v2185 = vld [vmem:[%s1778 + $0x4c] sm:$0xff]
      %v2186 = vld [vmem:[%s1778 + $0x54] sm:$0xff]
      %v2187 = vld [vmem:[%s1778 + $0x64] sm:$0xff]
      %v2188 = vld [vmem:[%s1778 + $0x6c] sm:$0xff]
      %v2189 = vld [vmem:[%s1778 + $0x7c] sm:$0xff]
      %v2190 = vld [vmem:[%s1778 + $0x84] sm:$0xff]
      %v2191 = vld [vmem:[%s1778 + $0x94] sm:$0xff]
      %v2192 = vld [vmem:[%s1778 + $0x9c] sm:$0xff]
      %v2193 = vld [vmem:[%s1778 + $0xac] sm:$0xff]
      %v2194 = vld [vmem:[%s1778 + $0xb4] sm:$0xff]
      %v2195 = vld [vmem:[%s1778 + $0xc4] sm:$0xff]
      %v2196 = vld [vmem:[%s1778 + $0xcc] sm:$0xff]
      %v2197 = vld [vmem:[%s1778 + $0xdc] sm:$0xff]
      %v2198 = vld [vmem:[%s1778 + $0xe4] sm:$0xff]
      %v2199 = vld [vmem:[%s1778 + $0xf4] sm:$0xff]
      %v2200 = vld [vmem:[%s1778 + $0xfc] sm:$0xff]
      %v2201 = vld [vmem:[%s1778 + $0x10c] sm:$0xff]
      %v2202 = vld [vmem:[%s1778 + $0x114] sm:$0xff]
      %v2203 = vld [vmem:[%s1778 + $0x124] sm:$0xff]
      %v2204 = vld [vmem:[%s1778 + $0x12c] sm:$0xff]
      %v2205 = vld [vmem:[%s1778 + $0x13c] sm:$0xff]
      %v2206 = vld [vmem:[%s1778 + $0x144] sm:$0xff]
      %v2207 = vld [vmem:[%s1778 + $0x154] sm:$0xff]
      %v2208 = vld [vmem:[%s1778 + $0x15c] sm:$0xff]
      %v2209 = vld [vmem:[%s1778 + $0x16c] sm:$0xff]
      %v2210 = vld [vmem:[%s1778 + $0x174] sm:$0xff]
      %v2211 = vlaneseq
      %v2212 = vshrl.u32 %v2211, 7
      %v2213 = vsub.s32 1, %v2212
      %v2214 = vrot.slane %v1275, %v2213
      %v2215 = vmul.f32 %v2179, %v2214
      %v2216 = vmul.f32 %v2180, %v2214
      %v2217 = vmul.f32 %v2181, %v2214
      %v2218 = vmul.f32 %v2182, %v2214
      %v2219 = vmul.f32 %v2183, %v2214
      %v2220 = vmul.f32 %v2184, %v2214
      %v2221 = vmul.f32 %v2185, %v2214
      %v2222 = vmul.f32 %v2186, %v2214
      %v2223 = vmul.f32 %v2187, %v2214
      %v2224 = vmul.f32 %v2188, %v2214
      %v2225 = vmul.f32 %v2189, %v2214
      %v2226 = vmul.f32 %v2190, %v2214
      %v2227 = vmul.f32 %v2191, %v2214
      %v2228 = vmul.f32 %v2192, %v2214
      %v2229 = vmul.f32 %v2193, %v2214
      %v2230 = vmul.f32 %v2194, %v2214
      %v2231 = vmul.f32 %v2195, %v2214
      %v2232 = vmul.f32 %v2196, %v2214
      %v2233 = vmul.f32 %v2197, %v2214
      %v2234 = vmul.f32 %v2198, %v2214
      %v2235 = vmul.f32 %v2199, %v2214
      %v2236 = vmul.f32 %v2200, %v2214
      %v2237 = vmul.f32 %v2201, %v2214
      %v2238 = vmul.f32 %v2202, %v2214
      %v2239 = vmul.f32 %v2203, %v2214
      %v2240 = vmul.f32 %v2204, %v2214
      %v2241 = vmul.f32 %v2205, %v2214
      %v2242 = vmul.f32 %v2206, %v2214
      %v2243 = vmul.f32 %v2207, %v2214
      %v2244 = vmul.f32 %v2208, %v2214
      %v2245 = vmul.f32 %v2209, %v2214
      %v2246 = vmul.f32 %v2210, %v2214
      %v2247 = vadd.f32 %v2147, %v2215
      %v2248 = vadd.f32 %v2148, %v2216
      %v2249 = vadd.f32 %v2149, %v2217
      %v2250 = vadd.f32 %v2150, %v2218
      %v2251 = vadd.f32 %v2151, %v2219
      %v2252 = vadd.f32 %v2152, %v2220
      %v2253 = vadd.f32 %v2153, %v2221
      %v2254 = vadd.f32 %v2154, %v2222
      %v2255 = vadd.f32 %v2155, %v2223
      %v2256 = vadd.f32 %v2156, %v2224
      %v2257 = vadd.f32 %v2157, %v2225
      %v2258 = vadd.f32 %v2158, %v2226
      %v2259 = vadd.f32 %v2159, %v2227
      %v2260 = vadd.f32 %v2160, %v2228
      %v2261 = vadd.f32 %v2161, %v2229
      %v2262 = vadd.f32 %v2162, %v2230
      %v2263 = vadd.f32 %v2163, %v2231
      %v2264 = vadd.f32 %v2164, %v2232
      %v2265 = vadd.f32 %v2165, %v2233
      %v2266 = vadd.f32 %v2166, %v2234
      %v2267 = vadd.f32 %v2167, %v2235
      %v2268 = vadd.f32 %v2168, %v2236
      %v2269 = vadd.f32 %v2169, %v2237
      %v2270 = vadd.f32 %v2170, %v2238
      %v2271 = vadd.f32 %v2171, %v2239
      %v2272 = vadd.f32 %v2172, %v2240
      %v2273 = vadd.f32 %v2173, %v2241
      %v2274 = vadd.f32 %v2174, %v2242
      %v2275 = vadd.f32 %v2175, %v2243
      %v2276 = vadd.f32 %v2176, %v2244
      %v2277 = vadd.f32 %v2177, %v2245
      %v2278 = vadd.f32 %v2178, %v2246
      %v2279 = vld [vmem:[%s1208] sm:$0xff]
      %v2280 = vld [vmem:[%s1208 + $0x8] sm:$0xff]
      %v2281 = vld [vmem:[%s1208 + $0x18] sm:$0xff]
      %v2282 = vld [vmem:[%s1208 + $0x20] sm:$0xff]
      %v2283 = vld [vmem:[%s1208 + $0x30] sm:$0xff]
      %v2284 = vld [vmem:[%s1208 + $0x38] sm:$0xff]
      %v2285 = vld [vmem:[%s1208 + $0x48] sm:$0xff]
      %v2286 = vld [vmem:[%s1208 + $0x50] sm:$0xff]
      %v2287 = vld [vmem:[%s1208 + $0x60] sm:$0xff]
      %v2288 = vld [vmem:[%s1208 + $0x68] sm:$0xff]
      %v2289 = vld [vmem:[%s1208 + $0x78] sm:$0xff]
      %v2290 = vld [vmem:[%s1208 + $0x80] sm:$0xff]
      %v2291 = vld [vmem:[%s1208 + $0x90] sm:$0xff]
      %v2292 = vld [vmem:[%s1208 + $0x98] sm:$0xff]
      %v2293 = vld [vmem:[%s1208 + $0xa8] sm:$0xff]
      %v2294 = vld [vmem:[%s1208 + $0xb0] sm:$0xff]
      %v2295 = vld [vmem:[%s1208 + $0xc0] sm:$0xff]
      %v2296 = vld [vmem:[%s1208 + $0xc8] sm:$0xff]
      %v2297 = vld [vmem:[%s1208 + $0xd8] sm:$0xff]
      %v2298 = vld [vmem:[%s1208 + $0xe0] sm:$0xff]
      %v2299 = vld [vmem:[%s1208 + $0xf0] sm:$0xff]
      %v2300 = vld [vmem:[%s1208 + $0xf8] sm:$0xff]
      %v2301 = vld [vmem:[%s1208 + $0x108] sm:$0xff]
      %v2302 = vld [vmem:[%s1208 + $0x110] sm:$0xff]
      %v2303 = vld [vmem:[%s1208 + $0x120] sm:$0xff]
      %v2304 = vld [vmem:[%s1208 + $0x128] sm:$0xff]
      %v2305 = vld [vmem:[%s1208 + $0x138] sm:$0xff]
      %v2306 = vld [vmem:[%s1208 + $0x140] sm:$0xff]
      %v2307 = vld [vmem:[%s1208 + $0x150] sm:$0xff]
      %v2308 = vld [vmem:[%s1208 + $0x158] sm:$0xff]
      %v2309 = vld [vmem:[%s1208 + $0x168] sm:$0xff]
      %v2310 = vld [vmem:[%s1208 + $0x170] sm:$0xff]
      %v2311 = vlaneseq
      %v2312 = vshrl.u32 %v2311, 7
      %v2313 = vsub.s32 2, %v2312
      %v2314 = vrot.slane %v1275, %v2313
      %v2315 = vmul.f32 %v2279, %v2314
      %v2316 = vmul.f32 %v2280, %v2314
      %v2317 = vmul.f32 %v2281, %v2314
      %v2318 = vmul.f32 %v2282, %v2314
      %v2319 = vmul.f32 %v2283, %v2314
      %v2320 = vmul.f32 %v2284, %v2314
      %v2321 = vmul.f32 %v2285, %v2314
      %v2322 = vmul.f32 %v2286, %v2314
      %v2323 = vmul.f32 %v2287, %v2314
      %v2324 = vmul.f32 %v2288, %v2314
      %v2325 = vmul.f32 %v2289, %v2314
      %v2326 = vmul.f32 %v2290, %v2314
      %v2327 = vmul.f32 %v2291, %v2314
      %v2328 = vmul.f32 %v2292, %v2314
      %v2329 = vmul.f32 %v2293, %v2314
      %v2330 = vmul.f32 %v2294, %v2314
      %v2331 = vmul.f32 %v2295, %v2314
      %v2332 = vmul.f32 %v2296, %v2314
      %v2333 = vmul.f32 %v2297, %v2314
      %v2334 = vmul.f32 %v2298, %v2314
      %v2335 = vmul.f32 %v2299, %v2314
      %v2336 = vmul.f32 %v2300, %v2314
      %v2337 = vmul.f32 %v2301, %v2314
      %v2338 = vmul.f32 %v2302, %v2314
      %v2339 = vmul.f32 %v2303, %v2314
      %v2340 = vmul.f32 %v2304, %v2314
      %v2341 = vmul.f32 %v2305, %v2314
      %v2342 = vmul.f32 %v2306, %v2314
      %v2343 = vmul.f32 %v2307, %v2314
      %v2344 = vmul.f32 %v2308, %v2314
      %v2345 = vmul.f32 %v2309, %v2314
      %v2346 = vmul.f32 %v2310, %v2314
      %v2347 = vadd.f32 %v2247, %v2315
      %v2348 = vadd.f32 %v2248, %v2316
      %v2349 = vadd.f32 %v2249, %v2317
      %v2350 = vadd.f32 %v2250, %v2318
      %v2351 = vadd.f32 %v2251, %v2319
      %v2352 = vadd.f32 %v2252, %v2320
      %v2353 = vadd.f32 %v2253, %v2321
      %v2354 = vadd.f32 %v2254, %v2322
      %v2355 = vadd.f32 %v2255, %v2323
      %v2356 = vadd.f32 %v2256, %v2324
      %v2357 = vadd.f32 %v2257, %v2325
      %v2358 = vadd.f32 %v2258, %v2326
      %v2359 = vadd.f32 %v2259, %v2327
      %v2360 = vadd.f32 %v2260, %v2328
      %v2361 = vadd.f32 %v2261, %v2329
      %v2362 = vadd.f32 %v2262, %v2330
      %v2363 = vadd.f32 %v2263, %v2331
      %v2364 = vadd.f32 %v2264, %v2332
      %v2365 = vadd.f32 %v2265, %v2333
      %v2366 = vadd.f32 %v2266, %v2334
      %v2367 = vadd.f32 %v2267, %v2335
      %v2368 = vadd.f32 %v2268, %v2336
      %v2369 = vadd.f32 %v2269, %v2337
      %v2370 = vadd.f32 %v2270, %v2338
      %v2371 = vadd.f32 %v2271, %v2339
      %v2372 = vadd.f32 %v2272, %v2340
      %v2373 = vadd.f32 %v2273, %v2341
      %v2374 = vadd.f32 %v2274, %v2342
      %v2375 = vadd.f32 %v2275, %v2343
      %v2376 = vadd.f32 %v2276, %v2344
      %v2377 = vadd.f32 %v2277, %v2345
      %v2378 = vadd.f32 %v2278, %v2346
      %v2379 = vld [vmem:[%s1208 + $0x1] sm:$0xff]
      %v2380 = vld [vmem:[%s1208 + $0x9] sm:$0xff]
      %v2381 = vld [vmem:[%s1208 + $0x19] sm:$0xff]
      %v2382 = vld [vmem:[%s1208 + $0x21] sm:$0xff]
      %v2383 = vld [vmem:[%s1208 + $0x31] sm:$0xff]
      %v2384 = vld [vmem:[%s1208 + $0x39] sm:$0xff]
      %v2385 = vld [vmem:[%s1208 + $0x49] sm:$0xff]
      %v2386 = vld [vmem:[%s1208 + $0x51] sm:$0xff]
      %v2387 = vld [vmem:[%s1208 + $0x61] sm:$0xff]
      %v2388 = vld [vmem:[%s1208 + $0x69] sm:$0xff]
      %v2389 = vld [vmem:[%s1208 + $0x79] sm:$0xff]
      %v2390 = vld [vmem:[%s1208 + $0x81] sm:$0xff]
      %v2391 = vld [vmem:[%s1208 + $0x91] sm:$0xff]
      %v2392 = vld [vmem:[%s1208 + $0x99] sm:$0xff]
      %v2393 = vld [vmem:[%s1208 + $0xa9] sm:$0xff]
      %v2394 = vld [vmem:[%s1208 + $0xb1] sm:$0xff]
      %v2395 = vld [vmem:[%s1208 + $0xc1] sm:$0xff]
      %v2396 = vld [vmem:[%s1208 + $0xc9] sm:$0xff]
      %v2397 = vld [vmem:[%s1208 + $0xd9] sm:$0xff]
      %v2398 = vld [vmem:[%s1208 + $0xe1] sm:$0xff]
      %v2399 = vld [vmem:[%s1208 + $0xf1] sm:$0xff]
      %v2400 = vld [vmem:[%s1208 + $0xf9] sm:$0xff]
      %v2401 = vld [vmem:[%s1208 + $0x109] sm:$0xff]
      %v2402 = vld [vmem:[%s1208 + $0x111] sm:$0xff]
      %v2403 = vld [vmem:[%s1208 + $0x121] sm:$0xff]
      %v2404 = vld [vmem:[%s1208 + $0x129] sm:$0xff]
      %v2405 = vld [vmem:[%s1208 + $0x139] sm:$0xff]
      %v2406 = vld [vmem:[%s1208 + $0x141] sm:$0xff]
      %v2407 = vld [vmem:[%s1208 + $0x151] sm:$0xff]
      %v2408 = vld [vmem:[%s1208 + $0x159] sm:$0xff]
      %v2409 = vld [vmem:[%s1208 + $0x169] sm:$0xff]
      %v2410 = vld [vmem:[%s1208 + $0x171] sm:$0xff]
      %v2411 = vlaneseq
      %v2412 = vshrl.u32 %v2411, 7
      %v2413 = vsub.s32 3, %v2412
      %v2414 = vrot.slane %v1275, %v2413
      %v2415 = vmul.f32 %v2379, %v2414
      %v2416 = vmul.f32 %v2380, %v2414
      %v2417 = vmul.f32 %v2381, %v2414
      %v2418 = vmul.f32 %v2382, %v2414
      %v2419 = vmul.f32 %v2383, %v2414
      %v2420 = vmul.f32 %v2384, %v2414
      %v2421 = vmul.f32 %v2385, %v2414
      %v2422 = vmul.f32 %v2386, %v2414
      %v2423 = vmul.f32 %v2387, %v2414
      %v2424 = vmul.f32 %v2388, %v2414
      %v2425 = vmul.f32 %v2389, %v2414
      %v2426 = vmul.f32 %v2390, %v2414
      %v2427 = vmul.f32 %v2391, %v2414
      %v2428 = vmul.f32 %v2392, %v2414
      %v2429 = vmul.f32 %v2393, %v2414
      %v2430 = vmul.f32 %v2394, %v2414
      %v2431 = vmul.f32 %v2395, %v2414
      %v2432 = vmul.f32 %v2396, %v2414
      %v2433 = vmul.f32 %v2397, %v2414
      %v2434 = vmul.f32 %v2398, %v2414
      %v2435 = vmul.f32 %v2399, %v2414
      %v2436 = vmul.f32 %v2400, %v2414
      %v2437 = vmul.f32 %v2401, %v2414
      %v2438 = vmul.f32 %v2402, %v2414
      %v2439 = vmul.f32 %v2403, %v2414
      %v2440 = vmul.f32 %v2404, %v2414
      %v2441 = vmul.f32 %v2405, %v2414
      %v2442 = vmul.f32 %v2406, %v2414
      %v2443 = vmul.f32 %v2407, %v2414
      %v2444 = vmul.f32 %v2408, %v2414
      %v2445 = vmul.f32 %v2409, %v2414
      %v2446 = vmul.f32 %v2410, %v2414
      %v2447 = vadd.f32 %v2347, %v2415
      %v2448 = vadd.f32 %v2348, %v2416
      %v2449 = vadd.f32 %v2349, %v2417
      %v2450 = vadd.f32 %v2350, %v2418
      %v2451 = vadd.f32 %v2351, %v2419
      %v2452 = vadd.f32 %v2352, %v2420
      %v2453 = vadd.f32 %v2353, %v2421
      %v2454 = vadd.f32 %v2354, %v2422
      %v2455 = vadd.f32 %v2355, %v2423
      %v2456 = vadd.f32 %v2356, %v2424
      %v2457 = vadd.f32 %v2357, %v2425
      %v2458 = vadd.f32 %v2358, %v2426
      %v2459 = vadd.f32 %v2359, %v2427
      %v2460 = vadd.f32 %v2360, %v2428
      %v2461 = vadd.f32 %v2361, %v2429
      %v2462 = vadd.f32 %v2362, %v2430
      %v2463 = vadd.f32 %v2363, %v2431
      %v2464 = vadd.f32 %v2364, %v2432
      %v2465 = vadd.f32 %v2365, %v2433
      %v2466 = vadd.f32 %v2366, %v2434
      %v2467 = vadd.f32 %v2367, %v2435
      %v2468 = vadd.f32 %v2368, %v2436
      %v2469 = vadd.f32 %v2369, %v2437
      %v2470 = vadd.f32 %v2370, %v2438
      %v2471 = vadd.f32 %v2371, %v2439
      %v2472 = vadd.f32 %v2372, %v2440
      %v2473 = vadd.f32 %v2373, %v2441
      %v2474 = vadd.f32 %v2374, %v2442
      %v2475 = vadd.f32 %v2375, %v2443
      %v2476 = vadd.f32 %v2376, %v2444
      %v2477 = vadd.f32 %v2377, %v2445
      %v2478 = vadd.f32 %v2378, %v2446
      %v2479 = vld [vmem:[%s1208 + $0x2] sm:$0xff]
      %v2480 = vld [vmem:[%s1208 + $0xa] sm:$0xff]
      %v2481 = vld [vmem:[%s1208 + $0x1a] sm:$0xff]
      %v2482 = vld [vmem:[%s1208 + $0x22] sm:$0xff]
      %v2483 = vld [vmem:[%s1208 + $0x32] sm:$0xff]
      %v2484 = vld [vmem:[%s1208 + $0x3a] sm:$0xff]
      %v2485 = vld [vmem:[%s1208 + $0x4a] sm:$0xff]
      %v2486 = vld [vmem:[%s1208 + $0x52] sm:$0xff]
      %v2487 = vld [vmem:[%s1208 + $0x62] sm:$0xff]
      %v2488 = vld [vmem:[%s1208 + $0x6a] sm:$0xff]
      %v2489 = vld [vmem:[%s1208 + $0x7a] sm:$0xff]
      %v2490 = vld [vmem:[%s1208 + $0x82] sm:$0xff]
      %v2491 = vld [vmem:[%s1208 + $0x92] sm:$0xff]
      %v2492 = vld [vmem:[%s1208 + $0x9a] sm:$0xff]
      %v2493 = vld [vmem:[%s1208 + $0xaa] sm:$0xff]
      %v2494 = vld [vmem:[%s1208 + $0xb2] sm:$0xff]
      %v2495 = vld [vmem:[%s1208 + $0xc2] sm:$0xff]
      %v2496 = vld [vmem:[%s1208 + $0xca] sm:$0xff]
      %v2497 = vld [vmem:[%s1208 + $0xda] sm:$0xff]
      %v2498 = vld [vmem:[%s1208 + $0xe2] sm:$0xff]
      %v2499 = vld [vmem:[%s1208 + $0xf2] sm:$0xff]
      %v2500 = vld [vmem:[%s1208 + $0xfa] sm:$0xff]
      %v2501 = vld [vmem:[%s1208 + $0x10a] sm:$0xff]
      %v2502 = vld [vmem:[%s1208 + $0x112] sm:$0xff]
      %v2503 = vld [vmem:[%s1208 + $0x122] sm:$0xff]
      %v2504 = vld [vmem:[%s1208 + $0x12a] sm:$0xff]
      %v2505 = vld [vmem:[%s1208 + $0x13a] sm:$0xff]
      %v2506 = vld [vmem:[%s1208 + $0x142] sm:$0xff]
      %v2507 = vld [vmem:[%s1208 + $0x152] sm:$0xff]
      %v2508 = vld [vmem:[%s1208 + $0x15a] sm:$0xff]
      %v2509 = vld [vmem:[%s1208 + $0x16a] sm:$0xff]
      %v2510 = vld [vmem:[%s1208 + $0x172] sm:$0xff]
      %v2511 = vlaneseq
      %v2512 = vshrl.u32 %v2511, 7
      %v2513 = vsub.s32 4, %v2512
      %v2514 = vrot.slane %v1275, %v2513
      %v2515 = vmul.f32 %v2479, %v2514
      %v2516 = vmul.f32 %v2480, %v2514
      %v2517 = vmul.f32 %v2481, %v2514
      %v2518 = vmul.f32 %v2482, %v2514
      %v2519 = vmul.f32 %v2483, %v2514
      %v2520 = vmul.f32 %v2484, %v2514
      %v2521 = vmul.f32 %v2485, %v2514
      %v2522 = vmul.f32 %v2486, %v2514
      %v2523 = vmul.f32 %v2487, %v2514
      %v2524 = vmul.f32 %v2488, %v2514
      %v2525 = vmul.f32 %v2489, %v2514
      %v2526 = vmul.f32 %v2490, %v2514
      %v2527 = vmul.f32 %v2491, %v2514
      %v2528 = vmul.f32 %v2492, %v2514
      %v2529 = vmul.f32 %v2493, %v2514
      %v2530 = vmul.f32 %v2494, %v2514
      %v2531 = vmul.f32 %v2495, %v2514
      %v2532 = vmul.f32 %v2496, %v2514
      %v2533 = vmul.f32 %v2497, %v2514
      %v2534 = vmul.f32 %v2498, %v2514
      %v2535 = vmul.f32 %v2499, %v2514
      %v2536 = vmul.f32 %v2500, %v2514
      %v2537 = vmul.f32 %v2501, %v2514
      %v2538 = vmul.f32 %v2502, %v2514
      %v2539 = vmul.f32 %v2503, %v2514
      %v2540 = vmul.f32 %v2504, %v2514
      %v2541 = vmul.f32 %v2505, %v2514
      %v2542 = vmul.f32 %v2506, %v2514
      %v2543 = vmul.f32 %v2507, %v2514
      %v2544 = vmul.f32 %v2508, %v2514
      %v2545 = vmul.f32 %v2509, %v2514
      %v2546 = vmul.f32 %v2510, %v2514
      %v2547 = vadd.f32 %v2447, %v2515
      %v2548 = vadd.f32 %v2448, %v2516
      %v2549 = vadd.f32 %v2449, %v2517
      %v2550 = vadd.f32 %v2450, %v2518
      %v2551 = vadd.f32 %v2451, %v2519
      %v2552 = vadd.f32 %v2452, %v2520
      %v2553 = vadd.f32 %v2453, %v2521
      %v2554 = vadd.f32 %v2454, %v2522
      %v2555 = vadd.f32 %v2455, %v2523
      %v2556 = vadd.f32 %v2456, %v2524
      %v2557 = vadd.f32 %v2457, %v2525
      %v2558 = vadd.f32 %v2458, %v2526
      %v2559 = vadd.f32 %v2459, %v2527
      %v2560 = vadd.f32 %v2460, %v2528
      %v2561 = vadd.f32 %v2461, %v2529
      %v2562 = vadd.f32 %v2462, %v2530
      %v2563 = vadd.f32 %v2463, %v2531
      %v2564 = vadd.f32 %v2464, %v2532
      %v2565 = vadd.f32 %v2465, %v2533
      %v2566 = vadd.f32 %v2466, %v2534
      %v2567 = vadd.f32 %v2467, %v2535
      %v2568 = vadd.f32 %v2468, %v2536
      %v2569 = vadd.f32 %v2469, %v2537
      %v2570 = vadd.f32 %v2470, %v2538
      %v2571 = vadd.f32 %v2471, %v2539
      %v2572 = vadd.f32 %v2472, %v2540
      %v2573 = vadd.f32 %v2473, %v2541
      %v2574 = vadd.f32 %v2474, %v2542
      %v2575 = vadd.f32 %v2475, %v2543
      %v2576 = vadd.f32 %v2476, %v2544
      %v2577 = vadd.f32 %v2477, %v2545
      %v2578 = vadd.f32 %v2478, %v2546
      %v2579 = vld [vmem:[%s1208 + $0x3] sm:$0xff]
      %v2580 = vld [vmem:[%s1208 + $0xb] sm:$0xff]
      %v2581 = vld [vmem:[%s1208 + $0x1b] sm:$0xff]
      %v2582 = vld [vmem:[%s1208 + $0x23] sm:$0xff]
      %v2583 = vld [vmem:[%s1208 + $0x33] sm:$0xff]
      %v2584 = vld [vmem:[%s1208 + $0x3b] sm:$0xff]
      %v2585 = vld [vmem:[%s1208 + $0x4b] sm:$0xff]
      %v2586 = vld [vmem:[%s1208 + $0x53] sm:$0xff]
      %v2587 = vld [vmem:[%s1208 + $0x63] sm:$0xff]
      %v2588 = vld [vmem:[%s1208 + $0x6b] sm:$0xff]
      %v2589 = vld [vmem:[%s1208 + $0x7b] sm:$0xff]
      %v2590 = vld [vmem:[%s1208 + $0x83] sm:$0xff]
      %v2591 = vld [vmem:[%s1208 + $0x93] sm:$0xff]
      %v2592 = vld [vmem:[%s1208 + $0x9b] sm:$0xff]
      %v2593 = vld [vmem:[%s1208 + $0xab] sm:$0xff]
      %v2594 = vld [vmem:[%s1208 + $0xb3] sm:$0xff]
      %v2595 = vld [vmem:[%s1208 + $0xc3] sm:$0xff]
      %v2596 = vld [vmem:[%s1208 + $0xcb] sm:$0xff]
      %v2597 = vld [vmem:[%s1208 + $0xdb] sm:$0xff]
      %v2598 = vld [vmem:[%s1208 + $0xe3] sm:$0xff]
      %v2599 = vld [vmem:[%s1208 + $0xf3] sm:$0xff]
      %v2600 = vld [vmem:[%s1208 + $0xfb] sm:$0xff]
      %v2601 = vld [vmem:[%s1208 + $0x10b] sm:$0xff]
      %v2602 = vld [vmem:[%s1208 + $0x113] sm:$0xff]
      %v2603 = vld [vmem:[%s1208 + $0x123] sm:$0xff]
      %v2604 = vld [vmem:[%s1208 + $0x12b] sm:$0xff]
      %v2605 = vld [vmem:[%s1208 + $0x13b] sm:$0xff]
      %v2606 = vld [vmem:[%s1208 + $0x143] sm:$0xff]
      %v2607 = vld [vmem:[%s1208 + $0x153] sm:$0xff]
      %v2608 = vld [vmem:[%s1208 + $0x15b] sm:$0xff]
      %v2609 = vld [vmem:[%s1208 + $0x16b] sm:$0xff]
      %v2610 = vld [vmem:[%s1208 + $0x173] sm:$0xff]
      %v2611 = vlaneseq
      %v2612 = vshrl.u32 %v2611, 7
      %v2613 = vsub.s32 5, %v2612
      %v2614 = vrot.slane %v1275, %v2613
      %v2615 = vmul.f32 %v2579, %v2614
      %v2616 = vmul.f32 %v2580, %v2614
      %v2617 = vmul.f32 %v2581, %v2614
      %v2618 = vmul.f32 %v2582, %v2614
      %v2619 = vmul.f32 %v2583, %v2614
      %v2620 = vmul.f32 %v2584, %v2614
      %v2621 = vmul.f32 %v2585, %v2614
      %v2622 = vmul.f32 %v2586, %v2614
      %v2623 = vmul.f32 %v2587, %v2614
      %v2624 = vmul.f32 %v2588, %v2614
      %v2625 = vmul.f32 %v2589, %v2614
      %v2626 = vmul.f32 %v2590, %v2614
      %v2627 = vmul.f32 %v2591, %v2614
      %v2628 = vmul.f32 %v2592, %v2614
      %v2629 = vmul.f32 %v2593, %v2614
      %v2630 = vmul.f32 %v2594, %v2614
      %v2631 = vmul.f32 %v2595, %v2614
      %v2632 = vmul.f32 %v2596, %v2614
      %v2633 = vmul.f32 %v2597, %v2614
      %v2634 = vmul.f32 %v2598, %v2614
      %v2635 = vmul.f32 %v2599, %v2614
      %v2636 = vmul.f32 %v2600, %v2614
      %v2637 = vmul.f32 %v2601, %v2614
      %v2638 = vmul.f32 %v2602, %v2614
      %v2639 = vmul.f32 %v2603, %v2614
      %v2640 = vmul.f32 %v2604, %v2614
      %v2641 = vmul.f32 %v2605, %v2614
      %v2642 = vmul.f32 %v2606, %v2614
      %v2643 = vmul.f32 %v2607, %v2614
      %v2644 = vmul.f32 %v2608, %v2614
      %v2645 = vmul.f32 %v2609, %v2614
      %v2646 = vmul.f32 %v2610, %v2614
      %v2647 = vadd.f32 %v2547, %v2615
      %v2648 = vadd.f32 %v2548, %v2616
      %v2649 = vadd.f32 %v2549, %v2617
      %v2650 = vadd.f32 %v2550, %v2618
      %v2651 = vadd.f32 %v2551, %v2619
      %v2652 = vadd.f32 %v2552, %v2620
      %v2653 = vadd.f32 %v2553, %v2621
      %v2654 = vadd.f32 %v2554, %v2622
      %v2655 = vadd.f32 %v2555, %v2623
      %v2656 = vadd.f32 %v2556, %v2624
      %v2657 = vadd.f32 %v2557, %v2625
      %v2658 = vadd.f32 %v2558, %v2626
      %v2659 = vadd.f32 %v2559, %v2627
      %v2660 = vadd.f32 %v2560, %v2628
      %v2661 = vadd.f32 %v2561, %v2629
      %v2662 = vadd.f32 %v2562, %v2630
      %v2663 = vadd.f32 %v2563, %v2631
      %v2664 = vadd.f32 %v2564, %v2632
      %v2665 = vadd.f32 %v2565, %v2633
      %v2666 = vadd.f32 %v2566, %v2634
      %v2667 = vadd.f32 %v2567, %v2635
      %v2668 = vadd.f32 %v2568, %v2636
      %v2669 = vadd.f32 %v2569, %v2637
      %v2670 = vadd.f32 %v2570, %v2638
      %v2671 = vadd.f32 %v2571, %v2639
      %v2672 = vadd.f32 %v2572, %v2640
      %v2673 = vadd.f32 %v2573, %v2641
      %v2674 = vadd.f32 %v2574, %v2642
      %v2675 = vadd.f32 %v2575, %v2643
      %v2676 = vadd.f32 %v2576, %v2644
      %v2677 = vadd.f32 %v2577, %v2645
      %v2678 = vadd.f32 %v2578, %v2646
      %v2679 = vld [vmem:[%s1208 + $0x4] sm:$0xff]
      %v2680 = vld [vmem:[%s1208 + $0xc] sm:$0xff]
      %v2681 = vld [vmem:[%s1208 + $0x1c] sm:$0xff]
      %v2682 = vld [vmem:[%s1208 + $0x24] sm:$0xff]
      %v2683 = vld [vmem:[%s1208 + $0x34] sm:$0xff]
      %v2684 = vld [vmem:[%s1208 + $0x3c] sm:$0xff]
      %v2685 = vld [vmem:[%s1208 + $0x4c] sm:$0xff]
      %v2686 = vld [vmem:[%s1208 + $0x54] sm:$0xff]
      %v2687 = vld [vmem:[%s1208 + $0x64] sm:$0xff]
      %v2688 = vld [vmem:[%s1208 + $0x6c] sm:$0xff]
      %v2689 = vld [vmem:[%s1208 + $0x7c] sm:$0xff]
      %v2690 = vld [vmem:[%s1208 + $0x84] sm:$0xff]
      %v2691 = vld [vmem:[%s1208 + $0x94] sm:$0xff]
      %v2692 = vld [vmem:[%s1208 + $0x9c] sm:$0xff]
      %v2693 = vld [vmem:[%s1208 + $0xac] sm:$0xff]
      %v2694 = vld [vmem:[%s1208 + $0xb4] sm:$0xff]
      %v2695 = vld [vmem:[%s1208 + $0xc4] sm:$0xff]
      %v2696 = vld [vmem:[%s1208 + $0xcc] sm:$0xff]
      %v2697 = vld [vmem:[%s1208 + $0xdc] sm:$0xff]
      %v2698 = vld [vmem:[%s1208 + $0xe4] sm:$0xff]
      %v2699 = vld [vmem:[%s1208 + $0xf4] sm:$0xff]
      %v2700 = vld [vmem:[%s1208 + $0xfc] sm:$0xff]
      %v2701 = vld [vmem:[%s1208 + $0x10c] sm:$0xff]
      %v2702 = vld [vmem:[%s1208 + $0x114] sm:$0xff]
      %v2703 = vld [vmem:[%s1208 + $0x124] sm:$0xff]
      %v2704 = vld [vmem:[%s1208 + $0x12c] sm:$0xff]
      %v2705 = vld [vmem:[%s1208 + $0x13c] sm:$0xff]
      %v2706 = vld [vmem:[%s1208 + $0x144] sm:$0xff]
      %v2707 = vld [vmem:[%s1208 + $0x154] sm:$0xff]
      %v2708 = vld [vmem:[%s1208 + $0x15c] sm:$0xff]
      %v2709 = vld [vmem:[%s1208 + $0x16c] sm:$0xff]
      %v2710 = vld [vmem:[%s1208 + $0x174] sm:$0xff]
      %v2711 = vlaneseq
      %v2712 = vshrl.u32 %v2711, 7
      %v2713 = vsub.s32 6, %v2712
      %v2714 = vrot.slane %v1275, %v2713
      %v2715 = vmul.f32 %v2679, %v2714
      %v2716 = vmul.f32 %v2680, %v2714
      %v2717 = vmul.f32 %v2681, %v2714
      %v2718 = vmul.f32 %v2682, %v2714
      %v2719 = vmul.f32 %v2683, %v2714
      %v2720 = vmul.f32 %v2684, %v2714
      %v2721 = vmul.f32 %v2685, %v2714
      %v2722 = vmul.f32 %v2686, %v2714
      %v2723 = vmul.f32 %v2687, %v2714
      %v2724 = vmul.f32 %v2688, %v2714
      %v2725 = vmul.f32 %v2689, %v2714
      %v2726 = vmul.f32 %v2690, %v2714
      %v2727 = vmul.f32 %v2691, %v2714
      %v2728 = vmul.f32 %v2692, %v2714
      %v2729 = vmul.f32 %v2693, %v2714
      %v2730 = vmul.f32 %v2694, %v2714
      %v2731 = vmul.f32 %v2695, %v2714
      %v2732 = vmul.f32 %v2696, %v2714
      %v2733 = vmul.f32 %v2697, %v2714
      %v2734 = vmul.f32 %v2698, %v2714
      %v2735 = vmul.f32 %v2699, %v2714
      %v2736 = vmul.f32 %v2700, %v2714
      %v2737 = vmul.f32 %v2701, %v2714
      %v2738 = vmul.f32 %v2702, %v2714
      %v2739 = vmul.f32 %v2703, %v2714
      %v2740 = vmul.f32 %v2704, %v2714
      %v2741 = vmul.f32 %v2705, %v2714
      %v2742 = vmul.f32 %v2706, %v2714
      %v2743 = vmul.f32 %v2707, %v2714
      %v2744 = vmul.f32 %v2708, %v2714
      %v2745 = vmul.f32 %v2709, %v2714
      %v2746 = vmul.f32 %v2710, %v2714
      %v2747 = vadd.f32 %v2647, %v2715
      %v2748 = vadd.f32 %v2648, %v2716
      %v2749 = vadd.f32 %v2649, %v2717
      %v2750 = vadd.f32 %v2650, %v2718
      %v2751 = vadd.f32 %v2651, %v2719
      %v2752 = vadd.f32 %v2652, %v2720
      %v2753 = vadd.f32 %v2653, %v2721
      %v2754 = vadd.f32 %v2654, %v2722
      %v2755 = vadd.f32 %v2655, %v2723
      %v2756 = vadd.f32 %v2656, %v2724
      %v2757 = vadd.f32 %v2657, %v2725
      %v2758 = vadd.f32 %v2658, %v2726
      %v2759 = vadd.f32 %v2659, %v2727
      %v2760 = vadd.f32 %v2660, %v2728
      %v2761 = vadd.f32 %v2661, %v2729
      %v2762 = vadd.f32 %v2662, %v2730
      %v2763 = vadd.f32 %v2663, %v2731
      %v2764 = vadd.f32 %v2664, %v2732
      %v2765 = vadd.f32 %v2665, %v2733
      %v2766 = vadd.f32 %v2666, %v2734
      %v2767 = vadd.f32 %v2667, %v2735
      %v2768 = vadd.f32 %v2668, %v2736
      %v2769 = vadd.f32 %v2669, %v2737
      %v2770 = vadd.f32 %v2670, %v2738
      %v2771 = vadd.f32 %v2671, %v2739
      %v2772 = vadd.f32 %v2672, %v2740
      %v2773 = vadd.f32 %v2673, %v2741
      %v2774 = vadd.f32 %v2674, %v2742
      %v2775 = vadd.f32 %v2675, %v2743
      %v2776 = vadd.f32 %v2676, %v2744
      %v2777 = vadd.f32 %v2677, %v2745
      %v2778 = vadd.f32 %v2678, %v2746
      %s2779 = scalar_lea.vmem [#allocation2], 72
      %v2780 = vld [vmem:[%s2779] sm:$0xff]
      %v2781 = vld [vmem:[%s2779 + $0x8] sm:$0xff]
      %v2782 = vld [vmem:[%s2779 + $0x18] sm:$0xff]
      %v2783 = vld [vmem:[%s2779 + $0x20] sm:$0xff]
      %v2784 = vld [vmem:[%s2779 + $0x30] sm:$0xff]
      %v2785 = vld [vmem:[%s2779 + $0x38] sm:$0xff]
      %v2786 = vld [vmem:[%s2779 + $0x48] sm:$0xff]
      %v2787 = vld [vmem:[%s2779 + $0x50] sm:$0xff]
      %v2788 = vld [vmem:[%s2779 + $0x60] sm:$0xff]
      %v2789 = vld [vmem:[%s2779 + $0x68] sm:$0xff]
      %v2790 = vld [vmem:[%s2779 + $0x78] sm:$0xff]
      %v2791 = vld [vmem:[%s2779 + $0x80] sm:$0xff]
      %v2792 = vld [vmem:[%s2779 + $0x90] sm:$0xff]
      %v2793 = vld [vmem:[%s2779 + $0x98] sm:$0xff]
      %v2794 = vld [vmem:[%s2779 + $0xa8] sm:$0xff]
      %v2795 = vld [vmem:[%s2779 + $0xb0] sm:$0xff]
      %v2796 = vld [vmem:[%s2779 + $0xc0] sm:$0xff]
      %v2797 = vld [vmem:[%s2779 + $0xc8] sm:$0xff]
      %v2798 = vld [vmem:[%s2779 + $0xd8] sm:$0xff]
      %v2799 = vld [vmem:[%s2779 + $0xe0] sm:$0xff]
      %v2800 = vld [vmem:[%s2779 + $0xf0] sm:$0xff]
      %v2801 = vld [vmem:[%s2779 + $0xf8] sm:$0xff]
      %v2802 = vld [vmem:[%s2779 + $0x108] sm:$0xff]
      %v2803 = vld [vmem:[%s2779 + $0x110] sm:$0xff]
      %v2804 = vld [vmem:[%s2779 + $0x120] sm:$0xff]
      %v2805 = vld [vmem:[%s2779 + $0x128] sm:$0xff]
      %v2806 = vld [vmem:[%s2779 + $0x138] sm:$0xff]
      %v2807 = vld [vmem:[%s2779 + $0x140] sm:$0xff]
      %v2808 = vld [vmem:[%s2779 + $0x150] sm:$0xff]
      %v2809 = vld [vmem:[%s2779 + $0x158] sm:$0xff]
      %v2810 = vld [vmem:[%s2779 + $0x168] sm:$0xff]
      %v2811 = vld [vmem:[%s2779 + $0x170] sm:$0xff]
      %v2812 = vlaneseq
      %v2813 = vshrl.u32 %v2812, 7
      %v2814 = vsub.s32 7, %v2813
      %v2815 = vrot.slane %v1275, %v2814
      %v2816 = vmul.f32 %v2780, %v2815
      %v2817 = vmul.f32 %v2781, %v2815
      %v2818 = vmul.f32 %v2782, %v2815
      %v2819 = vmul.f32 %v2783, %v2815
      %v2820 = vmul.f32 %v2784, %v2815
      %v2821 = vmul.f32 %v2785, %v2815
      %v2822 = vmul.f32 %v2786, %v2815
      %v2823 = vmul.f32 %v2787, %v2815
      %v2824 = vmul.f32 %v2788, %v2815
      %v2825 = vmul.f32 %v2789, %v2815
      %v2826 = vmul.f32 %v2790, %v2815
      %v2827 = vmul.f32 %v2791, %v2815
      %v2828 = vmul.f32 %v2792, %v2815
      %v2829 = vmul.f32 %v2793, %v2815
      %v2830 = vmul.f32 %v2794, %v2815
      %v2831 = vmul.f32 %v2795, %v2815
      %v2832 = vmul.f32 %v2796, %v2815
      %v2833 = vmul.f32 %v2797, %v2815
      %v2834 = vmul.f32 %v2798, %v2815
      %v2835 = vmul.f32 %v2799, %v2815
      %v2836 = vmul.f32 %v2800, %v2815
      %v2837 = vmul.f32 %v2801, %v2815
      %v2838 = vmul.f32 %v2802, %v2815
      %v2839 = vmul.f32 %v2803, %v2815
      %v2840 = vmul.f32 %v2804, %v2815
      %v2841 = vmul.f32 %v2805, %v2815
      %v2842 = vmul.f32 %v2806, %v2815
      %v2843 = vmul.f32 %v2807, %v2815
      %v2844 = vmul.f32 %v2808, %v2815
      %v2845 = vmul.f32 %v2809, %v2815
      %v2846 = vmul.f32 %v2810, %v2815
      %v2847 = vmul.f32 %v2811, %v2815
      %v2848 = vadd.f32 %v2747, %v2816
      %v2849 = vadd.f32 %v2748, %v2817
      %v2850 = vadd.f32 %v2749, %v2818
      %v2851 = vadd.f32 %v2750, %v2819
      %v2852 = vadd.f32 %v2751, %v2820
      %v2853 = vadd.f32 %v2752, %v2821
      %v2854 = vadd.f32 %v2753, %v2822
      %v2855 = vadd.f32 %v2754, %v2823
      %v2856 = vadd.f32 %v2755, %v2824
      %v2857 = vadd.f32 %v2756, %v2825
      %v2858 = vadd.f32 %v2757, %v2826
      %v2859 = vadd.f32 %v2758, %v2827
      %v2860 = vadd.f32 %v2759, %v2828
      %v2861 = vadd.f32 %v2760, %v2829
      %v2862 = vadd.f32 %v2761, %v2830
      %v2863 = vadd.f32 %v2762, %v2831
      %v2864 = vadd.f32 %v2763, %v2832
      %v2865 = vadd.f32 %v2764, %v2833
      %v2866 = vadd.f32 %v2765, %v2834
      %v2867 = vadd.f32 %v2766, %v2835
      %v2868 = vadd.f32 %v2767, %v2836
      %v2869 = vadd.f32 %v2768, %v2837
      %v2870 = vadd.f32 %v2769, %v2838
      %v2871 = vadd.f32 %v2770, %v2839
      %v2872 = vadd.f32 %v2771, %v2840
      %v2873 = vadd.f32 %v2772, %v2841
      %v2874 = vadd.f32 %v2773, %v2842
      %v2875 = vadd.f32 %v2774, %v2843
      %v2876 = vadd.f32 %v2775, %v2844
      %v2877 = vadd.f32 %v2776, %v2845
      %v2878 = vadd.f32 %v2777, %v2846
      %v2879 = vadd.f32 %v2778, %v2847
      %v2880 = vld [vmem:[%s2779 + $0x1] sm:$0xff]
      %v2881 = vld [vmem:[%s2779 + $0x9] sm:$0xff]
      %v2882 = vld [vmem:[%s2779 + $0x19] sm:$0xff]
      %v2883 = vld [vmem:[%s2779 + $0x21] sm:$0xff]
      %v2884 = vld [vmem:[%s2779 + $0x31] sm:$0xff]
      %v2885 = vld [vmem:[%s2779 + $0x39] sm:$0xff]
      %v2886 = vld [vmem:[%s2779 + $0x49] sm:$0xff]
      %v2887 = vld [vmem:[%s2779 + $0x51] sm:$0xff]
      %v2888 = vld [vmem:[%s2779 + $0x61] sm:$0xff]
      %v2889 = vld [vmem:[%s2779 + $0x69] sm:$0xff]
      %v2890 = vld [vmem:[%s2779 + $0x79] sm:$0xff]
      %v2891 = vld [vmem:[%s2779 + $0x81] sm:$0xff]
      %v2892 = vld [vmem:[%s2779 + $0x91] sm:$0xff]
      %v2893 = vld [vmem:[%s2779 + $0x99] sm:$0xff]
      %v2894 = vld [vmem:[%s2779 + $0xa9] sm:$0xff]
      %v2895 = vld [vmem:[%s2779 + $0xb1] sm:$0xff]
      %v2896 = vld [vmem:[%s2779 + $0xc1] sm:$0xff]
      %v2897 = vld [vmem:[%s2779 + $0xc9] sm:$0xff]
      %v2898 = vld [vmem:[%s2779 + $0xd9] sm:$0xff]
      %v2899 = vld [vmem:[%s2779 + $0xe1] sm:$0xff]
      %v2900 = vld [vmem:[%s2779 + $0xf1] sm:$0xff]
      %v2901 = vld [vmem:[%s2779 + $0xf9] sm:$0xff]
      %v2902 = vld [vmem:[%s2779 + $0x109] sm:$0xff]
      %v2903 = vld [vmem:[%s2779 + $0x111] sm:$0xff]
      %v2904 = vld [vmem:[%s2779 + $0x121] sm:$0xff]
      %v2905 = vld [vmem:[%s2779 + $0x129] sm:$0xff]
      %v2906 = vld [vmem:[%s2779 + $0x139] sm:$0xff]
      %v2907 = vld [vmem:[%s2779 + $0x141] sm:$0xff]
      %v2908 = vld [vmem:[%s2779 + $0x151] sm:$0xff]
      %v2909 = vld [vmem:[%s2779 + $0x159] sm:$0xff]
      %v2910 = vld [vmem:[%s2779 + $0x169] sm:$0xff]
      %v2911 = vld [vmem:[%s2779 + $0x171] sm:$0xff]
      %v2912 = vlaneseq
      %v2913 = vshrl.u32 %v2912, 7
      %v2914 = vsub.s32 0, %v2913
      %v2915 = vrot.slane %v1276, %v2914
      %v2916 = vmul.f32 %v2880, %v2915
      %v2917 = vmul.f32 %v2881, %v2915
      %v2918 = vmul.f32 %v2882, %v2915
      %v2919 = vmul.f32 %v2883, %v2915
      %v2920 = vmul.f32 %v2884, %v2915
      %v2921 = vmul.f32 %v2885, %v2915
      %v2922 = vmul.f32 %v2886, %v2915
      %v2923 = vmul.f32 %v2887, %v2915
      %v2924 = vmul.f32 %v2888, %v2915
      %v2925 = vmul.f32 %v2889, %v2915
      %v2926 = vmul.f32 %v2890, %v2915
      %v2927 = vmul.f32 %v2891, %v2915
      %v2928 = vmul.f32 %v2892, %v2915
      %v2929 = vmul.f32 %v2893, %v2915
      %v2930 = vmul.f32 %v2894, %v2915
      %v2931 = vmul.f32 %v2895, %v2915
      %v2932 = vmul.f32 %v2896, %v2915
      %v2933 = vmul.f32 %v2897, %v2915
      %v2934 = vmul.f32 %v2898, %v2915
      %v2935 = vmul.f32 %v2899, %v2915
      %v2936 = vmul.f32 %v2900, %v2915
      %v2937 = vmul.f32 %v2901, %v2915
      %v2938 = vmul.f32 %v2902, %v2915
      %v2939 = vmul.f32 %v2903, %v2915
      %v2940 = vmul.f32 %v2904, %v2915
      %v2941 = vmul.f32 %v2905, %v2915
      %v2942 = vmul.f32 %v2906, %v2915
      %v2943 = vmul.f32 %v2907, %v2915
      %v2944 = vmul.f32 %v2908, %v2915
      %v2945 = vmul.f32 %v2909, %v2915
      %v2946 = vmul.f32 %v2910, %v2915
      %v2947 = vmul.f32 %v2911, %v2915
      %v2948 = vadd.f32 %v2848, %v2916
      %v2949 = vadd.f32 %v2849, %v2917
      %v2950 = vadd.f32 %v2850, %v2918
      %v2951 = vadd.f32 %v2851, %v2919
      %v2952 = vadd.f32 %v2852, %v2920
      %v2953 = vadd.f32 %v2853, %v2921
      %v2954 = vadd.f32 %v2854, %v2922
      %v2955 = vadd.f32 %v2855, %v2923
      %v2956 = vadd.f32 %v2856, %v2924
      %v2957 = vadd.f32 %v2857, %v2925
      %v2958 = vadd.f32 %v2858, %v2926
      %v2959 = vadd.f32 %v2859, %v2927
      %v2960 = vadd.f32 %v2860, %v2928
      %v2961 = vadd.f32 %v2861, %v2929
      %v2962 = vadd.f32 %v2862, %v2930
      %v2963 = vadd.f32 %v2863, %v2931
      %v2964 = vadd.f32 %v2864, %v2932
      %v2965 = vadd.f32 %v2865, %v2933
      %v2966 = vadd.f32 %v2866, %v2934
      %v2967 = vadd.f32 %v2867, %v2935
      %v2968 = vadd.f32 %v2868, %v2936
      %v2969 = vadd.f32 %v2869, %v2937
      %v2970 = vadd.f32 %v2870, %v2938
      %v2971 = vadd.f32 %v2871, %v2939
      %v2972 = vadd.f32 %v2872, %v2940
      %v2973 = vadd.f32 %v2873, %v2941
      %v2974 = vadd.f32 %v2874, %v2942
      %v2975 = vadd.f32 %v2875, %v2943
      %v2976 = vadd.f32 %v2876, %v2944
      %v2977 = vadd.f32 %v2877, %v2945
      %v2978 = vadd.f32 %v2878, %v2946
      %v2979 = vadd.f32 %v2879, %v2947
      %v2980 = vld [vmem:[%s2779 + $0x2] sm:$0xff]
      %v2981 = vld [vmem:[%s2779 + $0xa] sm:$0xff]
      %v2982 = vld [vmem:[%s2779 + $0x1a] sm:$0xff]
      %v2983 = vld [vmem:[%s2779 + $0x22] sm:$0xff]
      %v2984 = vld [vmem:[%s2779 + $0x32] sm:$0xff]
      %v2985 = vld [vmem:[%s2779 + $0x3a] sm:$0xff]
      %v2986 = vld [vmem:[%s2779 + $0x4a] sm:$0xff]
      %v2987 = vld [vmem:[%s2779 + $0x52] sm:$0xff]
      %v2988 = vld [vmem:[%s2779 + $0x62] sm:$0xff]
      %v2989 = vld [vmem:[%s2779 + $0x6a] sm:$0xff]
      %v2990 = vld [vmem:[%s2779 + $0x7a] sm:$0xff]
      %v2991 = vld [vmem:[%s2779 + $0x82] sm:$0xff]
      %v2992 = vld [vmem:[%s2779 + $0x92] sm:$0xff]
      %v2993 = vld [vmem:[%s2779 + $0x9a] sm:$0xff]
      %v2994 = vld [vmem:[%s2779 + $0xaa] sm:$0xff]
      %v2995 = vld [vmem:[%s2779 + $0xb2] sm:$0xff]
      %v2996 = vld [vmem:[%s2779 + $0xc2] sm:$0xff]
      %v2997 = vld [vmem:[%s2779 + $0xca] sm:$0xff]
      %v2998 = vld [vmem:[%s2779 + $0xda] sm:$0xff]
      %v2999 = vld [vmem:[%s2779 + $0xe2] sm:$0xff]
      %v3000 = vld [vmem:[%s2779 + $0xf2] sm:$0xff]
      %v3001 = vld [vmem:[%s2779 + $0xfa] sm:$0xff]
      %v3002 = vld [vmem:[%s2779 + $0x10a] sm:$0xff]
      %v3003 = vld [vmem:[%s2779 + $0x112] sm:$0xff]
      %v3004 = vld [vmem:[%s2779 + $0x122] sm:$0xff]
      %v3005 = vld [vmem:[%s2779 + $0x12a] sm:$0xff]
      %v3006 = vld [vmem:[%s2779 + $0x13a] sm:$0xff]
      %v3007 = vld [vmem:[%s2779 + $0x142] sm:$0xff]
      %v3008 = vld [vmem:[%s2779 + $0x152] sm:$0xff]
      %v3009 = vld [vmem:[%s2779 + $0x15a] sm:$0xff]
      %v3010 = vld [vmem:[%s2779 + $0x16a] sm:$0xff]
      %v3011 = vld [vmem:[%s2779 + $0x172] sm:$0xff]
      %v3012 = vlaneseq
      %v3013 = vshrl.u32 %v3012, 7
      %v3014 = vsub.s32 1, %v3013
      %v3015 = vrot.slane %v1276, %v3014
      %v3016 = vmul.f32 %v2980, %v3015
      %v3017 = vmul.f32 %v2981, %v3015
      %v3018 = vmul.f32 %v2982, %v3015
      %v3019 = vmul.f32 %v2983, %v3015
      %v3020 = vmul.f32 %v2984, %v3015
      %v3021 = vmul.f32 %v2985, %v3015
      %v3022 = vmul.f32 %v2986, %v3015
      %v3023 = vmul.f32 %v2987, %v3015
      %v3024 = vmul.f32 %v2988, %v3015
      %v3025 = vmul.f32 %v2989, %v3015
      %v3026 = vmul.f32 %v2990, %v3015
      %v3027 = vmul.f32 %v2991, %v3015
      %v3028 = vmul.f32 %v2992, %v3015
      %v3029 = vmul.f32 %v2993, %v3015
      %v3030 = vmul.f32 %v2994, %v3015
      %v3031 = vmul.f32 %v2995, %v3015
      %v3032 = vmul.f32 %v2996, %v3015
      %v3033 = vmul.f32 %v2997, %v3015
      %v3034 = vmul.f32 %v2998, %v3015
      %v3035 = vmul.f32 %v2999, %v3015
      %v3036 = vmul.f32 %v3000, %v3015
      %v3037 = vmul.f32 %v3001, %v3015
      %v3038 = vmul.f32 %v3002, %v3015
      %v3039 = vmul.f32 %v3003, %v3015
      %v3040 = vmul.f32 %v3004, %v3015
      %v3041 = vmul.f32 %v3005, %v3015
      %v3042 = vmul.f32 %v3006, %v3015
      %v3043 = vmul.f32 %v3007, %v3015
      %v3044 = vmul.f32 %v3008, %v3015
      %v3045 = vmul.f32 %v3009, %v3015
      %v3046 = vmul.f32 %v3010, %v3015
      %v3047 = vmul.f32 %v3011, %v3015
      %v3048 = vadd.f32 %v2948, %v3016
      %v3049 = vadd.f32 %v2949, %v3017
      %v3050 = vadd.f32 %v2950, %v3018
      %v3051 = vadd.f32 %v2951, %v3019
      %v3052 = vadd.f32 %v2952, %v3020
      %v3053 = vadd.f32 %v2953, %v3021
      %v3054 = vadd.f32 %v2954, %v3022
      %v3055 = vadd.f32 %v2955, %v3023
      %v3056 = vadd.f32 %v2956, %v3024
      %v3057 = vadd.f32 %v2957, %v3025
      %v3058 = vadd.f32 %v2958, %v3026
      %v3059 = vadd.f32 %v2959, %v3027
      %v3060 = vadd.f32 %v2960, %v3028
      %v3061 = vadd.f32 %v2961, %v3029
      %v3062 = vadd.f32 %v2962, %v3030
      %v3063 = vadd.f32 %v2963, %v3031
      %v3064 = vadd.f32 %v2964, %v3032
      %v3065 = vadd.f32 %v2965, %v3033
      %v3066 = vadd.f32 %v2966, %v3034
      %v3067 = vadd.f32 %v2967, %v3035
      %v3068 = vadd.f32 %v2968, %v3036
      %v3069 = vadd.f32 %v2969, %v3037
      %v3070 = vadd.f32 %v2970, %v3038
      %v3071 = vadd.f32 %v2971, %v3039
      %v3072 = vadd.f32 %v2972, %v3040
      %v3073 = vadd.f32 %v2973, %v3041
      %v3074 = vadd.f32 %v2974, %v3042
      %v3075 = vadd.f32 %v2975, %v3043
      %v3076 = vadd.f32 %v2976, %v3044
      %v3077 = vadd.f32 %v2977, %v3045
      %v3078 = vadd.f32 %v2978, %v3046
      %v3079 = vadd.f32 %v2979, %v3047
      %v3080 = vld [vmem:[%s2779 + $0x3] sm:$0xff]
      %v3081 = vld [vmem:[%s2779 + $0xb] sm:$0xff]
      %v3082 = vld [vmem:[%s2779 + $0x1b] sm:$0xff]
      %v3083 = vld [vmem:[%s2779 + $0x23] sm:$0xff]
      %v3084 = vld [vmem:[%s2779 + $0x33] sm:$0xff]
      %v3085 = vld [vmem:[%s2779 + $0x3b] sm:$0xff]
      %v3086 = vld [vmem:[%s2779 + $0x4b] sm:$0xff]
      %v3087 = vld [vmem:[%s2779 + $0x53] sm:$0xff]
      %v3088 = vld [vmem:[%s2779 + $0x63] sm:$0xff]
      %v3089 = vld [vmem:[%s2779 + $0x6b] sm:$0xff]
      %v3090 = vld [vmem:[%s2779 + $0x7b] sm:$0xff]
      %v3091 = vld [vmem:[%s2779 + $0x83] sm:$0xff]
      %v3092 = vld [vmem:[%s2779 + $0x93] sm:$0xff]
      %v3093 = vld [vmem:[%s2779 + $0x9b] sm:$0xff]
      %v3094 = vld [vmem:[%s2779 + $0xab] sm:$0xff]
      %v3095 = vld [vmem:[%s2779 + $0xb3] sm:$0xff]
      %v3096 = vld [vmem:[%s2779 + $0xc3] sm:$0xff]
      %v3097 = vld [vmem:[%s2779 + $0xcb] sm:$0xff]
      %v3098 = vld [vmem:[%s2779 + $0xdb] sm:$0xff]
      %v3099 = vld [vmem:[%s2779 + $0xe3] sm:$0xff]
      %v3100 = vld [vmem:[%s2779 + $0xf3] sm:$0xff]
      %v3101 = vld [vmem:[%s2779 + $0xfb] sm:$0xff]
      %v3102 = vld [vmem:[%s2779 + $0x10b] sm:$0xff]
      %v3103 = vld [vmem:[%s2779 + $0x113] sm:$0xff]
      %v3104 = vld [vmem:[%s2779 + $0x123] sm:$0xff]
      %v3105 = vld [vmem:[%s2779 + $0x12b] sm:$0xff]
      %v3106 = vld [vmem:[%s2779 + $0x13b] sm:$0xff]
      %v3107 = vld [vmem:[%s2779 + $0x143] sm:$0xff]
      %v3108 = vld [vmem:[%s2779 + $0x153] sm:$0xff]
      %v3109 = vld [vmem:[%s2779 + $0x15b] sm:$0xff]
      %v3110 = vld [vmem:[%s2779 + $0x16b] sm:$0xff]
      %v3111 = vld [vmem:[%s2779 + $0x173] sm:$0xff]
      %v3112 = vlaneseq
      %v3113 = vshrl.u32 %v3112, 7
      %v3114 = vsub.s32 2, %v3113
      %v3115 = vrot.slane %v1276, %v3114
      %v3116 = vmul.f32 %v3080, %v3115
      %v3117 = vmul.f32 %v3081, %v3115
      %v3118 = vmul.f32 %v3082, %v3115
      %v3119 = vmul.f32 %v3083, %v3115
      %v3120 = vmul.f32 %v3084, %v3115
      %v3121 = vmul.f32 %v3085, %v3115
      %v3122 = vmul.f32 %v3086, %v3115
      %v3123 = vmul.f32 %v3087, %v3115
      %v3124 = vmul.f32 %v3088, %v3115
      %v3125 = vmul.f32 %v3089, %v3115
      %v3126 = vmul.f32 %v3090, %v3115
      %v3127 = vmul.f32 %v3091, %v3115
      %v3128 = vmul.f32 %v3092, %v3115
      %v3129 = vmul.f32 %v3093, %v3115
      %v3130 = vmul.f32 %v3094, %v3115
      %v3131 = vmul.f32 %v3095, %v3115
      %v3132 = vmul.f32 %v3096, %v3115
      %v3133 = vmul.f32 %v3097, %v3115
      %v3134 = vmul.f32 %v3098, %v3115
      %v3135 = vmul.f32 %v3099, %v3115
      %v3136 = vmul.f32 %v3100, %v3115
      %v3137 = vmul.f32 %v3101, %v3115
      %v3138 = vmul.f32 %v3102, %v3115
      %v3139 = vmul.f32 %v3103, %v3115
      %v3140 = vmul.f32 %v3104, %v3115
      %v3141 = vmul.f32 %v3105, %v3115
      %v3142 = vmul.f32 %v3106, %v3115
      %v3143 = vmul.f32 %v3107, %v3115
      %v3144 = vmul.f32 %v3108, %v3115
      %v3145 = vmul.f32 %v3109, %v3115
      %v3146 = vmul.f32 %v3110, %v3115
      %v3147 = vmul.f32 %v3111, %v3115
      %v3148 = vadd.f32 %v3048, %v3116
      %v3149 = vadd.f32 %v3049, %v3117
      %v3150 = vadd.f32 %v3050, %v3118
      %v3151 = vadd.f32 %v3051, %v3119
      %v3152 = vadd.f32 %v3052, %v3120
      %v3153 = vadd.f32 %v3053, %v3121
      %v3154 = vadd.f32 %v3054, %v3122
      %v3155 = vadd.f32 %v3055, %v3123
      %v3156 = vadd.f32 %v3056, %v3124
      %v3157 = vadd.f32 %v3057, %v3125
      %v3158 = vadd.f32 %v3058, %v3126
      %v3159 = vadd.f32 %v3059, %v3127
      %v3160 = vadd.f32 %v3060, %v3128
      %v3161 = vadd.f32 %v3061, %v3129
      %v3162 = vadd.f32 %v3062, %v3130
      %v3163 = vadd.f32 %v3063, %v3131
      %v3164 = vadd.f32 %v3064, %v3132
      %v3165 = vadd.f32 %v3065, %v3133
      %v3166 = vadd.f32 %v3066, %v3134
      %v3167 = vadd.f32 %v3067, %v3135
      %v3168 = vadd.f32 %v3068, %v3136
      %v3169 = vadd.f32 %v3069, %v3137
      %v3170 = vadd.f32 %v3070, %v3138
      %v3171 = vadd.f32 %v3071, %v3139
      %v3172 = vadd.f32 %v3072, %v3140
      %v3173 = vadd.f32 %v3073, %v3141
      %v3174 = vadd.f32 %v3074, %v3142
      %v3175 = vadd.f32 %v3075, %v3143
      %v3176 = vadd.f32 %v3076, %v3144
      %v3177 = vadd.f32 %v3077, %v3145
      %v3178 = vadd.f32 %v3078, %v3146
      %v3179 = vadd.f32 %v3079, %v3147
      %v3180 = vld [vmem:[%s2779 + $0x4] sm:$0xff]
      %v3181 = vld [vmem:[%s2779 + $0xc] sm:$0xff]
      %v3182 = vld [vmem:[%s2779 + $0x1c] sm:$0xff]
      %v3183 = vld [vmem:[%s2779 + $0x24] sm:$0xff]
      %v3184 = vld [vmem:[%s2779 + $0x34] sm:$0xff]
      %v3185 = vld [vmem:[%s2779 + $0x3c] sm:$0xff]
      %v3186 = vld [vmem:[%s2779 + $0x4c] sm:$0xff]
      %v3187 = vld [vmem:[%s2779 + $0x54] sm:$0xff]
      %v3188 = vld [vmem:[%s2779 + $0x64] sm:$0xff]
      %v3189 = vld [vmem:[%s2779 + $0x6c] sm:$0xff]
      %v3190 = vld [vmem:[%s2779 + $0x7c] sm:$0xff]
      %v3191 = vld [vmem:[%s2779 + $0x84] sm:$0xff]
      %v3192 = vld [vmem:[%s2779 + $0x94] sm:$0xff]
      %v3193 = vld [vmem:[%s2779 + $0x9c] sm:$0xff]
      %v3194 = vld [vmem:[%s2779 + $0xac] sm:$0xff]
      %v3195 = vld [vmem:[%s2779 + $0xb4] sm:$0xff]
      %v3196 = vld [vmem:[%s2779 + $0xc4] sm:$0xff]
      %v3197 = vld [vmem:[%s2779 + $0xcc] sm:$0xff]
      %v3198 = vld [vmem:[%s2779 + $0xdc] sm:$0xff]
      %v3199 = vld [vmem:[%s2779 + $0xe4] sm:$0xff]
      %v3200 = vld [vmem:[%s2779 + $0xf4] sm:$0xff]
      %v3201 = vld [vmem:[%s2779 + $0xfc] sm:$0xff]
      %v3202 = vld [vmem:[%s2779 + $0x10c] sm:$0xff]
      %v3203 = vld [vmem:[%s2779 + $0x114] sm:$0xff]
      %v3204 = vld [vmem:[%s2779 + $0x124] sm:$0xff]
      %v3205 = vld [vmem:[%s2779 + $0x12c] sm:$0xff]
      %v3206 = vld [vmem:[%s2779 + $0x13c] sm:$0xff]
      %v3207 = vld [vmem:[%s2779 + $0x144] sm:$0xff]
      %v3208 = vld [vmem:[%s2779 + $0x154] sm:$0xff]
      %v3209 = vld [vmem:[%s2779 + $0x15c] sm:$0xff]
      %v3210 = vld [vmem:[%s2779 + $0x16c] sm:$0xff]
      %v3211 = vld [vmem:[%s2779 + $0x174] sm:$0xff]
      %v3212 = vlaneseq
      %v3213 = vshrl.u32 %v3212, 7
      %v3214 = vsub.s32 3, %v3213
      %v3215 = vrot.slane %v1276, %v3214
      %v3216 = vmul.f32 %v3180, %v3215
      %v3217 = vmul.f32 %v3181, %v3215
      %v3218 = vmul.f32 %v3182, %v3215
      %v3219 = vmul.f32 %v3183, %v3215
      %v3220 = vmul.f32 %v3184, %v3215
      %v3221 = vmul.f32 %v3185, %v3215
      %v3222 = vmul.f32 %v3186, %v3215
      %v3223 = vmul.f32 %v3187, %v3215
      %v3224 = vmul.f32 %v3188, %v3215
      %v3225 = vmul.f32 %v3189, %v3215
      %v3226 = vmul.f32 %v3190, %v3215
      %v3227 = vmul.f32 %v3191, %v3215
      %v3228 = vmul.f32 %v3192, %v3215
      %v3229 = vmul.f32 %v3193, %v3215
      %v3230 = vmul.f32 %v3194, %v3215
      %v3231 = vmul.f32 %v3195, %v3215
      %v3232 = vmul.f32 %v3196, %v3215
      %v3233 = vmul.f32 %v3197, %v3215
      %v3234 = vmul.f32 %v3198, %v3215
      %v3235 = vmul.f32 %v3199, %v3215
      %v3236 = vmul.f32 %v3200, %v3215
      %v3237 = vmul.f32 %v3201, %v3215
      %v3238 = vmul.f32 %v3202, %v3215
      %v3239 = vmul.f32 %v3203, %v3215
      %v3240 = vmul.f32 %v3204, %v3215
      %v3241 = vmul.f32 %v3205, %v3215
      %v3242 = vmul.f32 %v3206, %v3215
      %v3243 = vmul.f32 %v3207, %v3215
      %v3244 = vmul.f32 %v3208, %v3215
      %v3245 = vmul.f32 %v3209, %v3215
      %v3246 = vmul.f32 %v3210, %v3215
      %v3247 = vmul.f32 %v3211, %v3215
      %v3248 = vadd.f32 %v3148, %v3216
      %v3249 = vadd.f32 %v3149, %v3217
      %v3250 = vadd.f32 %v3150, %v3218
      %v3251 = vadd.f32 %v3151, %v3219
      %v3252 = vadd.f32 %v3152, %v3220
      %v3253 = vadd.f32 %v3153, %v3221
      %v3254 = vadd.f32 %v3154, %v3222
      %v3255 = vadd.f32 %v3155, %v3223
      %v3256 = vadd.f32 %v3156, %v3224
      %v3257 = vadd.f32 %v3157, %v3225
      %v3258 = vadd.f32 %v3158, %v3226
      %v3259 = vadd.f32 %v3159, %v3227
      %v3260 = vadd.f32 %v3160, %v3228
      %v3261 = vadd.f32 %v3161, %v3229
      %v3262 = vadd.f32 %v3162, %v3230
      %v3263 = vadd.f32 %v3163, %v3231
      %v3264 = vadd.f32 %v3164, %v3232
      %v3265 = vadd.f32 %v3165, %v3233
      %v3266 = vadd.f32 %v3166, %v3234
      %v3267 = vadd.f32 %v3167, %v3235
      %v3268 = vadd.f32 %v3168, %v3236
      %v3269 = vadd.f32 %v3169, %v3237
      %v3270 = vadd.f32 %v3170, %v3238
      %v3271 = vadd.f32 %v3171, %v3239
      %v3272 = vadd.f32 %v3172, %v3240
      %v3273 = vadd.f32 %v3173, %v3241
      %v3274 = vadd.f32 %v3174, %v3242
      %v3275 = vadd.f32 %v3175, %v3243
      %v3276 = vadd.f32 %v3176, %v3244
      %v3277 = vadd.f32 %v3177, %v3245
      %v3278 = vadd.f32 %v3178, %v3246
      %v3279 = vadd.f32 %v3179, %v3247
      %s3280 = scalar_lea.vmem [#allocation2], 96
      %v3281 = vld [vmem:[%s3280] sm:$0xff]
      %v3282 = vld [vmem:[%s3280 + $0x8] sm:$0xff]
      %v3283 = vld [vmem:[%s3280 + $0x18] sm:$0xff]
      %v3284 = vld [vmem:[%s3280 + $0x20] sm:$0xff]
      %v3285 = vld [vmem:[%s3280 + $0x30] sm:$0xff]
      %v3286 = vld [vmem:[%s3280 + $0x38] sm:$0xff]
      %v3287 = vld [vmem:[%s3280 + $0x48] sm:$0xff]
      %v3288 = vld [vmem:[%s3280 + $0x50] sm:$0xff]
      %v3289 = vld [vmem:[%s3280 + $0x60] sm:$0xff]
      %v3290 = vld [vmem:[%s3280 + $0x68] sm:$0xff]
      %v3291 = vld [vmem:[%s3280 + $0x78] sm:$0xff]
      %v3292 = vld [vmem:[%s3280 + $0x80] sm:$0xff]
      %v3293 = vld [vmem:[%s3280 + $0x90] sm:$0xff]
      %v3294 = vld [vmem:[%s3280 + $0x98] sm:$0xff]
      %v3295 = vld [vmem:[%s3280 + $0xa8] sm:$0xff]
      %v3296 = vld [vmem:[%s3280 + $0xb0] sm:$0xff]
      %v3297 = vld [vmem:[%s3280 + $0xc0] sm:$0xff]
      %v3298 = vld [vmem:[%s3280 + $0xc8] sm:$0xff]
      %v3299 = vld [vmem:[%s3280 + $0xd8] sm:$0xff]
      %v3300 = vld [vmem:[%s3280 + $0xe0] sm:$0xff]
      %v3301 = vld [vmem:[%s3280 + $0xf0] sm:$0xff]
      %v3302 = vld [vmem:[%s3280 + $0xf8] sm:$0xff]
      %v3303 = vld [vmem:[%s3280 + $0x108] sm:$0xff]
      %v3304 = vld [vmem:[%s3280 + $0x110] sm:$0xff]
      %v3305 = vld [vmem:[%s3280 + $0x120] sm:$0xff]
      %v3306 = vld [vmem:[%s3280 + $0x128] sm:$0xff]
      %v3307 = vld [vmem:[%s3280 + $0x138] sm:$0xff]
      %v3308 = vld [vmem:[%s3280 + $0x140] sm:$0xff]
      %v3309 = vld [vmem:[%s3280 + $0x150] sm:$0xff]
      %v3310 = vld [vmem:[%s3280 + $0x158] sm:$0xff]
      %v3311 = vld [vmem:[%s3280 + $0x168] sm:$0xff]
      %v3312 = vld [vmem:[%s3280 + $0x170] sm:$0xff]
      %v3313 = vlaneseq
      %v3314 = vshrl.u32 %v3313, 7
      %v3315 = vsub.s32 4, %v3314
      %v3316 = vrot.slane %v1276, %v3315
      %v3317 = vmul.f32 %v3281, %v3316
      %v3318 = vmul.f32 %v3282, %v3316
      %v3319 = vmul.f32 %v3283, %v3316
      %v3320 = vmul.f32 %v3284, %v3316
      %v3321 = vmul.f32 %v3285, %v3316
      %v3322 = vmul.f32 %v3286, %v3316
      %v3323 = vmul.f32 %v3287, %v3316
      %v3324 = vmul.f32 %v3288, %v3316
      %v3325 = vmul.f32 %v3289, %v3316
      %v3326 = vmul.f32 %v3290, %v3316
      %v3327 = vmul.f32 %v3291, %v3316
      %v3328 = vmul.f32 %v3292, %v3316
      %v3329 = vmul.f32 %v3293, %v3316
      %v3330 = vmul.f32 %v3294, %v3316
      %v3331 = vmul.f32 %v3295, %v3316
      %v3332 = vmul.f32 %v3296, %v3316
      %v3333 = vmul.f32 %v3297, %v3316
      %v3334 = vmul.f32 %v3298, %v3316
      %v3335 = vmul.f32 %v3299, %v3316
      %v3336 = vmul.f32 %v3300, %v3316
      %v3337 = vmul.f32 %v3301, %v3316
      %v3338 = vmul.f32 %v3302, %v3316
      %v3339 = vmul.f32 %v3303, %v3316
      %v3340 = vmul.f32 %v3304, %v3316
      %v3341 = vmul.f32 %v3305, %v3316
      %v3342 = vmul.f32 %v3306, %v3316
      %v3343 = vmul.f32 %v3307, %v3316
      %v3344 = vmul.f32 %v3308, %v3316
      %v3345 = vmul.f32 %v3309, %v3316
      %v3346 = vmul.f32 %v3310, %v3316
      %v3347 = vmul.f32 %v3311, %v3316
      %v3348 = vmul.f32 %v3312, %v3316
      %v3349 = vadd.f32 %v3248, %v3317
      %v3350 = vadd.f32 %v3249, %v3318
      %v3351 = vadd.f32 %v3250, %v3319
      %v3352 = vadd.f32 %v3251, %v3320
      %v3353 = vadd.f32 %v3252, %v3321
      %v3354 = vadd.f32 %v3253, %v3322
      %v3355 = vadd.f32 %v3254, %v3323
      %v3356 = vadd.f32 %v3255, %v3324
      %v3357 = vadd.f32 %v3256, %v3325
      %v3358 = vadd.f32 %v3257, %v3326
      %v3359 = vadd.f32 %v3258, %v3327
      %v3360 = vadd.f32 %v3259, %v3328
      %v3361 = vadd.f32 %v3260, %v3329
      %v3362 = vadd.f32 %v3261, %v3330
      %v3363 = vadd.f32 %v3262, %v3331
      %v3364 = vadd.f32 %v3263, %v3332
      %v3365 = vadd.f32 %v3264, %v3333
      %v3366 = vadd.f32 %v3265, %v3334
      %v3367 = vadd.f32 %v3266, %v3335
      %v3368 = vadd.f32 %v3267, %v3336
      %v3369 = vadd.f32 %v3268, %v3337
      %v3370 = vadd.f32 %v3269, %v3338
      %v3371 = vadd.f32 %v3270, %v3339
      %v3372 = vadd.f32 %v3271, %v3340
      %v3373 = vadd.f32 %v3272, %v3341
      %v3374 = vadd.f32 %v3273, %v3342
      %v3375 = vadd.f32 %v3274, %v3343
      %v3376 = vadd.f32 %v3275, %v3344
      %v3377 = vadd.f32 %v3276, %v3345
      %v3378 = vadd.f32 %v3277, %v3346
      %v3379 = vadd.f32 %v3278, %v3347
      %v3380 = vadd.f32 %v3279, %v3348
      %v3381 = vld [vmem:[%s3280 + $0x1] sm:$0xff]
      %v3382 = vld [vmem:[%s3280 + $0x9] sm:$0xff]
      %v3383 = vld [vmem:[%s3280 + $0x19] sm:$0xff]
      %v3384 = vld [vmem:[%s3280 + $0x21] sm:$0xff]
      %v3385 = vld [vmem:[%s3280 + $0x31] sm:$0xff]
      %v3386 = vld [vmem:[%s3280 + $0x39] sm:$0xff]
      %v3387 = vld [vmem:[%s3280 + $0x49] sm:$0xff]
      %v3388 = vld [vmem:[%s3280 + $0x51] sm:$0xff]
      %v3389 = vld [vmem:[%s3280 + $0x61] sm:$0xff]
      %v3390 = vld [vmem:[%s3280 + $0x69] sm:$0xff]
      %v3391 = vld [vmem:[%s3280 + $0x79] sm:$0xff]
      %v3392 = vld [vmem:[%s3280 + $0x81] sm:$0xff]
      %v3393 = vld [vmem:[%s3280 + $0x91] sm:$0xff]
      %v3394 = vld [vmem:[%s3280 + $0x99] sm:$0xff]
      %v3395 = vld [vmem:[%s3280 + $0xa9] sm:$0xff]
      %v3396 = vld [vmem:[%s3280 + $0xb1] sm:$0xff]
      %v3397 = vld [vmem:[%s3280 + $0xc1] sm:$0xff]
      %v3398 = vld [vmem:[%s3280 + $0xc9] sm:$0xff]
      %v3399 = vld [vmem:[%s3280 + $0xd9] sm:$0xff]
      %v3400 = vld [vmem:[%s3280 + $0xe1] sm:$0xff]
      %v3401 = vld [vmem:[%s3280 + $0xf1] sm:$0xff]
      %v3402 = vld [vmem:[%s3280 + $0xf9] sm:$0xff]
      %v3403 = vld [vmem:[%s3280 + $0x109] sm:$0xff]
      %v3404 = vld [vmem:[%s3280 + $0x111] sm:$0xff]
      %v3405 = vld [vmem:[%s3280 + $0x121] sm:$0xff]
      %v3406 = vld [vmem:[%s3280 + $0x129] sm:$0xff]
      %v3407 = vld [vmem:[%s3280 + $0x139] sm:$0xff]
      %v3408 = vld [vmem:[%s3280 + $0x141] sm:$0xff]
      %v3409 = vld [vmem:[%s3280 + $0x151] sm:$0xff]
      %v3410 = vld [vmem:[%s3280 + $0x159] sm:$0xff]
      %v3411 = vld [vmem:[%s3280 + $0x169] sm:$0xff]
      %v3412 = vld [vmem:[%s3280 + $0x171] sm:$0xff]
      %v3413 = vlaneseq
      %v3414 = vshrl.u32 %v3413, 7
      %v3415 = vsub.s32 5, %v3414
      %v3416 = vrot.slane %v1276, %v3415
      %v3417 = vmul.f32 %v3381, %v3416
      %v3418 = vmul.f32 %v3382, %v3416
      %v3419 = vmul.f32 %v3383, %v3416
      %v3420 = vmul.f32 %v3384, %v3416
      %v3421 = vmul.f32 %v3385, %v3416
      %v3422 = vmul.f32 %v3386, %v3416
      %v3423 = vmul.f32 %v3387, %v3416
      %v3424 = vmul.f32 %v3388, %v3416
      %v3425 = vmul.f32 %v3389, %v3416
      %v3426 = vmul.f32 %v3390, %v3416
      %v3427 = vmul.f32 %v3391, %v3416
      %v3428 = vmul.f32 %v3392, %v3416
      %v3429 = vmul.f32 %v3393, %v3416
      %v3430 = vmul.f32 %v3394, %v3416
      %v3431 = vmul.f32 %v3395, %v3416
      %v3432 = vmul.f32 %v3396, %v3416
      %v3433 = vmul.f32 %v3397, %v3416
      %v3434 = vmul.f32 %v3398, %v3416
      %v3435 = vmul.f32 %v3399, %v3416
      %v3436 = vmul.f32 %v3400, %v3416
      %v3437 = vmul.f32 %v3401, %v3416
      %v3438 = vmul.f32 %v3402, %v3416
      %v3439 = vmul.f32 %v3403, %v3416
      %v3440 = vmul.f32 %v3404, %v3416
      %v3441 = vmul.f32 %v3405, %v3416
      %v3442 = vmul.f32 %v3406, %v3416
      %v3443 = vmul.f32 %v3407, %v3416
      %v3444 = vmul.f32 %v3408, %v3416
      %v3445 = vmul.f32 %v3409, %v3416
      %v3446 = vmul.f32 %v3410, %v3416
      %v3447 = vmul.f32 %v3411, %v3416
      %v3448 = vmul.f32 %v3412, %v3416
      %v3449 = vadd.f32 %v3349, %v3417
      %v3450 = vadd.f32 %v3350, %v3418
      %v3451 = vadd.f32 %v3351, %v3419
      %v3452 = vadd.f32 %v3352, %v3420
      %v3453 = vadd.f32 %v3353, %v3421
      %v3454 = vadd.f32 %v3354, %v3422
      %v3455 = vadd.f32 %v3355, %v3423
      %v3456 = vadd.f32 %v3356, %v3424
      %v3457 = vadd.f32 %v3357, %v3425
      %v3458 = vadd.f32 %v3358, %v3426
      %v3459 = vadd.f32 %v3359, %v3427
      %v3460 = vadd.f32 %v3360, %v3428
      %v3461 = vadd.f32 %v3361, %v3429
      %v3462 = vadd.f32 %v3362, %v3430
      %v3463 = vadd.f32 %v3363, %v3431
      %v3464 = vadd.f32 %v3364, %v3432
      %v3465 = vadd.f32 %v3365, %v3433
      %v3466 = vadd.f32 %v3366, %v3434
      %v3467 = vadd.f32 %v3367, %v3435
      %v3468 = vadd.f32 %v3368, %v3436
      %v3469 = vadd.f32 %v3369, %v3437
      %v3470 = vadd.f32 %v3370, %v3438
      %v3471 = vadd.f32 %v3371, %v3439
      %v3472 = vadd.f32 %v3372, %v3440
      %v3473 = vadd.f32 %v3373, %v3441
      %v3474 = vadd.f32 %v3374, %v3442
      %v3475 = vadd.f32 %v3375, %v3443
      %v3476 = vadd.f32 %v3376, %v3444
      %v3477 = vadd.f32 %v3377, %v3445
      %v3478 = vadd.f32 %v3378, %v3446
      %v3479 = vadd.f32 %v3379, %v3447
      %v3480 = vadd.f32 %v3380, %v3448
      %v3481 = vld [vmem:[%s3280 + $0x2] sm:$0xff]
      %v3482 = vld [vmem:[%s3280 + $0xa] sm:$0xff]
      %v3483 = vld [vmem:[%s3280 + $0x1a] sm:$0xff]
      %v3484 = vld [vmem:[%s3280 + $0x22] sm:$0xff]
      %v3485 = vld [vmem:[%s3280 + $0x32] sm:$0xff]
      %v3486 = vld [vmem:[%s3280 + $0x3a] sm:$0xff]
      %v3487 = vld [vmem:[%s3280 + $0x4a] sm:$0xff]
      %v3488 = vld [vmem:[%s3280 + $0x52] sm:$0xff]
      %v3489 = vld [vmem:[%s3280 + $0x62] sm:$0xff]
      %v3490 = vld [vmem:[%s3280 + $0x6a] sm:$0xff]
      %v3491 = vld [vmem:[%s3280 + $0x7a] sm:$0xff]
      %v3492 = vld [vmem:[%s3280 + $0x82] sm:$0xff]
      %v3493 = vld [vmem:[%s3280 + $0x92] sm:$0xff]
      %v3494 = vld [vmem:[%s3280 + $0x9a] sm:$0xff]
      %v3495 = vld [vmem:[%s3280 + $0xaa] sm:$0xff]
      %v3496 = vld [vmem:[%s3280 + $0xb2] sm:$0xff]
      %v3497 = vld [vmem:[%s3280 + $0xc2] sm:$0xff]
      %v3498 = vld [vmem:[%s3280 + $0xca] sm:$0xff]
      %v3499 = vld [vmem:[%s3280 + $0xda] sm:$0xff]
      %v3500 = vld [vmem:[%s3280 + $0xe2] sm:$0xff]
      %v3501 = vld [vmem:[%s3280 + $0xf2] sm:$0xff]
      %v3502 = vld [vmem:[%s3280 + $0xfa] sm:$0xff]
      %v3503 = vld [vmem:[%s3280 + $0x10a] sm:$0xff]
      %v3504 = vld [vmem:[%s3280 + $0x112] sm:$0xff]
      %v3505 = vld [vmem:[%s3280 + $0x122] sm:$0xff]
      %v3506 = vld [vmem:[%s3280 + $0x12a] sm:$0xff]
      %v3507 = vld [vmem:[%s3280 + $0x13a] sm:$0xff]
      %v3508 = vld [vmem:[%s3280 + $0x142] sm:$0xff]
      %v3509 = vld [vmem:[%s3280 + $0x152] sm:$0xff]
      %v3510 = vld [vmem:[%s3280 + $0x15a] sm:$0xff]
      %v3511 = vld [vmem:[%s3280 + $0x16a] sm:$0xff]
      %v3512 = vld [vmem:[%s3280 + $0x172] sm:$0xff]
      %v3513 = vlaneseq
      %v3514 = vshrl.u32 %v3513, 7
      %v3515 = vsub.s32 6, %v3514
      %v3516 = vrot.slane %v1276, %v3515
      %v3517 = vmul.f32 %v3481, %v3516
      %v3518 = vmul.f32 %v3482, %v3516
      %v3519 = vmul.f32 %v3483, %v3516
      %v3520 = vmul.f32 %v3484, %v3516
      %v3521 = vmul.f32 %v3485, %v3516
      %v3522 = vmul.f32 %v3486, %v3516
      %v3523 = vmul.f32 %v3487, %v3516
      %v3524 = vmul.f32 %v3488, %v3516
      %v3525 = vmul.f32 %v3489, %v3516
      %v3526 = vmul.f32 %v3490, %v3516
      %v3527 = vmul.f32 %v3491, %v3516
      %v3528 = vmul.f32 %v3492, %v3516
      %v3529 = vmul.f32 %v3493, %v3516
      %v3530 = vmul.f32 %v3494, %v3516
      %v3531 = vmul.f32 %v3495, %v3516
      %v3532 = vmul.f32 %v3496, %v3516
      %v3533 = vmul.f32 %v3497, %v3516
      %v3534 = vmul.f32 %v3498, %v3516
      %v3535 = vmul.f32 %v3499, %v3516
      %v3536 = vmul.f32 %v3500, %v3516
      %v3537 = vmul.f32 %v3501, %v3516
      %v3538 = vmul.f32 %v3502, %v3516
      %v3539 = vmul.f32 %v3503, %v3516
      %v3540 = vmul.f32 %v3504, %v3516
      %v3541 = vmul.f32 %v3505, %v3516
      %v3542 = vmul.f32 %v3506, %v3516
      %v3543 = vmul.f32 %v3507, %v3516
      %v3544 = vmul.f32 %v3508, %v3516
      %v3545 = vmul.f32 %v3509, %v3516
      %v3546 = vmul.f32 %v3510, %v3516
      %v3547 = vmul.f32 %v3511, %v3516
      %v3548 = vmul.f32 %v3512, %v3516
      %v3549 = vadd.f32 %v3449, %v3517
      %v3550 = vadd.f32 %v3450, %v3518
      %v3551 = vadd.f32 %v3451, %v3519
      %v3552 = vadd.f32 %v3452, %v3520
      %v3553 = vadd.f32 %v3453, %v3521
      %v3554 = vadd.f32 %v3454, %v3522
      %v3555 = vadd.f32 %v3455, %v3523
      %v3556 = vadd.f32 %v3456, %v3524
      %v3557 = vadd.f32 %v3457, %v3525
      %v3558 = vadd.f32 %v3458, %v3526
      %v3559 = vadd.f32 %v3459, %v3527
      %v3560 = vadd.f32 %v3460, %v3528
      %v3561 = vadd.f32 %v3461, %v3529
      %v3562 = vadd.f32 %v3462, %v3530
      %v3563 = vadd.f32 %v3463, %v3531
      %v3564 = vadd.f32 %v3464, %v3532
      %v3565 = vadd.f32 %v3465, %v3533
      %v3566 = vadd.f32 %v3466, %v3534
      %v3567 = vadd.f32 %v3467, %v3535
      %v3568 = vadd.f32 %v3468, %v3536
      %v3569 = vadd.f32 %v3469, %v3537
      %v3570 = vadd.f32 %v3470, %v3538
      %v3571 = vadd.f32 %v3471, %v3539
      %v3572 = vadd.f32 %v3472, %v3540
      %v3573 = vadd.f32 %v3473, %v3541
      %v3574 = vadd.f32 %v3474, %v3542
      %v3575 = vadd.f32 %v3475, %v3543
      %v3576 = vadd.f32 %v3476, %v3544
      %v3577 = vadd.f32 %v3477, %v3545
      %v3578 = vadd.f32 %v3478, %v3546
      %v3579 = vadd.f32 %v3479, %v3547
      %v3580 = vadd.f32 %v3480, %v3548
      %v3581 = vld [vmem:[%s3280 + $0x3] sm:$0xff]
      %v3582 = vld [vmem:[%s3280 + $0xb] sm:$0xff]
      %v3583 = vld [vmem:[%s3280 + $0x1b] sm:$0xff]
      %v3584 = vld [vmem:[%s3280 + $0x23] sm:$0xff]
      %v3585 = vld [vmem:[%s3280 + $0x33] sm:$0xff]
      %v3586 = vld [vmem:[%s3280 + $0x3b] sm:$0xff]
      %v3587 = vld [vmem:[%s3280 + $0x4b] sm:$0xff]
      %v3588 = vld [vmem:[%s3280 + $0x53] sm:$0xff]
      %v3589 = vld [vmem:[%s3280 + $0x63] sm:$0xff]
      %v3590 = vld [vmem:[%s3280 + $0x6b] sm:$0xff]
      %v3591 = vld [vmem:[%s3280 + $0x7b] sm:$0xff]
      %v3592 = vld [vmem:[%s3280 + $0x83] sm:$0xff]
      %v3593 = vld [vmem:[%s3280 + $0x93] sm:$0xff]
      %v3594 = vld [vmem:[%s3280 + $0x9b] sm:$0xff]
      %v3595 = vld [vmem:[%s3280 + $0xab] sm:$0xff]
      %v3596 = vld [vmem:[%s3280 + $0xb3] sm:$0xff]
      %v3597 = vld [vmem:[%s3280 + $0xc3] sm:$0xff]
      %v3598 = vld [vmem:[%s3280 + $0xcb] sm:$0xff]
      %v3599 = vld [vmem:[%s3280 + $0xdb] sm:$0xff]
      %v3600 = vld [vmem:[%s3280 + $0xe3] sm:$0xff]
      %v3601 = vld [vmem:[%s3280 + $0xf3] sm:$0xff]
      %v3602 = vld [vmem:[%s3280 + $0xfb] sm:$0xff]
      %v3603 = vld [vmem:[%s3280 + $0x10b] sm:$0xff]
      %v3604 = vld [vmem:[%s3280 + $0x113] sm:$0xff]
      %v3605 = vld [vmem:[%s3280 + $0x123] sm:$0xff]
      %v3606 = vld [vmem:[%s3280 + $0x12b] sm:$0xff]
      %v3607 = vld [vmem:[%s3280 + $0x13b] sm:$0xff]
      %v3608 = vld [vmem:[%s3280 + $0x143] sm:$0xff]
      %v3609 = vld [vmem:[%s3280 + $0x153] sm:$0xff]
      %v3610 = vld [vmem:[%s3280 + $0x15b] sm:$0xff]
      %v3611 = vld [vmem:[%s3280 + $0x16b] sm:$0xff]
      %v3612 = vld [vmem:[%s3280 + $0x173] sm:$0xff]
      %v3613 = vlaneseq
      %v3614 = vshrl.u32 %v3613, 7
      %v3615 = vsub.s32 7, %v3614
      %v3616 = vrot.slane %v1276, %v3615
      %v3617 = vmul.f32 %v3581, %v3616
      %v3618 = vmul.f32 %v3582, %v3616
      %v3619 = vmul.f32 %v3583, %v3616
      %v3620 = vmul.f32 %v3584, %v3616
      %v3621 = vmul.f32 %v3585, %v3616
      %v3622 = vmul.f32 %v3586, %v3616
      %v3623 = vmul.f32 %v3587, %v3616
      %v3624 = vmul.f32 %v3588, %v3616
      %v3625 = vmul.f32 %v3589, %v3616
      %v3626 = vmul.f32 %v3590, %v3616
      %v3627 = vmul.f32 %v3591, %v3616
      %v3628 = vmul.f32 %v3592, %v3616
      %v3629 = vmul.f32 %v3593, %v3616
      %v3630 = vmul.f32 %v3594, %v3616
      %v3631 = vmul.f32 %v3595, %v3616
      %v3632 = vmul.f32 %v3596, %v3616
      %v3633 = vmul.f32 %v3597, %v3616
      %v3634 = vmul.f32 %v3598, %v3616
      %v3635 = vmul.f32 %v3599, %v3616
      %v3636 = vmul.f32 %v3600, %v3616
      %v3637 = vmul.f32 %v3601, %v3616
      %v3638 = vmul.f32 %v3602, %v3616
      %v3639 = vmul.f32 %v3603, %v3616
      %v3640 = vmul.f32 %v3604, %v3616
      %v3641 = vmul.f32 %v3605, %v3616
      %v3642 = vmul.f32 %v3606, %v3616
      %v3643 = vmul.f32 %v3607, %v3616
      %v3644 = vmul.f32 %v3608, %v3616
      %v3645 = vmul.f32 %v3609, %v3616
      %v3646 = vmul.f32 %v3610, %v3616
      %v3647 = vmul.f32 %v3611, %v3616
      %v3648 = vmul.f32 %v3612, %v3616
      %v3649 = vadd.f32 %v3549, %v3617
      %v3650 = vadd.f32 %v3550, %v3618
      %v3651 = vadd.f32 %v3551, %v3619
      %v3652 = vadd.f32 %v3552, %v3620
      %v3653 = vadd.f32 %v3553, %v3621
      %v3654 = vadd.f32 %v3554, %v3622
      %v3655 = vadd.f32 %v3555, %v3623
      %v3656 = vadd.f32 %v3556, %v3624
      %v3657 = vadd.f32 %v3557, %v3625
      %v3658 = vadd.f32 %v3558, %v3626
      %v3659 = vadd.f32 %v3559, %v3627
      %v3660 = vadd.f32 %v3560, %v3628
      %v3661 = vadd.f32 %v3561, %v3629
      %v3662 = vadd.f32 %v3562, %v3630
      %v3663 = vadd.f32 %v3563, %v3631
      %v3664 = vadd.f32 %v3564, %v3632
      %v3665 = vadd.f32 %v3565, %v3633
      %v3666 = vadd.f32 %v3566, %v3634
      %v3667 = vadd.f32 %v3567, %v3635
      %v3668 = vadd.f32 %v3568, %v3636
      %v3669 = vadd.f32 %v3569, %v3637
      %v3670 = vadd.f32 %v3570, %v3638
      %v3671 = vadd.f32 %v3571, %v3639
      %v3672 = vadd.f32 %v3572, %v3640
      %v3673 = vadd.f32 %v3573, %v3641
      %v3674 = vadd.f32 %v3574, %v3642
      %v3675 = vadd.f32 %v3575, %v3643
      %v3676 = vadd.f32 %v3576, %v3644
      %v3677 = vadd.f32 %v3577, %v3645
      %v3678 = vadd.f32 %v3578, %v3646
      %v3679 = vadd.f32 %v3579, %v3647
      %v3680 = vadd.f32 %v3580, %v3648
      %v3681 = vld [vmem:[%s3280 + $0x4] sm:$0xff]
      %v3682 = vld [vmem:[%s3280 + $0xc] sm:$0xff]
      %v3683 = vld [vmem:[%s3280 + $0x1c] sm:$0xff]
      %v3684 = vld [vmem:[%s3280 + $0x24] sm:$0xff]
      %v3685 = vld [vmem:[%s3280 + $0x34] sm:$0xff]
      %v3686 = vld [vmem:[%s3280 + $0x3c] sm:$0xff]
      %v3687 = vld [vmem:[%s3280 + $0x4c] sm:$0xff]
      %v3688 = vld [vmem:[%s3280 + $0x54] sm:$0xff]
      %v3689 = vld [vmem:[%s3280 + $0x64] sm:$0xff]
      %v3690 = vld [vmem:[%s3280 + $0x6c] sm:$0xff]
      %v3691 = vld [vmem:[%s3280 + $0x7c] sm:$0xff]
      %v3692 = vld [vmem:[%s3280 + $0x84] sm:$0xff]
      %v3693 = vld [vmem:[%s3280 + $0x94] sm:$0xff]
      %v3694 = vld [vmem:[%s3280 + $0x9c] sm:$0xff]
      %v3695 = vld [vmem:[%s3280 + $0xac] sm:$0xff]
      %v3696 = vld [vmem:[%s3280 + $0xb4] sm:$0xff]
      %v3697 = vld [vmem:[%s3280 + $0xc4] sm:$0xff]
      %v3698 = vld [vmem:[%s3280 + $0xcc] sm:$0xff]
      %v3699 = vld [vmem:[%s3280 + $0xdc] sm:$0xff]
      %v3700 = vld [vmem:[%s3280 + $0xe4] sm:$0xff]
      %v3701 = vld [vmem:[%s3280 + $0xf4] sm:$0xff]
      %v3702 = vld [vmem:[%s3280 + $0xfc] sm:$0xff]
      %v3703 = vld [vmem:[%s3280 + $0x10c] sm:$0xff]
      %v3704 = vld [vmem:[%s3280 + $0x114] sm:$0xff]
      %v3705 = vld [vmem:[%s3280 + $0x124] sm:$0xff]
      %v3706 = vld [vmem:[%s3280 + $0x12c] sm:$0xff]
      %v3707 = vld [vmem:[%s3280 + $0x13c] sm:$0xff]
      %v3708 = vld [vmem:[%s3280 + $0x144] sm:$0xff]
      %v3709 = vld [vmem:[%s3280 + $0x154] sm:$0xff]
      %v3710 = vld [vmem:[%s3280 + $0x15c] sm:$0xff]
      %v3711 = vld [vmem:[%s3280 + $0x16c] sm:$0xff]
      %v3712 = vld [vmem:[%s3280 + $0x174] sm:$0xff]
      %v3713 = vlaneseq
      %v3714 = vshrl.u32 %v3713, 7
      %v3715 = vsub.s32 0, %v3714
      %v3716 = vrot.slane %v1277, %v3715
      %v3717 = vmul.f32 %v3681, %v3716
      %v3718 = vmul.f32 %v3682, %v3716
      %v3719 = vmul.f32 %v3683, %v3716
      %v3720 = vmul.f32 %v3684, %v3716
      %v3721 = vmul.f32 %v3685, %v3716
      %v3722 = vmul.f32 %v3686, %v3716
      %v3723 = vmul.f32 %v3687, %v3716
      %v3724 = vmul.f32 %v3688, %v3716
      %v3725 = vmul.f32 %v3689, %v3716
      %v3726 = vmul.f32 %v3690, %v3716
      %v3727 = vmul.f32 %v3691, %v3716
      %v3728 = vmul.f32 %v3692, %v3716
      %v3729 = vmul.f32 %v3693, %v3716
      %v3730 = vmul.f32 %v3694, %v3716
      %v3731 = vmul.f32 %v3695, %v3716
      %v3732 = vmul.f32 %v3696, %v3716
      %v3733 = vmul.f32 %v3697, %v3716
      %v3734 = vmul.f32 %v3698, %v3716
      %v3735 = vmul.f32 %v3699, %v3716
      %v3736 = vmul.f32 %v3700, %v3716
      %v3737 = vmul.f32 %v3701, %v3716
      %v3738 = vmul.f32 %v3702, %v3716
      %v3739 = vmul.f32 %v3703, %v3716
      %v3740 = vmul.f32 %v3704, %v3716
      %v3741 = vmul.f32 %v3705, %v3716
      %v3742 = vmul.f32 %v3706, %v3716
      %v3743 = vmul.f32 %v3707, %v3716
      %v3744 = vmul.f32 %v3708, %v3716
      %v3745 = vmul.f32 %v3709, %v3716
      %v3746 = vmul.f32 %v3710, %v3716
      %v3747 = vmul.f32 %v3711, %v3716
      %v3748 = vmul.f32 %v3712, %v3716
      %v3749 = vadd.f32 %v3649, %v3717
      %v3750 = vadd.f32 %v3650, %v3718
      %v3751 = vadd.f32 %v3651, %v3719
      %v3752 = vadd.f32 %v3652, %v3720
      %v3753 = vadd.f32 %v3653, %v3721
      %v3754 = vadd.f32 %v3654, %v3722
      %v3755 = vadd.f32 %v3655, %v3723
      %v3756 = vadd.f32 %v3656, %v3724
      %v3757 = vadd.f32 %v3657, %v3725
      %v3758 = vadd.f32 %v3658, %v3726
      %v3759 = vadd.f32 %v3659, %v3727
      %v3760 = vadd.f32 %v3660, %v3728
      %v3761 = vadd.f32 %v3661, %v3729
      %v3762 = vadd.f32 %v3662, %v3730
      %v3763 = vadd.f32 %v3663, %v3731
      %v3764 = vadd.f32 %v3664, %v3732
      %v3765 = vadd.f32 %v3665, %v3733
      %v3766 = vadd.f32 %v3666, %v3734
      %v3767 = vadd.f32 %v3667, %v3735
      %v3768 = vadd.f32 %v3668, %v3736
      %v3769 = vadd.f32 %v3669, %v3737
      %v3770 = vadd.f32 %v3670, %v3738
      %v3771 = vadd.f32 %v3671, %v3739
      %v3772 = vadd.f32 %v3672, %v3740
      %v3773 = vadd.f32 %v3673, %v3741
      %v3774 = vadd.f32 %v3674, %v3742
      %v3775 = vadd.f32 %v3675, %v3743
      %v3776 = vadd.f32 %v3676, %v3744
      %v3777 = vadd.f32 %v3677, %v3745
      %v3778 = vadd.f32 %v3678, %v3746
      %v3779 = vadd.f32 %v3679, %v3747
      %v3780 = vadd.f32 %v3680, %v3748
      %v3781 = vld [vmem:[%s6] sm:$0x1]
      %v3783 = vlaneseq
      %v3784 = vshrl.u32 %v3783, 7
      %v3785 = vsub.s32 0, %v3784
      %v3786 = vrot.slane %v3781, %v3785
      %v3788 = vadd.f32 %v3749, %v3786
      %v3789 = vadd.f32 %v3750, %v3786
      %v3790 = vadd.f32 %v3751, %v3786
      %v3791 = vadd.f32 %v3752, %v3786
      %v3792 = vadd.f32 %v3753, %v3786
      %v3793 = vadd.f32 %v3754, %v3786
      %v3794 = vadd.f32 %v3755, %v3786
      %v3795 = vadd.f32 %v3756, %v3786
      %v3796 = vadd.f32 %v3757, %v3786
      %v3797 = vadd.f32 %v3758, %v3786
      %v3798 = vadd.f32 %v3759, %v3786
      %v3799 = vadd.f32 %v3760, %v3786
      %v3800 = vadd.f32 %v3761, %v3786
      %v3801 = vadd.f32 %v3762, %v3786
      %v3802 = vadd.f32 %v3763, %v3786
      %v3803 = vadd.f32 %v3764, %v3786
      %v3804 = vadd.f32 %v3765, %v3786
      %v3805 = vadd.f32 %v3766, %v3786
      %v3806 = vadd.f32 %v3767, %v3786
      %v3807 = vadd.f32 %v3768, %v3786
      %v3808 = vadd.f32 %v3769, %v3786
      %v3809 = vadd.f32 %v3770, %v3786
      %v3810 = vadd.f32 %v3771, %v3786
      %v3811 = vadd.f32 %v3772, %v3786
      %v3812 = vadd.f32 %v3773, %v3786
      %v3813 = vadd.f32 %v3774, %v3786
      %v3814 = vadd.f32 %v3775, %v3786
      %v3815 = vadd.f32 %v3776, %v3786
      %v3816 = vadd.f32 %v3777, %v3786
      %v3817 = vadd.f32 %v3778, %v3786
      %v3818 = vadd.f32 %v3779, %v3786
      %v3819 = vadd.f32 %v3780, %v3786
      %3852 = vrot.lane.b32.xlu0 %v3788, 4
      %v3853 = vpop.permute.xlu0 %3852
      %3854 = vrot.lane.b32.xlu0 %v3789, 4
      %v3855 = vpop.permute.xlu0 %3854
      %3856 = vrot.lane.b32.xlu0 %v3790, 4
      %v3857 = vpop.permute.xlu0 %3856
      %3858 = vrot.lane.b32.xlu0 %v3791, 4
      %v3859 = vpop.permute.xlu0 %3858
      %3860 = vrot.lane.b32.xlu0 %v3792, 4
      %v3861 = vpop.permute.xlu0 %3860
      %3862 = vrot.lane.b32.xlu0 %v3793, 4
      %v3863 = vpop.permute.xlu0 %3862
      %3864 = vrot.lane.b32.xlu0 %v3794, 4
      %v3865 = vpop.permute.xlu0 %3864
      %3866 = vrot.lane.b32.xlu0 %v3795, 4
      %v3867 = vpop.permute.xlu0 %3866
      %3868 = vrot.lane.b32.xlu0 %v3796, 4
      %v3869 = vpop.permute.xlu0 %3868
      %3870 = vrot.lane.b32.xlu0 %v3797, 4
      %v3871 = vpop.permute.xlu0 %3870
      %3872 = vrot.lane.b32.xlu0 %v3798, 4
      %v3873 = vpop.permute.xlu0 %3872
      %3874 = vrot.lane.b32.xlu0 %v3799, 4
      %v3875 = vpop.permute.xlu0 %3874
      %3876 = vrot.lane.b32.xlu0 %v3800, 4
      %v3877 = vpop.permute.xlu0 %3876
      %3878 = vrot.lane.b32.xlu0 %v3801, 4
      %v3879 = vpop.permute.xlu0 %3878
      %3880 = vrot.lane.b32.xlu0 %v3802, 4
      %v3881 = vpop.permute.xlu0 %3880
      %3882 = vrot.lane.b32.xlu0 %v3803, 4
      %v3883 = vpop.permute.xlu0 %3882
      %3884 = vrot.lane.b32.xlu0 %v3804, 4
      %v3885 = vpop.permute.xlu0 %3884
      %3886 = vrot.lane.b32.xlu0 %v3805, 4
      %v3887 = vpop.permute.xlu0 %3886
      %3888 = vrot.lane.b32.xlu0 %v3806, 4
      %v3889 = vpop.permute.xlu0 %3888
      %3890 = vrot.lane.b32.xlu0 %v3807, 4
      %v3891 = vpop.permute.xlu0 %3890
      %3892 = vrot.lane.b32.xlu0 %v3808, 4
      %v3893 = vpop.permute.xlu0 %3892
      %3894 = vrot.lane.b32.xlu0 %v3809, 4
      %v3895 = vpop.permute.xlu0 %3894
      %3896 = vrot.lane.b32.xlu0 %v3810, 4
      %v3897 = vpop.permute.xlu0 %3896
      %3898 = vrot.lane.b32.xlu0 %v3811, 4
      %v3899 = vpop.permute.xlu0 %3898
      %3900 = vrot.lane.b32.xlu0 %v3812, 4
      %v3901 = vpop.permute.xlu0 %3900
      %3902 = vrot.lane.b32.xlu0 %v3813, 4
      %v3903 = vpop.permute.xlu0 %3902
      %3904 = vrot.lane.b32.xlu0 %v3814, 4
      %v3905 = vpop.permute.xlu0 %3904
      %3906 = vrot.lane.b32.xlu0 %v3815, 4
      %v3907 = vpop.permute.xlu0 %3906
      %3908 = vrot.lane.b32.xlu0 %v3816, 4
      %v3909 = vpop.permute.xlu0 %3908
      %3910 = vrot.lane.b32.xlu0 %v3817, 4
      %v3911 = vpop.permute.xlu0 %3910
      %3912 = vrot.lane.b32.xlu0 %v3818, 4
      %v3913 = vpop.permute.xlu0 %3912
      %3914 = vrot.lane.b32.xlu0 %v3819, 4
      %v3915 = vpop.permute.xlu0 %3914
      %v3948 = vmul.f32 %v1036, %v3853
      %v3949 = vmul.f32 %v1041, %v3855
      %v3950 = vmul.f32 %v1046, %v3857
      %v3951 = vmul.f32 %v1051, %v3859
      %v3952 = vmul.f32 %v1056, %v3861
      %v3953 = vmul.f32 %v1061, %v3863
      %v3954 = vmul.f32 %v1066, %v3865
      %v3955 = vmul.f32 %v1071, %v3867
      %v3956 = vmul.f32 %v1076, %v3869
      %v3957 = vmul.f32 %v1081, %v3871
      %v3958 = vmul.f32 %v1086, %v3873
      %v3959 = vmul.f32 %v1091, %v3875
      %v3960 = vmul.f32 %v1096, %v3877
      %v3961 = vmul.f32 %v1101, %v3879
      %v3962 = vmul.f32 %v1106, %v3881
      %v3963 = vmul.f32 %v1111, %v3883
      %v3964 = vmul.f32 %v1116, %v3885
      %v3965 = vmul.f32 %v1121, %v3887
      %v3966 = vmul.f32 %v1126, %v3889
      %v3967 = vmul.f32 %v1131, %v3891
      %v3968 = vmul.f32 %v1136, %v3893
      %v3969 = vmul.f32 %v1141, %v3895
      %v3970 = vmul.f32 %v1146, %v3897
      %v3971 = vmul.f32 %v1151, %v3899
      %v3972 = vmul.f32 %v1156, %v3901
      %v3973 = vmul.f32 %v1161, %v3903
      %v3974 = vmul.f32 %v1166, %v3905
      %v3975 = vmul.f32 %v1171, %v3907
      %v3976 = vmul.f32 %v1176, %v3909
      %v3977 = vmul.f32 %v1181, %v3911
      %v3978 = vmul.f32 %v1186, %v3913
      %v3979 = vmul.f32 %v1191, %v3915
      %v3980 = vmul.f32 %v3948, 0.5
      %v3981 = vmul.f32 %v3949, 0.5
      %v3982 = vmul.f32 %v3950, 0.5
      %v3983 = vmul.f32 %v3951, 0.5
      %v3984 = vmul.f32 %v3952, 0.5
      %v3985 = vmul.f32 %v3953, 0.5
      %v3986 = vmul.f32 %v3954, 0.5
      %v3987 = vmul.f32 %v3955, 0.5
      %v3988 = vmul.f32 %v3956, 0.5
      %v3989 = vmul.f32 %v3957, 0.5
      %v3990 = vmul.f32 %v3958, 0.5
      %v3991 = vmul.f32 %v3959, 0.5
      %v3992 = vmul.f32 %v3960, 0.5
      %v3993 = vmul.f32 %v3961, 0.5
      %v3994 = vmul.f32 %v3962, 0.5
      %v3995 = vmul.f32 %v3963, 0.5
      %v3996 = vmul.f32 %v3964, 0.5
      %v3997 = vmul.f32 %v3965, 0.5
      %v3998 = vmul.f32 %v3966, 0.5
      %v3999 = vmul.f32 %v3967, 0.5
      %v4000 = vmul.f32 %v3968, 0.5
      %v4001 = vmul.f32 %v3969, 0.5
      %v4002 = vmul.f32 %v3970, 0.5
      %v4003 = vmul.f32 %v3971, 0.5
      %v4004 = vmul.f32 %v3972, 0.5
      %v4005 = vmul.f32 %v3973, 0.5
      %v4006 = vmul.f32 %v3974, 0.5
      %v4007 = vmul.f32 %v3975, 0.5
      %v4008 = vmul.f32 %v3976, 0.5
      %v4009 = vmul.f32 %v3977, 0.5
      %v4010 = vmul.f32 %v3978, 0.5
      %v4011 = vmul.f32 %v3979, 0.5
      %v4012 = vmul.f32 %v3948, 0.70710677
      %v4013 = vmul.f32 %v3949, 0.70710677
      %v4014 = vmul.f32 %v3950, 0.70710677
      %v4015 = vmul.f32 %v3951, 0.70710677
      %v4016 = vmul.f32 %v3952, 0.70710677
      %v4017 = vmul.f32 %v3953, 0.70710677
      %v4018 = vmul.f32 %v3954, 0.70710677
      %v4019 = vmul.f32 %v3955, 0.70710677
      %v4020 = vmul.f32 %v3956, 0.70710677
      %v4021 = vmul.f32 %v3957, 0.70710677
      %v4022 = vmul.f32 %v3958, 0.70710677
      %v4023 = vmul.f32 %v3959, 0.70710677
      %v4024 = vmul.f32 %v3960, 0.70710677
      %v4025 = vmul.f32 %v3961, 0.70710677
      %v4026 = vmul.f32 %v3962, 0.70710677
      %v4027 = vmul.f32 %v3963, 0.70710677
      %v4028 = vmul.f32 %v3964, 0.70710677
      %v4029 = vmul.f32 %v3965, 0.70710677
      %v4030 = vmul.f32 %v3966, 0.70710677
      %v4031 = vmul.f32 %v3967, 0.70710677
      %v4032 = vmul.f32 %v3968, 0.70710677
      %v4033 = vmul.f32 %v3969, 0.70710677
      %v4034 = vmul.f32 %v3970, 0.70710677
      %v4035 = vmul.f32 %v3971, 0.70710677
      %v4036 = vmul.f32 %v3972, 0.70710677
      %v4037 = vmul.f32 %v3973, 0.70710677
      %v4038 = vmul.f32 %v3974, 0.70710677
      %v4039 = vmul.f32 %v3975, 0.70710677
      %v4040 = vmul.f32 %v3976, 0.70710677
      %v4041 = vmul.f32 %v3977, 0.70710677
      %v4042 = vmul.f32 %v3978, 0.70710677
      %v4043 = vmul.f32 %v3979, 0.70710677
      %vm4044 = vcmp.ge.f32.partialorder %v4012, 0.0
      %vm4045 = vcmp.ge.f32.partialorder %v4013, 0.0
      %vm4046 = vcmp.ge.f32.partialorder %v4014, 0.0
      %vm4047 = vcmp.ge.f32.partialorder %v4015, 0.0
      %vm4048 = vcmp.ge.f32.partialorder %v4016, 0.0
      %vm4049 = vcmp.ge.f32.partialorder %v4017, 0.0
      %vm4050 = vcmp.ge.f32.partialorder %v4018, 0.0
      %vm4051 = vcmp.ge.f32.partialorder %v4019, 0.0
      %vm4052 = vcmp.ge.f32.partialorder %v4020, 0.0
      %vm4053 = vcmp.ge.f32.partialorder %v4021, 0.0
      %vm4054 = vcmp.ge.f32.partialorder %v4022, 0.0
      %vm4055 = vcmp.ge.f32.partialorder %v4023, 0.0
      %vm4056 = vcmp.ge.f32.partialorder %v4024, 0.0
      %vm4057 = vcmp.ge.f32.partialorder %v4025, 0.0
      %vm4058 = vcmp.ge.f32.partialorder %v4026, 0.0
      %vm4059 = vcmp.ge.f32.partialorder %v4027, 0.0
      %vm4060 = vcmp.ge.f32.partialorder %v4028, 0.0
      %vm4061 = vcmp.ge.f32.partialorder %v4029, 0.0
      %vm4062 = vcmp.ge.f32.partialorder %v4030, 0.0
      %vm4063 = vcmp.ge.f32.partialorder %v4031, 0.0
      %vm4064 = vcmp.ge.f32.partialorder %v4032, 0.0
      %vm4065 = vcmp.ge.f32.partialorder %v4033, 0.0
      %vm4066 = vcmp.ge.f32.partialorder %v4034, 0.0
      %vm4067 = vcmp.ge.f32.partialorder %v4035, 0.0
      %vm4068 = vcmp.ge.f32.partialorder %v4036, 0.0
      %vm4069 = vcmp.ge.f32.partialorder %v4037, 0.0
      %vm4070 = vcmp.ge.f32.partialorder %v4038, 0.0
      %vm4071 = vcmp.ge.f32.partialorder %v4039, 0.0
      %vm4072 = vcmp.ge.f32.partialorder %v4040, 0.0
      %vm4073 = vcmp.ge.f32.partialorder %v4041, 0.0
      %vm4074 = vcmp.ge.f32.partialorder %v4042, 0.0
      %vm4075 = vcmp.ge.f32.partialorder %v4043, 0.0
      %v4076 = vsel %vm4044, 1.0, -1.0
      %v4077 = vsel %vm4045, 1.0, -1.0
      %v4078 = vsel %vm4046, 1.0, -1.0
      %v4079 = vsel %vm4047, 1.0, -1.0
      %v4080 = vsel %vm4048, 1.0, -1.0
      %v4081 = vsel %vm4049, 1.0, -1.0
      %v4082 = vsel %vm4050, 1.0, -1.0
      %v4083 = vsel %vm4051, 1.0, -1.0
      %v4084 = vsel %vm4052, 1.0, -1.0
      %v4085 = vsel %vm4053, 1.0, -1.0
      %v4086 = vsel %vm4054, 1.0, -1.0
      %v4087 = vsel %vm4055, 1.0, -1.0
      %v4088 = vsel %vm4056, 1.0, -1.0
      %v4089 = vsel %vm4057, 1.0, -1.0
      %v4090 = vsel %vm4058, 1.0, -1.0
      %v4091 = vsel %vm4059, 1.0, -1.0
      %v4092 = vsel %vm4060, 1.0, -1.0
      %v4093 = vsel %vm4061, 1.0, -1.0
      %v4094 = vsel %vm4062, 1.0, -1.0
      %v4095 = vsel %vm4063, 1.0, -1.0
      %v4096 = vsel %vm4064, 1.0, -1.0
      %v4097 = vsel %vm4065, 1.0, -1.0
      %v4098 = vsel %vm4066, 1.0, -1.0
      %v4099 = vsel %vm4067, 1.0, -1.0
      %v4100 = vsel %vm4068, 1.0, -1.0
      %v4101 = vsel %vm4069, 1.0, -1.0
      %v4102 = vsel %vm4070, 1.0, -1.0
      %v4103 = vsel %vm4071, 1.0, -1.0
      %v4104 = vsel %vm4072, 1.0, -1.0
      %v4105 = vsel %vm4073, 1.0, -1.0
      %v4106 = vsel %vm4074, 1.0, -1.0
      %v4107 = vsel %vm4075, 1.0, -1.0
      %v4108 = vand.u32 2147483647, %v4012
      %v4109 = vand.u32 2147483647, %v4013
      %v4110 = vand.u32 2147483647, %v4014
      %v4111 = vand.u32 2147483647, %v4015
      %v4112 = vand.u32 2147483647, %v4016
      %v4113 = vand.u32 2147483647, %v4017
      %v4114 = vand.u32 2147483647, %v4018
      %v4115 = vand.u32 2147483647, %v4019
      %v4116 = vand.u32 2147483647, %v4020
      %v4117 = vand.u32 2147483647, %v4021
      %v4118 = vand.u32 2147483647, %v4022
      %v4119 = vand.u32 2147483647, %v4023
      %v4120 = vand.u32 2147483647, %v4024
      %v4121 = vand.u32 2147483647, %v4025
      %v4122 = vand.u32 2147483647, %v4026
      %v4123 = vand.u32 2147483647, %v4027
      %v4124 = vand.u32 2147483647, %v4028
      %v4125 = vand.u32 2147483647, %v4029
      %v4126 = vand.u32 2147483647, %v4030
      %v4127 = vand.u32 2147483647, %v4031
      %v4128 = vand.u32 2147483647, %v4032
      %v4129 = vand.u32 2147483647, %v4033
      %v4130 = vand.u32 2147483647, %v4034
      %v4131 = vand.u32 2147483647, %v4035
      %v4132 = vand.u32 2147483647, %v4036
      %v4133 = vand.u32 2147483647, %v4037
      %v4134 = vand.u32 2147483647, %v4038
      %v4135 = vand.u32 2147483647, %v4039
      %v4136 = vand.u32 2147483647, %v4040
      %v4137 = vand.u32 2147483647, %v4041
      %v4138 = vand.u32 2147483647, %v4042
      %v4139 = vand.u32 2147483647, %v4043
      %v4140 = vmul.f32 %v4108, 0.3275911
      %v4141 = vmul.f32 %v4109, 0.3275911
      %v4142 = vmul.f32 %v4110, 0.3275911
      %v4143 = vmul.f32 %v4111, 0.3275911
      %v4144 = vmul.f32 %v4112, 0.3275911
      %v4145 = vmul.f32 %v4113, 0.3275911
      %v4146 = vmul.f32 %v4114, 0.3275911
      %v4147 = vmul.f32 %v4115, 0.3275911
      %v4148 = vmul.f32 %v4116, 0.3275911
      %v4149 = vmul.f32 %v4117, 0.3275911
      %v4150 = vmul.f32 %v4118, 0.3275911
      %v4151 = vmul.f32 %v4119, 0.3275911
      %v4152 = vmul.f32 %v4120, 0.3275911
      %v4153 = vmul.f32 %v4121, 0.3275911
      %v4154 = vmul.f32 %v4122, 0.3275911
      %v4155 = vmul.f32 %v4123, 0.3275911
      %v4156 = vmul.f32 %v4124, 0.3275911
      %v4157 = vmul.f32 %v4125, 0.3275911
      %v4158 = vmul.f32 %v4126, 0.3275911
      %v4159 = vmul.f32 %v4127, 0.3275911
      %v4160 = vmul.f32 %v4128, 0.3275911
      %v4161 = vmul.f32 %v4129, 0.3275911
      %v4162 = vmul.f32 %v4130, 0.3275911
      %v4163 = vmul.f32 %v4131, 0.3275911
      %v4164 = vmul.f32 %v4132, 0.3275911
      %v4165 = vmul.f32 %v4133, 0.3275911
      %v4166 = vmul.f32 %v4134, 0.3275911
      %v4167 = vmul.f32 %v4135, 0.3275911
      %v4168 = vmul.f32 %v4136, 0.3275911
      %v4169 = vmul.f32 %v4137, 0.3275911
      %v4170 = vmul.f32 %v4138, 0.3275911
      %v4171 = vmul.f32 %v4139, 0.3275911
      %v4172 = vadd.f32 %v4140, 1.0
      %v4173 = vadd.f32 %v4141, 1.0
      %v4174 = vadd.f32 %v4142, 1.0
      %v4175 = vadd.f32 %v4143, 1.0
      %v4176 = vadd.f32 %v4144, 1.0
      %v4177 = vadd.f32 %v4145, 1.0
      %v4178 = vadd.f32 %v4146, 1.0
      %v4179 = vadd.f32 %v4147, 1.0
      %v4180 = vadd.f32 %v4148, 1.0
      %v4181 = vadd.f32 %v4149, 1.0
      %v4182 = vadd.f32 %v4150, 1.0
      %v4183 = vadd.f32 %v4151, 1.0
      %v4184 = vadd.f32 %v4152, 1.0
      %v4185 = vadd.f32 %v4153, 1.0
      %v4186 = vadd.f32 %v4154, 1.0
      %v4187 = vadd.f32 %v4155, 1.0
      %v4188 = vadd.f32 %v4156, 1.0
      %v4189 = vadd.f32 %v4157, 1.0
      %v4190 = vadd.f32 %v4158, 1.0
      %v4191 = vadd.f32 %v4159, 1.0
      %v4192 = vadd.f32 %v4160, 1.0
      %v4193 = vadd.f32 %v4161, 1.0
      %v4194 = vadd.f32 %v4162, 1.0
      %v4195 = vadd.f32 %v4163, 1.0
      %v4196 = vadd.f32 %v4164, 1.0
      %v4197 = vadd.f32 %v4165, 1.0
      %v4198 = vadd.f32 %v4166, 1.0
      %v4199 = vadd.f32 %v4167, 1.0
      %v4200 = vadd.f32 %v4168, 1.0
      %v4201 = vadd.f32 %v4169, 1.0
      %v4202 = vadd.f32 %v4170, 1.0
      %v4203 = vadd.f32 %v4171, 1.0
      %v4204 = vrcp.pop %v4172
      %v4205 = vmul.f32 1.0, %v4204
      %v4206 = vrcp.pop %v4173
      %v4207 = vmul.f32 1.0, %v4206
      %v4208 = vrcp.pop %v4174
      %v4209 = vmul.f32 1.0, %v4208
      %v4210 = vrcp.pop %v4175
      %v4211 = vmul.f32 1.0, %v4210
      %v4212 = vrcp.pop %v4176
      %v4213 = vmul.f32 1.0, %v4212
      %v4214 = vrcp.pop %v4177
      %v4215 = vmul.f32 1.0, %v4214
      %v4216 = vrcp.pop %v4178
      %v4217 = vmul.f32 1.0, %v4216
      %v4218 = vrcp.pop %v4179
      %v4219 = vmul.f32 1.0, %v4218
      %v4220 = vrcp.pop %v4180
      %v4221 = vmul.f32 1.0, %v4220
      %v4222 = vrcp.pop %v4181
      %v4223 = vmul.f32 1.0, %v4222
      %v4224 = vrcp.pop %v4182
      %v4225 = vmul.f32 1.0, %v4224
      %v4226 = vrcp.pop %v4183
      %v4227 = vmul.f32 1.0, %v4226
      %v4228 = vrcp.pop %v4184
      %v4229 = vmul.f32 1.0, %v4228
      %v4230 = vrcp.pop %v4185
      %v4231 = vmul.f32 1.0, %v4230
      %v4232 = vrcp.pop %v4186
      %v4233 = vmul.f32 1.0, %v4232
      %v4234 = vrcp.pop %v4187
      %v4235 = vmul.f32 1.0, %v4234
      %v4236 = vrcp.pop %v4188
      %v4237 = vmul.f32 1.0, %v4236
      %v4238 = vrcp.pop %v4189
      %v4239 = vmul.f32 1.0, %v4238
      %v4240 = vrcp.pop %v4190
      %v4241 = vmul.f32 1.0, %v4240
      %v4242 = vrcp.pop %v4191
      %v4243 = vmul.f32 1.0, %v4242
      %v4244 = vrcp.pop %v4192
      %v4245 = vmul.f32 1.0, %v4244
      %v4246 = vrcp.pop %v4193
      %v4247 = vmul.f32 1.0, %v4246
      %v4248 = vrcp.pop %v4194
      %v4249 = vmul.f32 1.0, %v4248
      %v4250 = vrcp.pop %v4195
      %v4251 = vmul.f32 1.0, %v4250
      %v4252 = vrcp.pop %v4196
      %v4253 = vmul.f32 1.0, %v4252
      %v4254 = vrcp.pop %v4197
      %v4255 = vmul.f32 1.0, %v4254
      %v4256 = vrcp.pop %v4198
      %v4257 = vmul.f32 1.0, %v4256
      %v4258 = vrcp.pop %v4199
      %v4259 = vmul.f32 1.0, %v4258
      %v4260 = vrcp.pop %v4200
      %v4261 = vmul.f32 1.0, %v4260
      %v4262 = vrcp.pop %v4201
      %v4263 = vmul.f32 1.0, %v4262
      %v4264 = vrcp.pop %v4202
      %v4265 = vmul.f32 1.0, %v4264
      %v4266 = vrcp.pop %v4203
      %v4267 = vmul.f32 1.0, %v4266
      %v4268 = vmul.f32 %v4205, 1.0614054
      %v4269 = vmul.f32 %v4207, 1.0614054
      %v4270 = vmul.f32 %v4209, 1.0614054
      %v4271 = vmul.f32 %v4211, 1.0614054
      %v4272 = vmul.f32 %v4213, 1.0614054
      %v4273 = vmul.f32 %v4215, 1.0614054
      %v4274 = vmul.f32 %v4217, 1.0614054
      %v4275 = vmul.f32 %v4219, 1.0614054
      %v4276 = vmul.f32 %v4221, 1.0614054
      %v4277 = vmul.f32 %v4223, 1.0614054
      %v4278 = vmul.f32 %v4225, 1.0614054
      %v4279 = vmul.f32 %v4227, 1.0614054
      %v4280 = vmul.f32 %v4229, 1.0614054
      %v4281 = vmul.f32 %v4231, 1.0614054
      %v4282 = vmul.f32 %v4233, 1.0614054
      %v4283 = vmul.f32 %v4235, 1.0614054
      %v4284 = vmul.f32 %v4237, 1.0614054
      %v4285 = vmul.f32 %v4239, 1.0614054
      %v4286 = vmul.f32 %v4241, 1.0614054
      %v4287 = vmul.f32 %v4243, 1.0614054
      %v4288 = vmul.f32 %v4245, 1.0614054
      %v4289 = vmul.f32 %v4247, 1.0614054
      %v4290 = vmul.f32 %v4249, 1.0614054
      %v4291 = vmul.f32 %v4251, 1.0614054
      %v4292 = vmul.f32 %v4253, 1.0614054
      %v4293 = vmul.f32 %v4255, 1.0614054
      %v4294 = vmul.f32 %v4257, 1.0614054
      %v4295 = vmul.f32 %v4259, 1.0614054
      %v4296 = vmul.f32 %v4261, 1.0614054
      %v4297 = vmul.f32 %v4263, 1.0614054
      %v4298 = vmul.f32 %v4265, 1.0614054
      %v4299 = vmul.f32 %v4267, 1.0614054
      %v4300 = vadd.f32 %v4268, -1.4531521
      %v4301 = vadd.f32 %v4269, -1.4531521
      %v4302 = vadd.f32 %v4270, -1.4531521
      %v4303 = vadd.f32 %v4271, -1.4531521
      %v4304 = vadd.f32 %v4272, -1.4531521
      %v4305 = vadd.f32 %v4273, -1.4531521
      %v4306 = vadd.f32 %v4274, -1.4531521
      %v4307 = vadd.f32 %v4275, -1.4531521
      %v4308 = vadd.f32 %v4276, -1.4531521
      %v4309 = vadd.f32 %v4277, -1.4531521
      %v4310 = vadd.f32 %v4278, -1.4531521
      %v4311 = vadd.f32 %v4279, -1.4531521
      %v4312 = vadd.f32 %v4280, -1.4531521
      %v4313 = vadd.f32 %v4281, -1.4531521
      %v4314 = vadd.f32 %v4282, -1.4531521
      %v4315 = vadd.f32 %v4283, -1.4531521
      %v4316 = vadd.f32 %v4284, -1.4531521
      %v4317 = vadd.f32 %v4285, -1.4531521
      %v4318 = vadd.f32 %v4286, -1.4531521
      %v4319 = vadd.f32 %v4287, -1.4531521
      %v4320 = vadd.f32 %v4288, -1.4531521
      %v4321 = vadd.f32 %v4289, -1.4531521
      %v4322 = vadd.f32 %v4290, -1.4531521
      %v4323 = vadd.f32 %v4291, -1.4531521
      %v4324 = vadd.f32 %v4292, -1.4531521
      %v4325 = vadd.f32 %v4293, -1.4531521
      %v4326 = vadd.f32 %v4294, -1.4531521
      %v4327 = vadd.f32 %v4295, -1.4531521
      %v4328 = vadd.f32 %v4296, -1.4531521
      %v4329 = vadd.f32 %v4297, -1.4531521
      %v4330 = vadd.f32 %v4298, -1.4531521
      %v4331 = vadd.f32 %v4299, -1.4531521
      %v4332 = vmul.f32 %v4205, %v4300
      %v4333 = vmul.f32 %v4207, %v4301
      %v4334 = vmul.f32 %v4209, %v4302
      %v4335 = vmul.f32 %v4211, %v4303
      %v4336 = vmul.f32 %v4213, %v4304
      %v4337 = vmul.f32 %v4215, %v4305
      %v4338 = vmul.f32 %v4217, %v4306
      %v4339 = vmul.f32 %v4219, %v4307
      %v4340 = vmul.f32 %v4221, %v4308
      %v4341 = vmul.f32 %v4223, %v4309
      %v4342 = vmul.f32 %v4225, %v4310
      %v4343 = vmul.f32 %v4227, %v4311
      %v4344 = vmul.f32 %v4229, %v4312
      %v4345 = vmul.f32 %v4231, %v4313
      %v4346 = vmul.f32 %v4233, %v4314
      %v4347 = vmul.f32 %v4235, %v4315
      %v4348 = vmul.f32 %v4237, %v4316
      %v4349 = vmul.f32 %v4239, %v4317
      %v4350 = vmul.f32 %v4241, %v4318
      %v4351 = vmul.f32 %v4243, %v4319
      %v4352 = vmul.f32 %v4245, %v4320
      %v4353 = vmul.f32 %v4247, %v4321
      %v4354 = vmul.f32 %v4249, %v4322
      %v4355 = vmul.f32 %v4251, %v4323
      %v4356 = vmul.f32 %v4253, %v4324
      %v4357 = vmul.f32 %v4255, %v4325
      %v4358 = vmul.f32 %v4257, %v4326
      %v4359 = vmul.f32 %v4259, %v4327
      %v4360 = vmul.f32 %v4261, %v4328
      %v4361 = vmul.f32 %v4263, %v4329
      %v4362 = vmul.f32 %v4265, %v4330
      %v4363 = vmul.f32 %v4267, %v4331
      %v4364 = vadd.f32 %v4332, 1.4214138
      %v4365 = vadd.f32 %v4333, 1.4214138
      %v4366 = vadd.f32 %v4334, 1.4214138
      %v4367 = vadd.f32 %v4335, 1.4214138
      %v4368 = vadd.f32 %v4336, 1.4214138
      %v4369 = vadd.f32 %v4337, 1.4214138
      %v4370 = vadd.f32 %v4338, 1.4214138
      %v4371 = vadd.f32 %v4339, 1.4214138
      %v4372 = vadd.f32 %v4340, 1.4214138
      %v4373 = vadd.f32 %v4341, 1.4214138
      %v4374 = vadd.f32 %v4342, 1.4214138
      %v4375 = vadd.f32 %v4343, 1.4214138
      %v4376 = vadd.f32 %v4344, 1.4214138
      %v4377 = vadd.f32 %v4345, 1.4214138
      %v4378 = vadd.f32 %v4346, 1.4214138
      %v4379 = vadd.f32 %v4347, 1.4214138
      %v4380 = vadd.f32 %v4348, 1.4214138
      %v4381 = vadd.f32 %v4349, 1.4214138
      %v4382 = vadd.f32 %v4350, 1.4214138
      %v4383 = vadd.f32 %v4351, 1.4214138
      %v4384 = vadd.f32 %v4352, 1.4214138
      %v4385 = vadd.f32 %v4353, 1.4214138
      %v4386 = vadd.f32 %v4354, 1.4214138
      %v4387 = vadd.f32 %v4355, 1.4214138
      %v4388 = vadd.f32 %v4356, 1.4214138
      %v4389 = vadd.f32 %v4357, 1.4214138
      %v4390 = vadd.f32 %v4358, 1.4214138
      %v4391 = vadd.f32 %v4359, 1.4214138
      %v4392 = vadd.f32 %v4360, 1.4214138
      %v4393 = vadd.f32 %v4361, 1.4214138
      %v4394 = vadd.f32 %v4362, 1.4214138
      %v4395 = vadd.f32 %v4363, 1.4214138
      %v4396 = vmul.f32 %v4205, %v4364
      %v4397 = vmul.f32 %v4207, %v4365
      %v4398 = vmul.f32 %v4209, %v4366
      %v4399 = vmul.f32 %v4211, %v4367
      %v4400 = vmul.f32 %v4213, %v4368
      %v4401 = vmul.f32 %v4215, %v4369
      %v4402 = vmul.f32 %v4217, %v4370
      %v4403 = vmul.f32 %v4219, %v4371
      %v4404 = vmul.f32 %v4221, %v4372
      %v4405 = vmul.f32 %v4223, %v4373
      %v4406 = vmul.f32 %v4225, %v4374
      %v4407 = vmul.f32 %v4227, %v4375
      %v4408 = vmul.f32 %v4229, %v4376
      %v4409 = vmul.f32 %v4231, %v4377
      %v4410 = vmul.f32 %v4233, %v4378
      %v4411 = vmul.f32 %v4235, %v4379
      %v4412 = vmul.f32 %v4237, %v4380
      %v4413 = vmul.f32 %v4239, %v4381
      %v4414 = vmul.f32 %v4241, %v4382
      %v4415 = vmul.f32 %v4243, %v4383
      %v4416 = vmul.f32 %v4245, %v4384
      %v4417 = vmul.f32 %v4247, %v4385
      %v4418 = vmul.f32 %v4249, %v4386
      %v4419 = vmul.f32 %v4251, %v4387
      %v4420 = vmul.f32 %v4253, %v4388
      %v4421 = vmul.f32 %v4255, %v4389
      %v4422 = vmul.f32 %v4257, %v4390
      %v4423 = vmul.f32 %v4259, %v4391
      %v4424 = vmul.f32 %v4261, %v4392
      %v4425 = vmul.f32 %v4263, %v4393
      %v4426 = vmul.f32 %v4265, %v4394
      %v4427 = vmul.f32 %v4267, %v4395
      %v4428 = vadd.f32 %v4396, -0.28449672
      %v4429 = vadd.f32 %v4397, -0.28449672
      %v4430 = vadd.f32 %v4398, -0.28449672
      %v4431 = vadd.f32 %v4399, -0.28449672
      %v4432 = vadd.f32 %v4400, -0.28449672
      %v4433 = vadd.f32 %v4401, -0.28449672
      %v4434 = vadd.f32 %v4402, -0.28449672
      %v4435 = vadd.f32 %v4403, -0.28449672
      %v4436 = vadd.f32 %v4404, -0.28449672
      %v4437 = vadd.f32 %v4405, -0.28449672
      %v4438 = vadd.f32 %v4406, -0.28449672
      %v4439 = vadd.f32 %v4407, -0.28449672
      %v4440 = vadd.f32 %v4408, -0.28449672
      %v4441 = vadd.f32 %v4409, -0.28449672
      %v4442 = vadd.f32 %v4410, -0.28449672
      %v4443 = vadd.f32 %v4411, -0.28449672
      %v4444 = vadd.f32 %v4412, -0.28449672
      %v4445 = vadd.f32 %v4413, -0.28449672
      %v4446 = vadd.f32 %v4414, -0.28449672
      %v4447 = vadd.f32 %v4415, -0.28449672
      %v4448 = vadd.f32 %v4416, -0.28449672
      %v4449 = vadd.f32 %v4417, -0.28449672
      %v4450 = vadd.f32 %v4418, -0.28449672
      %v4451 = vadd.f32 %v4419, -0.28449672
      %v4452 = vadd.f32 %v4420, -0.28449672
      %v4453 = vadd.f32 %v4421, -0.28449672
      %v4454 = vadd.f32 %v4422, -0.28449672
      %v4455 = vadd.f32 %v4423, -0.28449672
      %v4456 = vadd.f32 %v4424, -0.28449672
      %v4457 = vadd.f32 %v4425, -0.28449672
      %v4458 = vadd.f32 %v4426, -0.28449672
      %v4459 = vadd.f32 %v4427, -0.28449672
      %v4460 = vmul.f32 %v4205, %v4428
      %v4461 = vmul.f32 %v4207, %v4429
      %v4462 = vmul.f32 %v4209, %v4430
      %v4463 = vmul.f32 %v4211, %v4431
      %v4464 = vmul.f32 %v4213, %v4432
      %v4465 = vmul.f32 %v4215, %v4433
      %v4466 = vmul.f32 %v4217, %v4434
      %v4467 = vmul.f32 %v4219, %v4435
      %v4468 = vmul.f32 %v4221, %v4436
      %v4469 = vmul.f32 %v4223, %v4437
      %v4470 = vmul.f32 %v4225, %v4438
      %v4471 = vmul.f32 %v4227, %v4439
      %v4472 = vmul.f32 %v4229, %v4440
      %v4473 = vmul.f32 %v4231, %v4441
      %v4474 = vmul.f32 %v4233, %v4442
      %v4475 = vmul.f32 %v4235, %v4443
      %v4476 = vmul.f32 %v4237, %v4444
      %v4477 = vmul.f32 %v4239, %v4445
      %v4478 = vmul.f32 %v4241, %v4446
      %v4479 = vmul.f32 %v4243, %v4447
      %v4480 = vmul.f32 %v4245, %v4448
      %v4481 = vmul.f32 %v4247, %v4449
      %v4482 = vmul.f32 %v4249, %v4450
      %v4483 = vmul.f32 %v4251, %v4451
      %v4484 = vmul.f32 %v4253, %v4452
      %v4485 = vmul.f32 %v4255, %v4453
      %v4486 = vmul.f32 %v4257, %v4454
      %v4487 = vmul.f32 %v4259, %v4455
      %v4488 = vmul.f32 %v4261, %v4456
      %v4489 = vmul.f32 %v4263, %v4457
      %v4490 = vmul.f32 %v4265, %v4458
      %v4491 = vmul.f32 %v4267, %v4459
      %v4492 = vadd.f32 %v4460, 0.2548296
      %v4493 = vadd.f32 %v4461, 0.2548296
      %v4494 = vadd.f32 %v4462, 0.2548296
      %v4495 = vadd.f32 %v4463, 0.2548296
      %v4496 = vadd.f32 %v4464, 0.2548296
      %v4497 = vadd.f32 %v4465, 0.2548296
      %v4498 = vadd.f32 %v4466, 0.2548296
      %v4499 = vadd.f32 %v4467, 0.2548296
      %v4500 = vadd.f32 %v4468, 0.2548296
      %v4501 = vadd.f32 %v4469, 0.2548296
      %v4502 = vadd.f32 %v4470, 0.2548296
      %v4503 = vadd.f32 %v4471, 0.2548296
      %v4504 = vadd.f32 %v4472, 0.2548296
      %v4505 = vadd.f32 %v4473, 0.2548296
      %v4506 = vadd.f32 %v4474, 0.2548296
      %v4507 = vadd.f32 %v4475, 0.2548296
      %v4508 = vadd.f32 %v4476, 0.2548296
      %v4509 = vadd.f32 %v4477, 0.2548296
      %v4510 = vadd.f32 %v4478, 0.2548296
      %v4511 = vadd.f32 %v4479, 0.2548296
      %v4512 = vadd.f32 %v4480, 0.2548296
      %v4513 = vadd.f32 %v4481, 0.2548296
      %v4514 = vadd.f32 %v4482, 0.2548296
      %v4515 = vadd.f32 %v4483, 0.2548296
      %v4516 = vadd.f32 %v4484, 0.2548296
      %v4517 = vadd.f32 %v4485, 0.2548296
      %v4518 = vadd.f32 %v4486, 0.2548296
      %v4519 = vadd.f32 %v4487, 0.2548296
      %v4520 = vadd.f32 %v4488, 0.2548296
      %v4521 = vadd.f32 %v4489, 0.2548296
      %v4522 = vadd.f32 %v4490, 0.2548296
      %v4523 = vadd.f32 %v4491, 0.2548296
      %v4524 = vmul.f32 %v4205, %v4492
      %v4525 = vmul.f32 %v4207, %v4493
      %v4526 = vmul.f32 %v4209, %v4494
      %v4527 = vmul.f32 %v4211, %v4495
      %v4528 = vmul.f32 %v4213, %v4496
      %v4529 = vmul.f32 %v4215, %v4497
      %v4530 = vmul.f32 %v4217, %v4498
      %v4531 = vmul.f32 %v4219, %v4499
      %v4532 = vmul.f32 %v4221, %v4500
      %v4533 = vmul.f32 %v4223, %v4501
      %v4534 = vmul.f32 %v4225, %v4502
      %v4535 = vmul.f32 %v4227, %v4503
      %v4536 = vmul.f32 %v4229, %v4504
      %v4537 = vmul.f32 %v4231, %v4505
      %v4538 = vmul.f32 %v4233, %v4506
      %v4539 = vmul.f32 %v4235, %v4507
      %v4540 = vmul.f32 %v4237, %v4508
      %v4541 = vmul.f32 %v4239, %v4509
      %v4542 = vmul.f32 %v4241, %v4510
      %v4543 = vmul.f32 %v4243, %v4511
      %v4544 = vmul.f32 %v4245, %v4512
      %v4545 = vmul.f32 %v4247, %v4513
      %v4546 = vmul.f32 %v4249, %v4514
      %v4547 = vmul.f32 %v4251, %v4515
      %v4548 = vmul.f32 %v4253, %v4516
      %v4549 = vmul.f32 %v4255, %v4517
      %v4550 = vmul.f32 %v4257, %v4518
      %v4551 = vmul.f32 %v4259, %v4519
      %v4552 = vmul.f32 %v4261, %v4520
      %v4553 = vmul.f32 %v4263, %v4521
      %v4554 = vmul.f32 %v4265, %v4522
      %v4555 = vmul.f32 %v4267, %v4523
      %v4556 = vsub.f32 0.0, %v4108
      %v4557 = vsub.f32 0.0, %v4109
      %v4558 = vsub.f32 0.0, %v4110
      %v4559 = vsub.f32 0.0, %v4111
      %v4560 = vsub.f32 0.0, %v4112
      %v4561 = vsub.f32 0.0, %v4113
      %v4562 = vsub.f32 0.0, %v4114
      %v4563 = vsub.f32 0.0, %v4115
      %v4564 = vsub.f32 0.0, %v4116
      %v4565 = vsub.f32 0.0, %v4117
      %v4566 = vsub.f32 0.0, %v4118
      %v4567 = vsub.f32 0.0, %v4119
      %v4568 = vsub.f32 0.0, %v4120
      %v4569 = vsub.f32 0.0, %v4121
      %v4570 = vsub.f32 0.0, %v4122
      %v4571 = vsub.f32 0.0, %v4123
      %v4572 = vsub.f32 0.0, %v4124
      %v4573 = vsub.f32 0.0, %v4125
      %v4574 = vsub.f32 0.0, %v4126
      %v4575 = vsub.f32 0.0, %v4127
      %v4576 = vsub.f32 0.0, %v4128
      %v4577 = vsub.f32 0.0, %v4129
      %v4578 = vsub.f32 0.0, %v4130
      %v4579 = vsub.f32 0.0, %v4131
      %v4580 = vsub.f32 0.0, %v4132
      %v4581 = vsub.f32 0.0, %v4133
      %v4582 = vsub.f32 0.0, %v4134
      %v4583 = vsub.f32 0.0, %v4135
      %v4584 = vsub.f32 0.0, %v4136
      %v4585 = vsub.f32 0.0, %v4137
      %v4586 = vsub.f32 0.0, %v4138
      %v4587 = vsub.f32 0.0, %v4139
      %v4588 = vmul.f32 %v4556, %v4108
      %v4589 = vmul.f32 %v4557, %v4109
      %v4590 = vmul.f32 %v4558, %v4110
      %v4591 = vmul.f32 %v4559, %v4111
      %v4592 = vmul.f32 %v4560, %v4112
      %v4593 = vmul.f32 %v4561, %v4113
      %v4594 = vmul.f32 %v4562, %v4114
      %v4595 = vmul.f32 %v4563, %v4115
      %v4596 = vmul.f32 %v4564, %v4116
      %v4597 = vmul.f32 %v4565, %v4117
      %v4598 = vmul.f32 %v4566, %v4118
      %v4599 = vmul.f32 %v4567, %v4119
      %v4600 = vmul.f32 %v4568, %v4120
      %v4601 = vmul.f32 %v4569, %v4121
      %v4602 = vmul.f32 %v4570, %v4122
      %v4603 = vmul.f32 %v4571, %v4123
      %v4604 = vmul.f32 %v4572, %v4124
      %v4605 = vmul.f32 %v4573, %v4125
      %v4606 = vmul.f32 %v4574, %v4126
      %v4607 = vmul.f32 %v4575, %v4127
      %v4608 = vmul.f32 %v4576, %v4128
      %v4609 = vmul.f32 %v4577, %v4129
      %v4610 = vmul.f32 %v4578, %v4130
      %v4611 = vmul.f32 %v4579, %v4131
      %v4612 = vmul.f32 %v4580, %v4132
      %v4613 = vmul.f32 %v4581, %v4133
      %v4614 = vmul.f32 %v4582, %v4134
      %v4615 = vmul.f32 %v4583, %v4135
      %v4616 = vmul.f32 %v4584, %v4136
      %v4617 = vmul.f32 %v4585, %v4137
      %v4618 = vmul.f32 %v4586, %v4138
      %v4619 = vmul.f32 %v4587, %v4139
      %v4620 = vmul.f32 %v4588, 1.442695
      %v4621 = vpow.pop %v4620
      %v4622 = vmul.f32 %v4589, 1.442695
      %v4623 = vpow.pop %v4622
      %v4624 = vmul.f32 %v4590, 1.442695
      %v4625 = vpow.pop %v4624
      %v4626 = vmul.f32 %v4591, 1.442695
      %v4627 = vpow.pop %v4626
      %v4628 = vmul.f32 %v4592, 1.442695
      %v4629 = vpow.pop %v4628
      %v4630 = vmul.f32 %v4593, 1.442695
      %v4631 = vpow.pop %v4630
      %v4632 = vmul.f32 %v4594, 1.442695
      %v4633 = vpow.pop %v4632
      %v4634 = vmul.f32 %v4595, 1.442695
      %v4635 = vpow.pop %v4634
      %v4636 = vmul.f32 %v4596, 1.442695
      %v4637 = vpow.pop %v4636
      %v4638 = vmul.f32 %v4597, 1.442695
      %v4639 = vpow.pop %v4638
      %v4640 = vmul.f32 %v4598, 1.442695
      %v4641 = vpow.pop %v4640
      %v4642 = vmul.f32 %v4599, 1.442695
      %v4643 = vpow.pop %v4642
      %v4644 = vmul.f32 %v4600, 1.442695
      %v4645 = vpow.pop %v4644
      %v4646 = vmul.f32 %v4601, 1.442695
      %v4647 = vpow.pop %v4646
      %v4648 = vmul.f32 %v4602, 1.442695
      %v4649 = vpow.pop %v4648
      %v4650 = vmul.f32 %v4603, 1.442695
      %v4651 = vpow.pop %v4650
      %v4652 = vmul.f32 %v4604, 1.442695
      %v4653 = vpow.pop %v4652
      %v4654 = vmul.f32 %v4605, 1.442695
      %v4655 = vpow.pop %v4654
      %v4656 = vmul.f32 %v4606, 1.442695
      %v4657 = vpow.pop %v4656
      %v4658 = vmul.f32 %v4607, 1.442695
      %v4659 = vpow.pop %v4658
      %v4660 = vmul.f32 %v4608, 1.442695
      %v4661 = vpow.pop %v4660
      %v4662 = vmul.f32 %v4609, 1.442695
      %v4663 = vpow.pop %v4662
      %v4664 = vmul.f32 %v4610, 1.442695
      %v4665 = vpow.pop %v4664
      %v4666 = vmul.f32 %v4611, 1.442695
      %v4667 = vpow.pop %v4666
      %v4668 = vmul.f32 %v4612, 1.442695
      %v4669 = vpow.pop %v4668
      %v4670 = vmul.f32 %v4613, 1.442695
      %v4671 = vpow.pop %v4670
      %v4672 = vmul.f32 %v4614, 1.442695
      %v4673 = vpow.pop %v4672
      %v4674 = vmul.f32 %v4615, 1.442695
      %v4675 = vpow.pop %v4674
      %v4676 = vmul.f32 %v4616, 1.442695
      %v4677 = vpow.pop %v4676
      %v4678 = vmul.f32 %v4617, 1.442695
      %v4679 = vpow.pop %v4678
      %v4680 = vmul.f32 %v4618, 1.442695
      %v4681 = vpow.pop %v4680
      %v4682 = vmul.f32 %v4619, 1.442695
      %v4683 = vpow.pop %v4682
      %v4684 = vmul.f32 %v4524, %v4621
      %v4685 = vmul.f32 %v4525, %v4623
      %v4686 = vmul.f32 %v4526, %v4625
      %v4687 = vmul.f32 %v4527, %v4627
      %v4688 = vmul.f32 %v4528, %v4629
      %v4689 = vmul.f32 %v4529, %v4631
      %v4690 = vmul.f32 %v4530, %v4633
      %v4691 = vmul.f32 %v4531, %v4635
      %v4692 = vmul.f32 %v4532, %v4637
      %v4693 = vmul.f32 %v4533, %v4639
      %v4694 = vmul.f32 %v4534, %v4641
      %v4695 = vmul.f32 %v4535, %v4643
      %v4696 = vmul.f32 %v4536, %v4645
      %v4697 = vmul.f32 %v4537, %v4647
      %v4698 = vmul.f32 %v4538, %v4649
      %v4699 = vmul.f32 %v4539, %v4651
      %v4700 = vmul.f32 %v4540, %v4653
      %v4701 = vmul.f32 %v4541, %v4655
      %v4702 = vmul.f32 %v4542, %v4657
      %v4703 = vmul.f32 %v4543, %v4659
      %v4704 = vmul.f32 %v4544, %v4661
      %v4705 = vmul.f32 %v4545, %v4663
      %v4706 = vmul.f32 %v4546, %v4665
      %v4707 = vmul.f32 %v4547, %v4667
      %v4708 = vmul.f32 %v4548, %v4669
      %v4709 = vmul.f32 %v4549, %v4671
      %v4710 = vmul.f32 %v4550, %v4673
      %v4711 = vmul.f32 %v4551, %v4675
      %v4712 = vmul.f32 %v4552, %v4677
      %v4713 = vmul.f32 %v4553, %v4679
      %v4714 = vmul.f32 %v4554, %v4681
      %v4715 = vmul.f32 %v4555, %v4683
      %v4716 = vsub.f32 1.0, %v4684
      %v4717 = vsub.f32 1.0, %v4685
      %v4718 = vsub.f32 1.0, %v4686
      %v4719 = vsub.f32 1.0, %v4687
      %v4720 = vsub.f32 1.0, %v4688
      %v4721 = vsub.f32 1.0, %v4689
      %v4722 = vsub.f32 1.0, %v4690
      %v4723 = vsub.f32 1.0, %v4691
      %v4724 = vsub.f32 1.0, %v4692
      %v4725 = vsub.f32 1.0, %v4693
      %v4726 = vsub.f32 1.0, %v4694
      %v4727 = vsub.f32 1.0, %v4695
      %v4728 = vsub.f32 1.0, %v4696
      %v4729 = vsub.f32 1.0, %v4697
      %v4730 = vsub.f32 1.0, %v4698
      %v4731 = vsub.f32 1.0, %v4699
      %v4732 = vsub.f32 1.0, %v4700
      %v4733 = vsub.f32 1.0, %v4701
      %v4734 = vsub.f32 1.0, %v4702
      %v4735 = vsub.f32 1.0, %v4703
      %v4736 = vsub.f32 1.0, %v4704
      %v4737 = vsub.f32 1.0, %v4705
      %v4738 = vsub.f32 1.0, %v4706
      %v4739 = vsub.f32 1.0, %v4707
      %v4740 = vsub.f32 1.0, %v4708
      %v4741 = vsub.f32 1.0, %v4709
      %v4742 = vsub.f32 1.0, %v4710
      %v4743 = vsub.f32 1.0, %v4711
      %v4744 = vsub.f32 1.0, %v4712
      %v4745 = vsub.f32 1.0, %v4713
      %v4746 = vsub.f32 1.0, %v4714
      %v4747 = vsub.f32 1.0, %v4715
      %v4748 = vmul.f32 %v4076, %v4716
      %v4749 = vmul.f32 %v4077, %v4717
      %v4750 = vmul.f32 %v4078, %v4718
      %v4751 = vmul.f32 %v4079, %v4719
      %v4752 = vmul.f32 %v4080, %v4720
      %v4753 = vmul.f32 %v4081, %v4721
      %v4754 = vmul.f32 %v4082, %v4722
      %v4755 = vmul.f32 %v4083, %v4723
      %v4756 = vmul.f32 %v4084, %v4724
      %v4757 = vmul.f32 %v4085, %v4725
      %v4758 = vmul.f32 %v4086, %v4726
      %v4759 = vmul.f32 %v4087, %v4727
      %v4760 = vmul.f32 %v4088, %v4728
      %v4761 = vmul.f32 %v4089, %v4729
      %v4762 = vmul.f32 %v4090, %v4730
      %v4763 = vmul.f32 %v4091, %v4731
      %v4764 = vmul.f32 %v4092, %v4732
      %v4765 = vmul.f32 %v4093, %v4733
      %v4766 = vmul.f32 %v4094, %v4734
      %v4767 = vmul.f32 %v4095, %v4735
      %v4768 = vmul.f32 %v4096, %v4736
      %v4769 = vmul.f32 %v4097, %v4737
      %v4770 = vmul.f32 %v4098, %v4738
      %v4771 = vmul.f32 %v4099, %v4739
      %v4772 = vmul.f32 %v4100, %v4740
      %v4773 = vmul.f32 %v4101, %v4741
      %v4774 = vmul.f32 %v4102, %v4742
      %v4775 = vmul.f32 %v4103, %v4743
      %v4776 = vmul.f32 %v4104, %v4744
      %v4777 = vmul.f32 %v4105, %v4745
      %v4778 = vmul.f32 %v4106, %v4746
      %v4779 = vmul.f32 %v4107, %v4747
      %v4780 = vadd.f32 %v4748, 1.0
      %v4781 = vadd.f32 %v4749, 1.0
      %v4782 = vadd.f32 %v4750, 1.0
      %v4783 = vadd.f32 %v4751, 1.0
      %v4784 = vadd.f32 %v4752, 1.0
      %v4785 = vadd.f32 %v4753, 1.0
      %v4786 = vadd.f32 %v4754, 1.0
      %v4787 = vadd.f32 %v4755, 1.0
      %v4788 = vadd.f32 %v4756, 1.0
      %v4789 = vadd.f32 %v4757, 1.0
      %v4790 = vadd.f32 %v4758, 1.0
      %v4791 = vadd.f32 %v4759, 1.0
      %v4792 = vadd.f32 %v4760, 1.0
      %v4793 = vadd.f32 %v4761, 1.0
      %v4794 = vadd.f32 %v4762, 1.0
      %v4795 = vadd.f32 %v4763, 1.0
      %v4796 = vadd.f32 %v4764, 1.0
      %v4797 = vadd.f32 %v4765, 1.0
      %v4798 = vadd.f32 %v4766, 1.0
      %v4799 = vadd.f32 %v4767, 1.0
      %v4800 = vadd.f32 %v4768, 1.0
      %v4801 = vadd.f32 %v4769, 1.0
      %v4802 = vadd.f32 %v4770, 1.0
      %v4803 = vadd.f32 %v4771, 1.0
      %v4804 = vadd.f32 %v4772, 1.0
      %v4805 = vadd.f32 %v4773, 1.0
      %v4806 = vadd.f32 %v4774, 1.0
      %v4807 = vadd.f32 %v4775, 1.0
      %v4808 = vadd.f32 %v4776, 1.0
      %v4809 = vadd.f32 %v4777, 1.0
      %v4810 = vadd.f32 %v4778, 1.0
      %v4811 = vadd.f32 %v4779, 1.0
      %v4812 = vmul.f32 %v3980, %v4780
      %v4813 = vmul.f32 %v3981, %v4781
      %v4814 = vmul.f32 %v3982, %v4782
      %v4815 = vmul.f32 %v3983, %v4783
      %v4816 = vmul.f32 %v3984, %v4784
      %v4817 = vmul.f32 %v3985, %v4785
      %v4818 = vmul.f32 %v3986, %v4786
      %v4819 = vmul.f32 %v3987, %v4787
      %v4820 = vmul.f32 %v3988, %v4788
      %v4821 = vmul.f32 %v3989, %v4789
      %v4822 = vmul.f32 %v3990, %v4790
      %v4823 = vmul.f32 %v3991, %v4791
      %v4824 = vmul.f32 %v3992, %v4792
      %v4825 = vmul.f32 %v3993, %v4793
      %v4826 = vmul.f32 %v3994, %v4794
      %v4827 = vmul.f32 %v3995, %v4795
      %v4828 = vmul.f32 %v3996, %v4796
      %v4829 = vmul.f32 %v3997, %v4797
      %v4830 = vmul.f32 %v3998, %v4798
      %v4831 = vmul.f32 %v3999, %v4799
      %v4832 = vmul.f32 %v4000, %v4800
      %v4833 = vmul.f32 %v4001, %v4801
      %v4834 = vmul.f32 %v4002, %v4802
      %v4835 = vmul.f32 %v4003, %v4803
      %v4836 = vmul.f32 %v4004, %v4804
      %v4837 = vmul.f32 %v4005, %v4805
      %v4838 = vmul.f32 %v4006, %v4806
      %v4839 = vmul.f32 %v4007, %v4807
      %v4840 = vmul.f32 %v4008, %v4808
      %v4841 = vmul.f32 %v4009, %v4809
      %v4842 = vmul.f32 %v4010, %v4810
      %v4843 = vmul.f32 %v4011, %v4811
      %v4844 = vld [vmem:[%s7] sm:$0xf]
      %v4845 = vld [vmem:[%s8] sm:$0x1]
      %v4847 = vlaneseq
      %v4848 = vshrl.u32 %v4847, 7
      %v4849 = vsub.s32 0, %v4848
      %v4850 = vrot.slane %v4845, %v4849
      %4884 = vrot.lane.b32.xlu0 %v4812, 124
      %v4885 = vpop.permute.xlu0 %4884
      %4886 = vrot.lane.b32.xlu0 %v4813, 124
      %v4887 = vpop.permute.xlu0 %4886
      %4888 = vrot.lane.b32.xlu0 %v4814, 124
      %v4889 = vpop.permute.xlu0 %4888
      %4890 = vrot.lane.b32.xlu0 %v4815, 124
      %v4891 = vpop.permute.xlu0 %4890
      %4892 = vrot.lane.b32.xlu0 %v4816, 124
      %v4893 = vpop.permute.xlu0 %4892
      %4894 = vrot.lane.b32.xlu0 %v4817, 124
      %v4895 = vpop.permute.xlu0 %4894
      %4896 = vrot.lane.b32.xlu0 %v4818, 124
      %v4897 = vpop.permute.xlu0 %4896
      %4898 = vrot.lane.b32.xlu0 %v4819, 124
      %v4899 = vpop.permute.xlu0 %4898
      %4900 = vrot.lane.b32.xlu0 %v4820, 124
      %v4901 = vpop.permute.xlu0 %4900
      %4902 = vrot.lane.b32.xlu0 %v4821, 124
      %v4903 = vpop.permute.xlu0 %4902
      %4904 = vrot.lane.b32.xlu0 %v4822, 124
      %v4905 = vpop.permute.xlu0 %4904
      %4906 = vrot.lane.b32.xlu0 %v4823, 124
      %v4907 = vpop.permute.xlu0 %4906
      %4908 = vrot.lane.b32.xlu0 %v4824, 124
      %v4909 = vpop.permute.xlu0 %4908
      %4910 = vrot.lane.b32.xlu0 %v4825, 124
      %v4911 = vpop.permute.xlu0 %4910
      %4912 = vrot.lane.b32.xlu0 %v4826, 124
      %v4913 = vpop.permute.xlu0 %4912
      %4914 = vrot.lane.b32.xlu0 %v4827, 124
      %v4915 = vpop.permute.xlu0 %4914
      %4916 = vrot.lane.b32.xlu0 %v4828, 124
      %v4917 = vpop.permute.xlu0 %4916
      %4918 = vrot.lane.b32.xlu0 %v4829, 124
      %v4919 = vpop.permute.xlu0 %4918
      %4920 = vrot.lane.b32.xlu0 %v4830, 124
      %v4921 = vpop.permute.xlu0 %4920
      %4922 = vrot.lane.b32.xlu0 %v4831, 124
      %v4923 = vpop.permute.xlu0 %4922
      %4924 = vrot.lane.b32.xlu0 %v4832, 124
      %v4925 = vpop.permute.xlu0 %4924
      %4926 = vrot.lane.b32.xlu0 %v4833, 124
      %v4927 = vpop.permute.xlu0 %4926
      %4928 = vrot.lane.b32.xlu0 %v4834, 124
      %v4929 = vpop.permute.xlu0 %4928
      %4930 = vrot.lane.b32.xlu0 %v4835, 124
      %v4931 = vpop.permute.xlu0 %4930
      %4932 = vrot.lane.b32.xlu0 %v4836, 124
      %v4933 = vpop.permute.xlu0 %4932
      %4934 = vrot.lane.b32.xlu0 %v4837, 124
      %v4935 = vpop.permute.xlu0 %4934
      %4936 = vrot.lane.b32.xlu0 %v4838, 124
      %v4937 = vpop.permute.xlu0 %4936
      %4938 = vrot.lane.b32.xlu0 %v4839, 124
      %v4939 = vpop.permute.xlu0 %4938
      %4940 = vrot.lane.b32.xlu0 %v4840, 124
      %v4941 = vpop.permute.xlu0 %4940
      %4942 = vrot.lane.b32.xlu0 %v4841, 124
      %v4943 = vpop.permute.xlu0 %4942
      %4944 = vrot.lane.b32.xlu0 %v4842, 124
      %v4945 = vpop.permute.xlu0 %4944
      %4946 = vrot.lane.b32.xlu0 %v4843, 124
      %v4947 = vpop.permute.xlu0 %4946
      %v4948 = vsel %vm365, %v4885, 0
      %v4950 = vsel %vm365, %v4887, 0
      %v4952 = vsel %vm365, %v4889, 0
      %v4954 = vsel %vm365, %v4891, 0
      %v4956 = vsel %vm365, %v4893, 0
      %v4958 = vsel %vm365, %v4895, 0
      %v4960 = vsel %vm365, %v4897, 0
      %v4962 = vsel %vm365, %v4899, 0
      %v4964 = vsel %vm365, %v4901, 0
      %v4966 = vsel %vm365, %v4903, 0
      %v4968 = vsel %vm365, %v4905, 0
      %v4970 = vsel %vm365, %v4907, 0
      %v4972 = vsel %vm365, %v4909, 0
      %v4974 = vsel %vm365, %v4911, 0
      %v4976 = vsel %vm365, %v4913, 0
      %v4978 = vsel %vm365, %v4915, 0
      %v4980 = vsel %vm365, %v4917, 0
      %v4982 = vsel %vm365, %v4919, 0
      %v4984 = vsel %vm365, %v4921, 0
      %v4986 = vsel %vm365, %v4923, 0
      %v4988 = vsel %vm365, %v4925, 0
      %v4990 = vsel %vm365, %v4927, 0
      %v4992 = vsel %vm365, %v4929, 0
      %v4994 = vsel %vm365, %v4931, 0
      %v4996 = vsel %vm365, %v4933, 0
      %v4998 = vsel %vm365, %v4935, 0
      %v5000 = vsel %vm365, %v4937, 0
      %v5002 = vsel %vm365, %v4939, 0
      %v5004 = vsel %vm365, %v4941, 0
      %v5006 = vsel %vm365, %v4943, 0
      %v5008 = vsel %vm365, %v4945, 0
      %v5010 = vsel %vm365, %v4947, 0
      %v5013 = vsel %vm965, %v4844, 0
      %5015 = vmatprep.subr.mxu0 0.0
      %5016 = vmatpush1.msra.mxu0 %v5013
      %5017 = vmatprep.subr.mxu0 0.0
      %5018 = vmatpush1.msra.mxu0 0.0
      %5019 = vmatprep.subr.mxu0 0.0
      %5020 = vmatpush1.msra.mxu0 0.0
      %5021 = vmatprep.subr.mxu0 0.0
      %5022 = vmatpush1.msra.mxu0 0.0
      %5023 = vmatprep.subr.mxu0 0.0
      %5024 = vmatpush1.msra.mxu0 0.0
      %5025 = vmatprep.subr.mxu0 0.0
      %5026 = vmatpush1.msra.mxu0 0.0
      %5027 = vmatprep.subr.mxu0 0.0
      %5028 = vmatpush1.msra.mxu0 0.0
      %5029 = vmatprep.subr.mxu0 0.0
      %5030 = vmatpush1.msra.mxu0 0.0
      %5031 = vmatprep.subr.mxu0 0.0
      %5032 = vmatpush1.msra.mxu0 0.0
      %5033 = vmatprep.subr.mxu0 0.0
      %5034 = vmatpush1.msra.mxu0 0.0
      %5035 = vmatprep.subr.mxu0 0.0
      %5036 = vmatpush1.msra.mxu0 0.0
      %5037 = vmatprep.subr.mxu0 0.0
      %5038 = vmatpush1.msra.mxu0 0.0
      %5039 = vmatprep.subr.mxu0 0.0
      %5040 = vmatpush1.msra.mxu0 0.0
      %5041 = vmatprep.subr.mxu0 0.0
      %5042 = vmatpush1.msra.mxu0 0.0
      %5043 = vmatprep.subr.mxu0 0.0
      %5044 = vmatpush1.msra.mxu0 0.0
      %5045 = vmatprep.subr.mxu0 0.0
      %5046 = vmatpush1.msra.mxu0 0.0
      %5047 = vmatprep.subr.mxu0 0.0
      %5048 = vmatpush1.msra.mxu0 0.0
      %5049 = vmatprep.subr.mxu0 0.0
      %5050 = vmatpush1.msra.mxu0 0.0
      %5051 = vmatprep.subr.mxu0 0.0
      %5052 = vmatpush1.msra.mxu0 0.0
      %5053 = vmatprep.subr.mxu0 0.0
      %5054 = vmatpush1.msra.mxu0 0.0
      %5055 = vmatprep.subr.mxu0 0.0
      %5056 = vmatpush1.msra.mxu0 0.0
      %5057 = vmatprep.subr.mxu0 0.0
      %5058 = vmatpush1.msra.mxu0 0.0
      %5059 = vmatprep.subr.mxu0 0.0
      %5060 = vmatpush1.msra.mxu0 0.0
      %5061 = vmatprep.subr.mxu0 0.0
      %5062 = vmatpush1.msra.mxu0 0.0
      %5063 = vmatprep.subr.mxu0 0.0
      %5064 = vmatpush1.msra.mxu0 0.0
      %5065 = vmatprep.subr.mxu0 0.0
      %5066 = vmatpush1.msra.mxu0 0.0
      %5067 = vmatprep.subr.mxu0 0.0
      %5068 = vmatpush1.msra.mxu0 0.0
      %5069 = vmatprep.subr.mxu0 0.0
      %5070 = vmatpush1.msra.mxu0 0.0
      %5071 = vmatprep.subr.mxu0 0.0
      %5072 = vmatpush1.msra.mxu0 0.0
      %5073 = vmatprep.subr.mxu0 0.0
      %5074 = vmatpush1.msra.mxu0 0.0
      %5075 = vmatprep.subr.mxu0 0.0
      %5076 = vmatpush1.msra.mxu0 0.0
      %5077 = vmatprep.subr.mxu0 0.0
      %5078 = vmatpush1.msra.mxu0 0.0
      %5079 = vmatprep.mubr.f32.mxu0 0.0
      %5080 = vmatmul.mubr.f32.gmra.mrb[0].mxu0 %v4948
      %v5081 = vpop.f32.mrb[0].mxu0
      %v5082 = vadd.f32 %v4850, %v5081
      %v5083 = vpop.f32.mrb[0].mxu0
      %5084 = vmatprep.mubr.f32.mxu0 0.0
      %5085 = vmatmul.mubr.f32.gmra.mrb[0].mxu0 %v4950
      %v5086 = vpop.f32.mrb[0].mxu0
      %v5087 = vadd.f32 %v4850, %v5086
      %v5088 = vpop.f32.mrb[0].mxu0
      %5089 = vmatprep.mubr.f32.mxu0 0.0
      %5090 = vmatmul.mubr.f32.gmra.mrb[0].mxu0 %v4952
      %v5091 = vpop.f32.mrb[0].mxu0
      %v5092 = vadd.f32 %v4850, %v5091
      %v5093 = vpop.f32.mrb[0].mxu0
      %5094 = vmatprep.mubr.f32.mxu0 0.0
      %5095 = vmatmul.mubr.f32.gmra.mrb[0].mxu0 %v4954
      %v5096 = vpop.f32.mrb[0].mxu0
      %v5097 = vadd.f32 %v4850, %v5096
      %v5098 = vpop.f32.mrb[0].mxu0
      %5099 = vmatprep.mubr.f32.mxu0 0.0
      %5100 = vmatmul.mubr.f32.gmra.mrb[0].mxu0 %v4956
      %v5101 = vpop.f32.mrb[0].mxu0
      %v5102 = vadd.f32 %v4850, %v5101
      %v5103 = vpop.f32.mrb[0].mxu0
      %5104 = vmatprep.mubr.f32.mxu0 0.0
      %5105 = vmatmul.mubr.f32.gmra.mrb[0].mxu0 %v4958
      %v5106 = vpop.f32.mrb[0].mxu0
      %v5107 = vadd.f32 %v4850, %v5106
      %v5108 = vpop.f32.mrb[0].mxu0
      %5109 = vmatprep.mubr.f32.mxu0 0.0
      %5110 = vmatmul.mubr.f32.gmra.mrb[0].mxu0 %v4960
      %v5111 = vpop.f32.mrb[0].mxu0
      %v5112 = vadd.f32 %v4850, %v5111
      %v5113 = vpop.f32.mrb[0].mxu0
      %5114 = vmatprep.mubr.f32.mxu0 0.0
      %5115 = vmatmul.mubr.f32.gmra.mrb[0].mxu0 %v4962
      %v5116 = vpop.f32.mrb[0].mxu0
      %v5117 = vadd.f32 %v4850, %v5116
      %v5118 = vpop.f32.mrb[0].mxu0
      %5119 = vmatprep.mubr.f32.mxu0 0.0
      %5120 = vmatmul.mubr.f32.gmra.mrb[0].mxu0 %v4964
      %v5121 = vpop.f32.mrb[0].mxu0
      %v5122 = vadd.f32 %v4850, %v5121
      %v5123 = vpop.f32.mrb[0].mxu0
      %5124 = vmatprep.mubr.f32.mxu0 0.0
      %5125 = vmatmul.mubr.f32.gmra.mrb[0].mxu0 %v4966
      %v5126 = vpop.f32.mrb[0].mxu0
      %v5127 = vadd.f32 %v4850, %v5126
      %v5128 = vpop.f32.mrb[0].mxu0
      %5129 = vmatprep.mubr.f32.mxu0 0.0
      %5130 = vmatmul.mubr.f32.gmra.mrb[0].mxu0 %v4968
      %v5131 = vpop.f32.mrb[0].mxu0
      %v5132 = vadd.f32 %v4850, %v5131
      %v5133 = vpop.f32.mrb[0].mxu0
      %5134 = vmatprep.mubr.f32.mxu0 0.0
      %5135 = vmatmul.mubr.f32.gmra.mrb[0].mxu0 %v4970
      %v5136 = vpop.f32.mrb[0].mxu0
      %v5137 = vadd.f32 %v4850, %v5136
      %v5138 = vpop.f32.mrb[0].mxu0
      %5139 = vmatprep.mubr.f32.mxu0 0.0
      %5140 = vmatmul.mubr.f32.gmra.mrb[0].mxu0 %v4972
      %v5141 = vpop.f32.mrb[0].mxu0
      %v5142 = vadd.f32 %v4850, %v5141
      %v5143 = vpop.f32.mrb[0].mxu0
      %5144 = vmatprep.mubr.f32.mxu0 0.0
      %5145 = vmatmul.mubr.f32.gmra.mrb[0].mxu0 %v4974
      %v5146 = vpop.f32.mrb[0].mxu0
      %v5147 = vadd.f32 %v4850, %v5146
      %v5148 = vpop.f32.mrb[0].mxu0
      %5149 = vmatprep.mubr.f32.mxu0 0.0
      %5150 = vmatmul.mubr.f32.gmra.mrb[0].mxu0 %v4976
      %v5151 = vpop.f32.mrb[0].mxu0
      %v5152 = vadd.f32 %v4850, %v5151
      %v5153 = vpop.f32.mrb[0].mxu0
      %5154 = vmatprep.mubr.f32.mxu0 0.0
      %5155 = vmatmul.mubr.f32.gmra.mrb[0].mxu0 %v4978
      %v5156 = vpop.f32.mrb[0].mxu0
      %v5157 = vadd.f32 %v4850, %v5156
      %v5158 = vpop.f32.mrb[0].mxu0
      %5159 = vmatprep.mubr.f32.mxu0 0.0
      %5160 = vmatmul.mubr.f32.gmra.mrb[0].mxu0 %v4980
      %v5161 = vpop.f32.mrb[0].mxu0
      %v5162 = vadd.f32 %v4850, %v5161
      %v5163 = vpop.f32.mrb[0].mxu0
      %5164 = vmatprep.mubr.f32.mxu0 0.0
      %5165 = vmatmul.mubr.f32.gmra.mrb[0].mxu0 %v4982
      %v5166 = vpop.f32.mrb[0].mxu0
      %v5167 = vadd.f32 %v4850, %v5166
      %v5168 = vpop.f32.mrb[0].mxu0
      %5169 = vmatprep.mubr.f32.mxu0 0.0
      %5170 = vmatmul.mubr.f32.gmra.mrb[0].mxu0 %v4984
      %v5171 = vpop.f32.mrb[0].mxu0
      %v5172 = vadd.f32 %v4850, %v5171
      %v5173 = vpop.f32.mrb[0].mxu0
      %5174 = vmatprep.mubr.f32.mxu0 0.0
      %5175 = vmatmul.mubr.f32.gmra.mrb[0].mxu0 %v4986
      %v5176 = vpop.f32.mrb[0].mxu0
      %v5177 = vadd.f32 %v4850, %v5176
      %v5178 = vpop.f32.mrb[0].mxu0
      %5179 = vmatprep.mubr.f32.mxu0 0.0
      %5180 = vmatmul.mubr.f32.gmra.mrb[0].mxu0 %v4988
      %v5181 = vpop.f32.mrb[0].mxu0
      %v5182 = vadd.f32 %v4850, %v5181
      %v5183 = vpop.f32.mrb[0].mxu0
      %5184 = vmatprep.mubr.f32.mxu0 0.0
      %5185 = vmatmul.mubr.f32.gmra.mrb[0].mxu0 %v4990
      %v5186 = vpop.f32.mrb[0].mxu0
      %v5187 = vadd.f32 %v4850, %v5186
      %v5188 = vpop.f32.mrb[0].mxu0
      %5189 = vmatprep.mubr.f32.mxu0 0.0
      %5190 = vmatmul.mubr.f32.gmra.mrb[0].mxu0 %v4992
      %v5191 = vpop.f32.mrb[0].mxu0
      %v5192 = vadd.f32 %v4850, %v5191
      %v5193 = vpop.f32.mrb[0].mxu0
      %5194 = vmatprep.mubr.f32.mxu0 0.0
      %5195 = vmatmul.mubr.f32.gmra.mrb[0].mxu0 %v4994
      %v5196 = vpop.f32.mrb[0].mxu0
      %v5197 = vadd.f32 %v4850, %v5196
      %v5198 = vpop.f32.mrb[0].mxu0
      %5199 = vmatprep.mubr.f32.mxu0 0.0
      %5200 = vmatmul.mubr.f32.gmra.mrb[0].mxu0 %v4996
      %v5201 = vpop.f32.mrb[0].mxu0
      %v5202 = vadd.f32 %v4850, %v5201
      %v5203 = vpop.f32.mrb[0].mxu0
      %5204 = vmatprep.mubr.f32.mxu0 0.0
      %5205 = vmatmul.mubr.f32.gmra.mrb[0].mxu0 %v4998
      %v5206 = vpop.f32.mrb[0].mxu0
      %v5207 = vadd.f32 %v4850, %v5206
      %v5208 = vpop.f32.mrb[0].mxu0
      %5209 = vmatprep.mubr.f32.mxu0 0.0
      %5210 = vmatmul.mubr.f32.gmra.mrb[0].mxu0 %v5000
      %v5211 = vpop.f32.mrb[0].mxu0
      %v5212 = vadd.f32 %v4850, %v5211
      %v5213 = vpop.f32.mrb[0].mxu0
      %5214 = vmatprep.mubr.f32.mxu0 0.0
      %5215 = vmatmul.mubr.f32.gmra.mrb[0].mxu0 %v5002
      %v5216 = vpop.f32.mrb[0].mxu0
      %v5217 = vadd.f32 %v4850, %v5216
      %v5218 = vpop.f32.mrb[0].mxu0
      %5219 = vmatprep.mubr.f32.mxu0 0.0
      %5220 = vmatmul.mubr.f32.gmra.mrb[0].mxu0 %v5004
      %v5221 = vpop.f32.mrb[0].mxu0
      %v5222 = vadd.f32 %v4850, %v5221
      %v5223 = vpop.f32.mrb[0].mxu0
      %5224 = vmatprep.mubr.f32.mxu0 0.0
      %5225 = vmatmul.mubr.f32.gmra.mrb[0].mxu0 %v5006
      %v5226 = vpop.f32.mrb[0].mxu0
      %v5227 = vadd.f32 %v4850, %v5226
      %v5228 = vpop.f32.mrb[0].mxu0
      %5229 = vmatprep.mubr.f32.mxu0 0.0
      %5230 = vmatmul.mubr.f32.gmra.mrb[0].mxu0 %v5008
      %v5231 = vpop.f32.mrb[0].mxu0
      %v5232 = vadd.f32 %v4850, %v5231
      %v5233 = vpop.f32.mrb[0].mxu0
      %5234 = vmatprep.mubr.f32.mxu0 0.0
      %5235 = vmatmul.mubr.f32.gmra.mrb[0].mxu0 %v5010
      %v5236 = vpop.f32.mrb[0].mxu0
      %v5237 = vadd.f32 %v4850, %v5236
      %v5238 = vpop.f32.mrb[0].mxu0
      %5239 = vdwg.mxu0
      %v5240 = vadd.f32 %v5082, %v333
      %v5241 = vadd.f32 %v5087, %v334
      %v5242 = vadd.f32 %v5092, %v335
      %v5243 = vadd.f32 %v5097, %v336
      %v5244 = vadd.f32 %v5102, %v337
      %v5245 = vadd.f32 %v5107, %v338
      %v5246 = vadd.f32 %v5112, %v339
      %v5247 = vadd.f32 %v5117, %v340
      %v5248 = vadd.f32 %v5122, %v341
      %v5249 = vadd.f32 %v5127, %v342
      %v5250 = vadd.f32 %v5132, %v343
      %v5251 = vadd.f32 %v5137, %v344
      %v5252 = vadd.f32 %v5142, %v345
      %v5253 = vadd.f32 %v5147, %v346
      %v5254 = vadd.f32 %v5152, %v347
      %v5255 = vadd.f32 %v5157, %v348
      %v5256 = vadd.f32 %v5162, %v349
      %v5257 = vadd.f32 %v5167, %v350
      %v5258 = vadd.f32 %v5172, %v351
      %v5259 = vadd.f32 %v5177, %v352
      %v5260 = vadd.f32 %v5182, %v353
      %v5261 = vadd.f32 %v5187, %v354
      %v5262 = vadd.f32 %v5192, %v355
      %v5263 = vadd.f32 %v5197, %v356
      %v5264 = vadd.f32 %v5202, %v357
      %v5265 = vadd.f32 %v5207, %v358
      %v5266 = vadd.f32 %v5212, %v359
      %v5267 = vadd.f32 %v5217, %v360
      %v5268 = vadd.f32 %v5222, %v361
      %v5269 = vadd.f32 %v5227, %v362
      %v5270 = vadd.f32 %v5232, %v363
      %v5271 = vadd.f32 %v5237, %v364
      %5272 = vst.msk [vmem:[%s332] sm:$0xff] %vm365, %v5240
      %5273 = vst.msk [vmem:[%s332 + $0x8] sm:$0xff] %vm365, %v5241
      %5274 = vst.msk [vmem:[%s332 + $0x10] sm:$0xff] %vm365, %v5242
      %5275 = vst.msk [vmem:[%s332 + $0x18] sm:$0xff] %vm365, %v5243
      %5276 = vst.msk [vmem:[%s332 + $0x20] sm:$0xff] %vm365, %v5244
      %5277 = vst.msk [vmem:[%s332 + $0x28] sm:$0xff] %vm365, %v5245
      %5278 = vst.msk [vmem:[%s332 + $0x30] sm:$0xff] %vm365, %v5246
      %5279 = vst.msk [vmem:[%s332 + $0x38] sm:$0xff] %vm365, %v5247
      %5280 = vst.msk [vmem:[%s332 + $0x40] sm:$0xff] %vm365, %v5248
      %5281 = vst.msk [vmem:[%s332 + $0x48] sm:$0xff] %vm365, %v5249
      %5282 = vst.msk [vmem:[%s332 + $0x50] sm:$0xff] %vm365, %v5250
      %5283 = vst.msk [vmem:[%s332 + $0x58] sm:$0xff] %vm365, %v5251
      %5284 = vst.msk [vmem:[%s332 + $0x60] sm:$0xff] %vm365, %v5252
      %5285 = vst.msk [vmem:[%s332 + $0x68] sm:$0xff] %vm365, %v5253
      %5286 = vst.msk [vmem:[%s332 + $0x70] sm:$0xff] %vm365, %v5254
      %5287 = vst.msk [vmem:[%s332 + $0x78] sm:$0xff] %vm365, %v5255
      %5288 = vst.msk [vmem:[%s332 + $0x80] sm:$0xff] %vm365, %v5256
      %5289 = vst.msk [vmem:[%s332 + $0x88] sm:$0xff] %vm365, %v5257
      %5290 = vst.msk [vmem:[%s332 + $0x90] sm:$0xff] %vm365, %v5258
      %5291 = vst.msk [vmem:[%s332 + $0x98] sm:$0xff] %vm365, %v5259
      %5292 = vst.msk [vmem:[%s332 + $0xa0] sm:$0xff] %vm365, %v5260
      %5293 = vst.msk [vmem:[%s332 + $0xa8] sm:$0xff] %vm365, %v5261
      %5294 = vst.msk [vmem:[%s332 + $0xb0] sm:$0xff] %vm365, %v5262
      %5295 = vst.msk [vmem:[%s332 + $0xb8] sm:$0xff] %vm365, %v5263
      %5296 = vst.msk [vmem:[%s332 + $0xc0] sm:$0xff] %vm365, %v5264
      %5297 = vst.msk [vmem:[%s332 + $0xc8] sm:$0xff] %vm365, %v5265
      %5298 = vst.msk [vmem:[%s332 + $0xd0] sm:$0xff] %vm365, %v5266
      %5299 = vst.msk [vmem:[%s332 + $0xd8] sm:$0xff] %vm365, %v5267
      %5300 = vst.msk [vmem:[%s332 + $0xe0] sm:$0xff] %vm365, %v5268
      %5301 = vst.msk [vmem:[%s332 + $0xe8] sm:$0xff] %vm365, %v5269
      %5302 = vst.msk [vmem:[%s332 + $0xf0] sm:$0xff] %vm365, %v5270
      %5303 = vst.msk [vmem:[%s332 + $0xf8] sm:$0xff] %vm365, %v5271
      %p5304 = scmp.lt.s32.totalorder %s20, 1
      %s5305 = scalar_select %p5304, %s20, 1
      %s5306 = smul.addr %s5305, 32
      %s5307 = smul.addr %s5306, 8
      %s5308 = scalar_lea.vmem %s9, %s5307
      // Predicated region
      $region57: #{tpu_custom_call.1} parent=55 // pred_check
        %p5309 = pneg %p232
      $region58: #{tpu_custom_call.1} parent=55 // pred_check_branch
        %5311 = sbr.rel (%p5309) target = $region60
      $region59: #{tpu_custom_call.1} parent=55 // pred_region
        _
      $region60: #{tpu_custom_call.1} parent=55 // pred_fallthru
        _
    $region56: #{tpu_custom_call.1} parent=5 // pred_fallthru
      _
    %p5312 = scmp.le.s32.totalorder 2, %s15
    // Predicated region
    $region61: #{tpu_custom_call.1} parent=5 // pred_check
      %p5313 = pneg %p5312
    $region62: #{tpu_custom_call.1} parent=5 // pred_check_branch
      %5315 = sbr.rel (%p5313) target = $region64
    $region63: #{tpu_custom_call.1} parent=5 // pred_region
      %s5316 = ssub.s32 %s15, 2
      // Predicated region
      $region65: #{tpu_custom_call.1} parent=63 // pred_check
        %p5317 = pneg %p238
      $region66: #{tpu_custom_call.1} parent=63 // pred_check_branch
        %5319 = sbr.rel (%p5317) target = $region68
      $region67: #{tpu_custom_call.1} parent=63 // pred_region
        %p5320 = scmp.lt.s32.totalorder %s21, 1
        %s5321 = scalar_select %p5320, %s21, 1
        %s5322 = smul.addr %s5321, 32
        %s5323 = smul.addr %s5322, 8
        %s5324 = scalar_lea.vmem %s9, %s5323
      $region68: #{tpu_custom_call.1} parent=63 // pred_fallthru
        _
    $region64: #{tpu_custom_call.1} parent=5 // pred_fallthru
      _
  $region6: #{tpu_custom_call.1} parent=0 // loop_footer
    %s19 = sadd.s32 1, %s15
  $region7: #{tpu_custom_call.1} parent=0 // loop_footer_branch
    %14 = sbr.rel target = $region3
  $region8: #{tpu_custom_call.1} parent=0 // loop_exit
    _

</llo_original>
